<compile_context>
chip_gen: v7x
topology: tpu7x:2x2x1
jax: 0.10.0
libtpu: 0.0.40
codegen_flags: <defaults>
</compile_context>

<pallas_src>
import functools

import jax
import jax.numpy as jnp
from jax.experimental import pallas as pl
from jax.experimental.pallas import tpu as pltpu


# ---------------------------------------------------------------------------
# Pallas kernels
# ---------------------------------------------------------------------------
def _patch_embed_kernel(p_ref, w_ref, b_ref, cls_ref, pos_ref, o_ref):
    """One image per grid step: patches (P, Cpp) -> tokens (S, H) with cls+pos."""
    emb = jnp.dot(p_ref[0], w_ref[...],
                  preferred_element_type=jnp.float32)          # (P, H) f32
    pos = pos_ref[...]                                          # (S, H) f32
    cls_row = cls_ref[...] + pos[0:1, :]                        # (1, H)
    body = emb + b_ref[...] + pos[1:, :]                        # (P, H)
    o_ref[0] = jnp.concatenate([cls_row, body], axis=0)         # (S, H)


def _encoder_block_kernel(x_ref, ln1_g_ref, ln1_b_ref, qkv_w_ref, qkv_b_ref,
                          out_w_ref, out_b_ref, ln2_g_ref, ln2_b_ref,
                          w1_ref, b1_ref, w2_ref, b2_ref, o_ref,
                          *, num_heads, head_dim, scale, eps):
    """Whole pre-norm transformer encoder block, one image per grid step."""
    x = x_ref[0]                                                # (S, H) f32
    H = num_heads * head_dim

    def layernorm(v, g, b):
        # one-pass statistics (E[x], E[x^2]); rsqrt goes to the EUP slot
        m1 = jnp.mean(v, axis=-1, keepdims=True)
        m2 = jnp.mean(v * v, axis=-1, keepdims=True)
        inv = jax.lax.rsqrt(m2 - m1 * m1 + eps)
        return (v - m1) * (inv * g) + b

    # ----- multi-head self-attention -----
    h1 = layernorm(x, ln1_g_ref[...], ln1_b_ref[...]).astype(jnp.bfloat16)
    qkv = jnp.dot(h1, qkv_w_ref[...],
                  preferred_element_type=jnp.float32) + qkv_b_ref[...]  # (S, 3H)

    heads = []
    for hh in range(num_heads):
        lo = hh * head_dim
        hi = lo + head_dim
        q = (qkv[:, lo:hi] * scale).astype(jnp.bfloat16)                 # (S, Dh)
        k = qkv[:, H + lo:H + hi].astype(jnp.bfloat16)                   # (S, Dh)
        v = qkv[:, 2 * H + lo:2 * H + hi].astype(jnp.bfloat16)           # (S, Dh)
        # contract last dims directly (no explicit k.T)
        s = jax.lax.dot_general(q, k, (((1,), (1,)), ((), ())),
                                preferred_element_type=jnp.float32)      # (S, S)
        s = s - jnp.max(s, axis=-1, keepdims=True)
        p = jnp.exp(s)
        p = p * pl.reciprocal(jnp.sum(p, axis=-1, keepdims=True), approx=True)
        heads.append(jnp.dot(p.astype(jnp.bfloat16), v,
                             preferred_element_type=jnp.float32))        # (S, Dh)

    attn = jnp.concatenate(heads, axis=-1).astype(jnp.bfloat16)          # (S, H)
    attn = jnp.dot(attn, out_w_ref[...], preferred_element_type=jnp.float32)
    x = x + attn + out_b_ref[...]

    # ----- MLP -----
    h2 = layernorm(x, ln2_g_ref[...], ln2_b_ref[...]).astype(jnp.bfloat16)
    m = jnp.dot(h2, w1_ref[...],
                preferred_element_type=jnp.float32) + b1_ref[...]
    # exact (erf-based) GELU, matching torch.nn.GELU() default, in f32
    m = 0.5 * m * (1.0 + jax.lax.erf(m * 0.7071067811865476))
    m = jnp.dot(m.astype(jnp.bfloat16), w2_ref[...],
                preferred_element_type=jnp.float32) + b2_ref[...]
    o_ref[0] = x + m


def _head_kernel(x_ref, g_ref, b_ref, w_ref, hb_ref, o_ref, *, eps):
    """Final LayerNorm on class tokens + folded (heads @ fc) linear."""
    x = x_ref[...]                                              # (B, H) f32
    m1 = jnp.mean(x, axis=-1, keepdims=True)
    m2 = jnp.mean(x * x, axis=-1, keepdims=True)
    inv = jax.lax.rsqrt(m2 - m1 * m1 + eps)
    xn = ((x - m1) * (inv * g_ref[...]) + b_ref[...]).astype(jnp.bfloat16)
    o_ref[...] = jnp.dot(xn, w_ref[...],
                         preferred_element_type=jnp.float32) + hb_ref[...]


# ---------------------------------------------------------------------------
# Pallas wrappers
# ---------------------------------------------------------------------------
def pallas_patch_embed(patches, w, b, cls, pos):
    """patches: (B, P, Cpp) bf16 -> tokens (B, S, H) f32 (cls + pos included)."""
    B, P, CPP = patches.shape
    H = w.shape[1]
    S = pos.shape[0]
    return pl.pallas_call(
        _patch_embed_kernel,
        out_shape=jax.ShapeDtypeStruct((B, S, H), jnp.float32),
        grid=(B,),
        in_specs=[
            pl.BlockSpec((1, P, CPP), lambda i: (i, 0, 0)),
            pl.BlockSpec((CPP, H), lambda i: (0, 0)),
            pl.BlockSpec((1, H), lambda i: (0, 0)),
            pl.BlockSpec((1, H), lambda i: (0, 0)),
            pl.BlockSpec((S, H), lambda i: (0, 0)),
        ],
        out_specs=pl.BlockSpec((1, S, H), lambda i: (i, 0, 0)),
        compiler_params=pltpu.CompilerParams(dimension_semantics=("parallel",)),
    )(patches, w, b, cls, pos)


def pallas_encoder_block(x, layer, *, num_heads, head_dim, scale, eps=1e-6):
    """x: (B, S, H) f32 -> (B, S, H) f32, one fused kernel per encoder layer."""
    B, S, H = x.shape
    MLP = layer["mlp_w1"].shape[1]
    kernel = functools.partial(_encoder_block_kernel, num_heads=num_heads,
                               head_dim=head_dim, scale=scale, eps=eps)

    def row(n):
        return pl.BlockSpec((1, n), lambda i: (0, 0))

    def mat(k_, n_):
        return pl.BlockSpec((k_, n_), lambda i: (0, 0))

    xspec = pl.BlockSpec((1, S, H), lambda i: (i, 0, 0))
    return pl.pallas_call(
        kernel,
        out_shape=jax.ShapeDtypeStruct((B, S, H), jnp.float32),
        grid=(B,),
        in_specs=[
            xspec,
            row(H), row(H),                # ln1 gamma / beta
            mat(H, 3 * H), row(3 * H),     # qkv weight / bias
            mat(H, H), row(H),             # out-proj weight / bias
            row(H), row(H),                # ln2 gamma / beta
            mat(H, MLP), row(MLP),         # mlp1 weight / bias
            mat(MLP, H), row(H),           # mlp2 weight / bias
        ],
        out_specs=xspec,
        compiler_params=pltpu.CompilerParams(dimension_semantics=("parallel",)),
    )(x, layer["ln1_g"], layer["ln1_b"], layer["qkv_w"], layer["qkv_b"],
      layer["out_w"], layer["out_b"], layer["ln2_g"], layer["ln2_b"],
      layer["mlp_w1"], layer["mlp_b1"], layer["mlp_w2"], layer["mlp_b2"])


def pallas_head(x, g, b, w, hb, eps=1e-6):
    """cls tokens (B, H) -> (B, output_shape) via LN + folded heads@fc linear."""
    B, H = x.shape
    N = w.shape[1]
    kernel = functools.partial(_head_kernel, eps=eps)
    return pl.pallas_call(
        kernel,
        out_shape=jax.ShapeDtypeStruct((B, N), jnp.float32),
        grid=(1,),
        in_specs=[
            pl.BlockSpec((B, H), lambda i: (0, 0)),
            pl.BlockSpec((1, H), lambda i: (0, 0)),
            pl.BlockSpec((1, H), lambda i: (0, 0)),
            pl.BlockSpec((H, N), lambda i: (0, 0)),
            pl.BlockSpec((1, N), lambda i: (0, 0)),
        ],
        out_specs=pl.BlockSpec((B, N), lambda i: (0, 0)),
    )(x, g, b, w, hb)


# ---------------------------------------------------------------------------
# Parameter init (deterministic, synthetic) + kernel-layout preparation
# ---------------------------------------------------------------------------
def init_params(key, *, in_ch, patch, hidden, mlp_dim, num_heads, num_layers,
                seq_len, pretrained_output, output_shape):
    std = 0.02
    keys = iter(jax.random.split(key, 256))

    def nrm(shape):
        return std * jax.random.normal(next(keys), shape, jnp.float32)

    params = {
        # conv_proj(3, hidden, k=16, s=16) as a patch matmul:
        # weight stored as (C*p*p, hidden) == conv_weight.reshape(hidden,-1).T
        "patch_w": nrm((in_ch * patch * patch, hidden)),
        "patch_b": nrm((hidden,)),
        "cls": nrm((1, 1, hidden)),
        "pos": nrm((1, seq_len, hidden)),
        "ln_g": jnp.ones((hidden,), jnp.float32),
        "ln_b": jnp.zeros((hidden,), jnp.float32),
        # heads: Linear(hidden, 1000), stored as (in, out)
        "head_w": nrm((hidden, pretrained_output)),
        "head_b": nrm((pretrained_output,)),
        # self.fc: Linear(1000, output_shape, bias=False), stored as (in, out)
        "fc_w": nrm((pretrained_output, output_shape)),
        "layers": [],
    }
    for _ in range(num_layers):
        params["layers"].append({
            "ln1_g": jnp.ones((hidden,), jnp.float32),
            "ln1_b": jnp.zeros((hidden,), jnp.float32),
            "qkv_w": nrm((hidden, 3 * hidden)),   # == in_proj_weight.T
            "qkv_b": nrm((3 * hidden,)),
            "out_w": nrm((hidden, hidden)),       # == out_proj.weight.T
            "out_b": nrm((hidden,)),
            "ln2_g": jnp.ones((hidden,), jnp.float32),
            "ln2_b": jnp.zeros((hidden,), jnp.float32),
            "mlp_w1": nrm((hidden, mlp_dim)),
            "mlp_b1": nrm((mlp_dim,)),
            "mlp_w2": nrm((mlp_dim, hidden)),
            "mlp_b2": nrm((hidden,)),
        })
    return params


def prepare_params(params):
    """One-time offline prep: fold heads@fc, cast matmul weights to bf16,
    pre-reshape 1-D params to (1, N) so no per-call reshapes sit in the hot path."""
    bf = jnp.bfloat16
    prepared = {
        "patch_w": params["patch_w"].astype(bf),
        "patch_b": params["patch_b"].reshape(1, -1),
        "cls": params["cls"].reshape(1, -1),
        "pos": params["pos"][0],                                  # (S, H)
        "ln_g": params["ln_g"].reshape(1, -1),
        "ln_b": params["ln_b"].reshape(1, -1),
        # fold fc (bias-free) into the pretrained classification head
        "head_w": (params["head_w"] @ params["fc_w"]).astype(bf),       # (H, out)
        "head_b": (params["head_b"] @ params["fc_w"]).reshape(1, -1),   # (1, out)
        "layers": [],
    }
    for layer in params["layers"]:
        prepared["layers"].append({
            "ln1_g": layer["ln1_g"].reshape(1, -1),
            "ln1_b": layer["ln1_b"].reshape(1, -1),
            "qkv_w": layer["qkv_w"].astype(bf),
            "qkv_b": layer["qkv_b"].reshape(1, -1),
            "out_w": layer["out_w"].astype(bf),
            "out_b": layer["out_b"].reshape(1, -1),
            "ln2_g": layer["ln2_g"].reshape(1, -1),
            "ln2_b": layer["ln2_b"].reshape(1, -1),
            "mlp_w1": layer["mlp_w1"].astype(bf),
            "mlp_b1": layer["mlp_b1"].reshape(1, -1),
            "mlp_w2": layer["mlp_w2"].astype(bf),
            "mlp_b2": layer["mlp_b2"].reshape(1, -1),
        })
    return prepared


# ---------------------------------------------------------------------------
# Forward pass (VIT.forward semantics: pretrained ViT -> fc)
# ---------------------------------------------------------------------------
def vit_forward(params, image, *, patch, hidden, num_heads):
    B, C, Hi, Wi = image.shape
    nh, nw = Hi // patch, Wi // patch
    P = nh * nw
    head_dim = hidden // num_heads
    scale = 1.0 / (head_dim ** 0.5)

    # --- patch extraction (Conv2d k=16 s=16 as matmul): pure layout glue ---
    x = image.reshape(B, C, nh, patch, nw, patch)
    x = x.transpose(0, 2, 4, 1, 3, 5).reshape(B, P, C * patch * patch)
    x = x.astype(jnp.bfloat16)

    # --- fused patch embedding + class token + positional embedding ---
    x = pallas_patch_embed(x, params["patch_w"], params["patch_b"],
                           params["cls"], params["pos"])          # (B, S, hidden)

    # --- fused encoder blocks (one pallas_call per layer) ---
    for layer in params["layers"]:
        x = pallas_encoder_block(x, layer, num_heads=num_heads,
                                 head_dim=head_dim, scale=scale)

    # --- final LN + classification head (heads@fc folded) on the class token.
    # LayerNorm is row-wise, so LN(x)[:, 0] == LN(x[:, 0]).
    cls_tok = x[:, 0, :]                                          # (B, hidden)
    return pallas_head(cls_tok, params["ln_g"], params["ln_b"],
                       params["head_w"], params["head_b"])        # (B, output_shape)


# ---------------------------------------------------------------------------
if __name__ == "__main__":
    # Small ViT config (structure of vit_b_16, reduced sizes).
    B, C, IMG, PATCH = 2, 3, 32, 16
    HIDDEN, MLP, HEADS, LAYERS = 128, 256, 4, 2
    PRETRAINED_OUTPUT = 1000
    OUTPUT_SHAPE = 10
    SEQ = (IMG // PATCH) * (IMG // PATCH) + 1

    root = jax.random.PRNGKey(0)
    k_img, k_par = jax.random.split(root)
    image = jax.random.normal(k_img, (B, C, IMG, IMG), jnp.float32)

    raw_params = init_params(
        k_par, in_ch=C, patch=PATCH, hidden=HIDDEN, mlp_dim=MLP,
        num_heads=HEADS, num_layers=LAYERS, seq_len=SEQ,
        pretrained_output=PRETRAINED_OUTPUT, output_shape=OUTPUT_SHAPE)
    params = prepare_params(raw_params)   # fold head/fc, bf16 weights, (1,N) biases

    fwd = jax.jit(functools.partial(vit_forward, patch=PATCH, hidden=HIDDEN,
                                    num_heads=HEADS))
    out = fwd(params, image)
    jax.block_until_ready(out)
    assert out.shape == (B, OUTPUT_SHAPE)
    print("KERNEL_OK")
</pallas_src>

<mosaic_0001>
module attributes {stable_mosaic.version = 11 : i64} {
  func.func @_patch_embed_kernel(%arg0: i32, %arg1: memref<1x4x768xbf16, #tpu.memory_space<vmem>>, %arg2: memref<768x128xbf16, #tpu.memory_space<vmem>>, %arg3: memref<1x128xf32, #tpu.memory_space<vmem>>, %arg4: memref<1x128xf32, #tpu.memory_space<vmem>>, %arg5: memref<5x128xf32, #tpu.memory_space<vmem>>, %arg6: memref<1x5x128xf32, #tpu.memory_space<vmem>>) attributes {dimension_semantics = [#tpu.dimension_semantics<parallel>], iteration_bounds = array<i64: 2>, scalar_prefetch = 0 : i64, scratch_operands = 0 : i64, tpu.core_type = #tpu.core_type<tc>, window_params = [{transform_indices = @transform_0, window_bounds = array<i64: 1, 4, 768>}, {pipeline_mode = #tpu.pipeline_mode<synchronous>, transform_indices = @transform_1, window_bounds = array<i64: 768, 128>}, {pipeline_mode = #tpu.pipeline_mode<synchronous>, transform_indices = @transform_2, window_bounds = array<i64: 1, 128>}, {pipeline_mode = #tpu.pipeline_mode<synchronous>, transform_indices = @transform_3, window_bounds = array<i64: 1, 128>}, {pipeline_mode = #tpu.pipeline_mode<synchronous>, transform_indices = @transform_4, window_bounds = array<i64: 5, 128>}, {transform_indices = @transform_5, window_bounds = array<i64: 1, 5, 128>}]} {
    %c0 = arith.constant 0 : index
    %c0_0 = arith.constant 0 : index
    %c0_1 = arith.constant 0 : index
    %0 = vector.load %arg1[%c0, %c0_0, %c0_1] : memref<1x4x768xbf16, #tpu.memory_space<vmem>>, vector<1x4x768xbf16>
    %1 = vector.shape_cast %0 : vector<1x4x768xbf16> to vector<4x768xbf16>
    %c0_2 = arith.constant 0 : index
    %c0_3 = arith.constant 0 : index
    %2 = vector.load %arg2[%c0_2, %c0_3] : memref<768x128xbf16, #tpu.memory_space<vmem>>, vector<768x128xbf16>
    %cst = arith.constant dense<0.000000e+00> : vector<4x128xf32>
    %3 = tpu.matmul %1, %2, %cst {dimension_numbers = #tpu.dot_dimension_numbers<[1], [0], [0], [1], [0, 0, 1, 1], [], []>} : vector<4x768xbf16>, vector<768x128xbf16>, vector<4x128xf32> -> vector<4x128xf32>
    %c0_4 = arith.constant 0 : index
    %c0_5 = arith.constant 0 : index
    %4 = vector.load %arg5[%c0_4, %c0_5] : memref<5x128xf32, #tpu.memory_space<vmem>>, vector<5x128xf32>
    %c0_6 = arith.constant 0 : index
    %c0_7 = arith.constant 0 : index
    %5 = vector.load %arg4[%c0_6, %c0_7] : memref<1x128xf32, #tpu.memory_space<vmem>>, vector<1x128xf32>
    %6 = vector.extract_strided_slice %4 {offsets = [0, 0], sizes = [1, 128], strides = [1, 1]} : vector<5x128xf32> to vector<1x128xf32>
    %7 = arith.addf %5, %6 : vector<1x128xf32>
    %c0_8 = arith.constant 0 : index
    %c0_9 = arith.constant 0 : index
    %8 = vector.load %arg3[%c0_8, %c0_9] : memref<1x128xf32, #tpu.memory_space<vmem>>, vector<1x128xf32>
    %9 = vector.broadcast %8 : vector<1x128xf32> to vector<4x128xf32>
    %10 = arith.addf %3, %9 : vector<4x128xf32>
    %11 = vector.extract_strided_slice %4 {offsets = [1, 0], sizes = [4, 128], strides = [1, 1]} : vector<5x128xf32> to vector<4x128xf32>
    %12 = arith.addf %10, %11 : vector<4x128xf32>
    %13 = tpu.concatenate %7, %12 in 0 : vector<1x128xf32>, vector<4x128xf32> -> vector<5x128xf32>
    %c0_10 = arith.constant 0 : index
    %c0_11 = arith.constant 0 : index
    %c0_12 = arith.constant 0 : index
    %14 = vector.load %arg6[%c0_10, %c0_11, %c0_12] : memref<1x5x128xf32, #tpu.memory_space<vmem>>, vector<1x5x128xf32>
    %15 = vector.shape_cast %14 : vector<1x5x128xf32> to vector<5x128xf32>
    %16 = vector.shape_cast %13 : vector<5x128xf32> to vector<1x5x128xf32>
    tpu.vector_store %arg6[%c0_10, %c0_11, %c0_12], %16 {strides = array<i32>} : memref<1x5x128xf32, #tpu.memory_space<vmem>>, vector<1x5x128xf32>,
    return
  }
  func.func @transform_0(%arg0: i32) -> (i32, i32, i32) {
    %c0_i32 = arith.constant 0 : i32
    %c0_i32_0 = arith.constant 0 : i32
    %c0_i32_1 = arith.constant 0 : i32
    return %arg0, %c0_i32, %c0_i32_0 : i32, i32, i32
  }
  func.func @transform_1(%arg0: i32) -> (i32, i32) {
    %c0_i32 = arith.constant 0 : i32
    %c0_i32_0 = arith.constant 0 : i32
    %c0_i32_1 = arith.constant 0 : i32
    return %c0_i32, %c0_i32_0 : i32, i32
  }
  func.func @transform_2(%arg0: i32) -> (i32, i32) {
    %c0_i32 = arith.constant 0 : i32
    %c0_i32_0 = arith.constant 0 : i32
    %c0_i32_1 = arith.constant 0 : i32
    return %c0_i32, %c0_i32_0 : i32, i32
  }
  func.func @transform_3(%arg0: i32) -> (i32, i32) {
    %c0_i32 = arith.constant 0 : i32
    %c0_i32_0 = arith.constant 0 : i32
    %c0_i32_1 = arith.constant 0 : i32
    return %c0_i32, %c0_i32_0 : i32, i32
  }
  func.func @transform_4(%arg0: i32) -> (i32, i32) {
    %c0_i32 = arith.constant 0 : i32
    %c0_i32_0 = arith.constant 0 : i32
    %c0_i32_1 = arith.constant 0 : i32
    return %c0_i32, %c0_i32_0 : i32, i32
  }
  func.func @transform_5(%arg0: i32) -> (i32, i32, i32) {
    %c0_i32 = arith.constant 0 : i32
    %c0_i32_0 = arith.constant 0 : i32
    %c0_i32_1 = arith.constant 0 : i32
    return %arg0, %c0_i32, %c0_i32_0 : i32, i32, i32
  }
}

module attributes {stable_mosaic.version = 11 : i64} {
  func.func @_encoder_block_kernel(%arg0: i32, %arg1: memref<1x5x128xf32, #tpu.memory_space<vmem>>, %arg2: memref<1x128xf32, #tpu.memory_space<vmem>>, %arg3: memref<1x128xf32, #tpu.memory_space<vmem>>, %arg4: memref<128x384xbf16, #tpu.memory_space<vmem>>, %arg5: memref<1x384xf32, #tpu.memory_space<vmem>>, %arg6: memref<128x128xbf16, #tpu.memory_space<vmem>>, %arg7: memref<1x128xf32, #tpu.memory_space<vmem>>, %arg8: memref<1x128xf32, #tpu.memory_space<vmem>>, %arg9: memref<1x128xf32, #tpu.memory_space<vmem>>, %arg10: memref<128x256xbf16, #tpu.memory_space<vmem>>, %arg11: memref<1x256xf32, #tpu.memory_space<vmem>>, %arg12: memref<256x128xbf16, #tpu.memory_space<vmem>>, %arg13: memref<1x128xf32, #tpu.memory_space<vmem>>, %arg14: memref<1x5x128xf32, #tpu.memory_space<vmem>>) attributes {dimension_semantics = [#tpu.dimension_semantics<parallel>], iteration_bounds = array<i64: 2>, scalar_prefetch = 0 : i64, scratch_operands = 0 : i64, tpu.core_type = #tpu.core_type<tc>, window_params = [{transform_indices = @transform_0, window_bounds = array<i64: 1, 5, 128>}, {pipeline_mode = #tpu.pipeline_mode<synchronous>, transform_indices = @transform_1, window_bounds = array<i64: 1, 128>}, {pipeline_mode = #tpu.pipeline_mode<synchronous>, transform_indices = @transform_2, window_bounds = array<i64: 1, 128>}, {pipeline_mode = #tpu.pipeline_mode<synchronous>, transform_indices = @transform_3, window_bounds = array<i64: 128, 384>}, {pipeline_mode = #tpu.pipeline_mode<synchronous>, transform_indices = @transform_4, window_bounds = array<i64: 1, 384>}, {pipeline_mode = #tpu.pipeline_mode<synchronous>, transform_indices = @transform_5, window_bounds = array<i64: 128, 128>}, {pipeline_mode = #tpu.pipeline_mode<synchronous>, transform_indices = @transform_6, window_bounds = array<i64: 1, 128>}, {pipeline_mode = #tpu.pipeline_mode<synchronous>, transform_indices = @transform_7, window_bounds = array<i64: 1, 128>}, {pipeline_mode = #tpu.pipeline_mode<synchronous>, transform_indices = @transform_8, window_bounds = array<i64: 1, 128>}, {pipeline_mode = #tpu.pipeline_mode<synchronous>, transform_indices = @transform_9, window_bounds = array<i64: 128, 256>}, {pipeline_mode = #tpu.pipeline_mode<synchronous>, transform_indices = @transform_10, window_bounds = array<i64: 1, 256>}, {pipeline_mode = #tpu.pipeline_mode<synchronous>, transform_indices = @transform_11, window_bounds = array<i64: 256, 128>}, {pipeline_mode = #tpu.pipeline_mode<synchronous>, transform_indices = @transform_12, window_bounds = array<i64: 1, 128>}, {transform_indices = @transform_13, window_bounds = array<i64: 1, 5, 128>}]} {
    %c0 = arith.constant 0 : index
    %c0_0 = arith.constant 0 : index
    %c0_1 = arith.constant 0 : index
    %0 = vector.load %arg1[%c0, %c0_0, %c0_1] : memref<1x5x128xf32, #tpu.memory_space<vmem>>, vector<1x5x128xf32>
    %1 = vector.shape_cast %0 : vector<1x5x128xf32> to vector<5x128xf32>
    %c0_2 = arith.constant 0 : index
    %c0_3 = arith.constant 0 : index
    %2 = vector.load %arg2[%c0_2, %c0_3] : memref<1x128xf32, #tpu.memory_space<vmem>>, vector<1x128xf32>
    %c0_4 = arith.constant 0 : index
    %c0_5 = arith.constant 0 : index
    %3 = vector.load %arg3[%c0_4, %c0_5] : memref<1x128xf32, #tpu.memory_space<vmem>>, vector<1x128xf32>
    %cst = arith.constant dense<0.000000e+00> : vector<5xf32>
    %4 = vector.multi_reduction <add>, %1, %cst [1] : vector<5x128xf32> to vector<5xf32>
    %5 = vector.shape_cast %4 : vector<5xf32> to vector<5x1xf32>
    %cst_6 = arith.constant 1.280000e+02 : f32
    %6 = vector.broadcast %cst_6 : f32 to vector<5x1xf32>
    %7 = arith.divf %5, %6 : vector<5x1xf32>
    %8 = arith.mulf %1, %1 : vector<5x128xf32>
    %cst_7 = arith.constant dense<0.000000e+00> : vector<5xf32>
    %9 = vector.multi_reduction <add>, %8, %cst_7 [1] : vector<5x128xf32> to vector<5xf32>
    %10 = vector.shape_cast %9 : vector<5xf32> to vector<5x1xf32>
    %cst_8 = arith.constant 1.280000e+02 : f32
    %11 = vector.broadcast %cst_8 : f32 to vector<5x1xf32>
    %12 = arith.divf %10, %11 : vector<5x1xf32>
    %13 = arith.mulf %7, %7 : vector<5x1xf32>
    %14 = arith.subf %12, %13 : vector<5x1xf32>
    %cst_9 = arith.constant 9.99999997E-7 : f32
    %15 = vector.broadcast %cst_9 : f32 to vector<5x1xf32>
    %16 = arith.addf %14, %15 : vector<5x1xf32>
    %17 = math.rsqrt %16 : vector<5x1xf32>
    %18 = vector.broadcast %7 : vector<5x1xf32> to vector<5x128xf32>
    %19 = arith.subf %1, %18 : vector<5x128xf32>
    %20 = vector.broadcast %17 : vector<5x1xf32> to vector<5x128xf32>
    %21 = vector.broadcast %2 : vector<1x128xf32> to vector<5x128xf32>
    %22 = arith.mulf %20, %21 : vector<5x128xf32>
    %23 = arith.mulf %19, %22 : vector<5x128xf32>
    %24 = vector.broadcast %3 : vector<1x128xf32> to vector<5x128xf32>
    %25 = arith.addf %23, %24 : vector<5x128xf32>
    %26 = arith.truncf %25 : vector<5x128xf32> to vector<5x128xbf16>
    %c0_10 = arith.constant 0 : index
    %c0_11 = arith.constant 0 : index
    %27 = vector.load %arg4[%c0_10, %c0_11] : memref<128x384xbf16, #tpu.memory_space<vmem>>, vector<128x384xbf16>
    %cst_12 = arith.constant dense<0.000000e+00> : vector<5x384xf32>
    %28 = tpu.matmul %26, %27, %cst_12 {dimension_numbers = #tpu.dot_dimension_numbers<[1], [0], [0], [1], [0, 0, 1, 1], [], []>} : vector<5x128xbf16>, vector<128x384xbf16>, vector<5x384xf32> -> vector<5x384xf32>
    %c0_13 = arith.constant 0 : index
    %c0_14 = arith.constant 0 : index
    %29 = vector.load %arg5[%c0_13, %c0_14] : memref<1x384xf32, #tpu.memory_space<vmem>>, vector<1x384xf32>
    %30 = vector.broadcast %29 : vector<1x384xf32> to vector<5x384xf32>
    %31 = arith.addf %28, %30 : vector<5x384xf32>
    %32 = vector.extract_strided_slice %31 {offsets = [0, 0], sizes = [5, 32], strides = [1, 1]} : vector<5x384xf32> to vector<5x32xf32>
    %cst_15 = arith.constant 0.176776692 : f32
    %33 = vector.broadcast %cst_15 : f32 to vector<5x32xf32>
    %34 = arith.mulf %32, %33 : vector<5x32xf32>
    %35 = arith.truncf %34 : vector<5x32xf32> to vector<5x32xbf16>
    %36 = vector.extract_strided_slice %31 {offsets = [0, 128], sizes = [5, 32], strides = [1, 1]} : vector<5x384xf32> to vector<5x32xf32>
    %37 = arith.truncf %36 : vector<5x32xf32> to vector<5x32xbf16>
    %38 = vector.extract_strided_slice %31 {offsets = [0, 256], sizes = [5, 32], strides = [1, 1]} : vector<5x384xf32> to vector<5x32xf32>
    %39 = arith.truncf %38 : vector<5x32xf32> to vector<5x32xbf16>
    %cst_16 = arith.constant dense<0.000000e+00> : vector<5x5xf32>
    %40 = tpu.matmul %35, %37, %cst_16 {dimension_numbers = #tpu.dot_dimension_numbers<[1], [1], [0], [0], [0, 0, 1, 0], [], []>} : vector<5x32xbf16>, vector<5x32xbf16>, vector<5x5xf32> -> vector<5x5xf32>
    %cst_17 = arith.constant dense<0xFF800000> : vector<5xf32>
    %41 = vector.multi_reduction <maximumf>, %40, %cst_17 [1] : vector<5x5xf32> to vector<5xf32>
    %42 = vector.shape_cast %41 : vector<5xf32> to vector<5x1xf32>
    %43 = vector.broadcast %42 : vector<5x1xf32> to vector<5x5xf32>
    %44 = arith.subf %40, %43 : vector<5x5xf32>
    %45 = math.exp %44 : vector<5x5xf32>
    %cst_18 = arith.constant dense<0.000000e+00> : vector<5xf32>
    %46 = vector.multi_reduction <add>, %45, %cst_18 [1] : vector<5x5xf32> to vector<5xf32>
    %47 = vector.shape_cast %46 : vector<5xf32> to vector<5x1xf32>
    %48 = tpu.reciprocal %47 {approx = true} : vector<5x1xf32> -> vector<5x1xf32>
    %49 = vector.broadcast %48 : vector<5x1xf32> to vector<5x5xf32>
    %50 = arith.mulf %45, %49 : vector<5x5xf32>
    %51 = arith.truncf %50 : vector<5x5xf32> to vector<5x5xbf16>
    %cst_19 = arith.constant dense<0.000000e+00> : vector<5x32xf32>
    %52 = tpu.matmul %51, %39, %cst_19 {dimension_numbers = #tpu.dot_dimension_numbers<[1], [0], [0], [1], [0, 0, 1, 1], [], []>} : vector<5x5xbf16>, vector<5x32xbf16>, vector<5x32xf32> -> vector<5x32xf32>
    %53 = vector.extract_strided_slice %31 {offsets = [0, 32], sizes = [5, 32], strides = [1, 1]} : vector<5x384xf32> to vector<5x32xf32>
    %cst_20 = arith.constant 0.176776692 : f32
    %54 = vector.broadcast %cst_20 : f32 to vector<5x32xf32>
    %55 = arith.mulf %53, %54 : vector<5x32xf32>
    %56 = arith.truncf %55 : vector<5x32xf32> to vector<5x32xbf16>
    %57 = vector.extract_strided_slice %31 {offsets = [0, 160], sizes = [5, 32], strides = [1, 1]} : vector<5x384xf32> to vector<5x32xf32>
    %58 = arith.truncf %57 : vector<5x32xf32> to vector<5x32xbf16>
    %59 = vector.extract_strided_slice %31 {offsets = [0, 288], sizes = [5, 32], strides = [1, 1]} : vector<5x384xf32> to vector<5x32xf32>
    %60 = arith.truncf %59 : vector<5x32xf32> to vector<5x32xbf16>
    %cst_21 = arith.constant dense<0.000000e+00> : vector<5x5xf32>
    %61 = tpu.matmul %56, %58, %cst_21 {dimension_numbers = #tpu.dot_dimension_numbers<[1], [1], [0], [0], [0, 0, 1, 0], [], []>} : vector<5x32xbf16>, vector<5x32xbf16>, vector<5x5xf32> -> vector<5x5xf32>
    %cst_22 = arith.constant dense<0xFF800000> : vector<5xf32>
    %62 = vector.multi_reduction <maximumf>, %61, %cst_22 [1] : vector<5x5xf32> to vector<5xf32>
    %63 = vector.shape_cast %62 : vector<5xf32> to vector<5x1xf32>
    %64 = vector.broadcast %63 : vector<5x1xf32> to vector<5x5xf32>
    %65 = arith.subf %61, %64 : vector<5x5xf32>
    %66 = math.exp %65 : vector<5x5xf32>
    %cst_23 = arith.constant dense<0.000000e+00> : vector<5xf32>
    %67 = vector.multi_reduction <add>, %66, %cst_23 [1] : vector<5x5xf32> to vector<5xf32>
    %68 = vector.shape_cast %67 : vector<5xf32> to vector<5x1xf32>
    %69 = tpu.reciprocal %68 {approx = true} : vector<5x1xf32> -> vector<5x1xf32>
    %70 = vector.broadcast %69 : vector<5x1xf32> to vector<5x5xf32>
    %71 = arith.mulf %66, %70 : vector<5x5xf32>
    %72 = arith.truncf %71 : vector<5x5xf32> to vector<5x5xbf16>
    %cst_24 = arith.constant dense<0.000000e+00> : vector<5x32xf32>
    %73 = tpu.matmul %72, %60, %cst_24 {dimension_numbers = #tpu.dot_dimension_numbers<[1], [0], [0], [1], [0, 0, 1, 1], [], []>} : vector<5x5xbf16>, vector<5x32xbf16>, vector<5x32xf32> -> vector<5x32xf32>
    %74 = vector.extract_strided_slice %31 {offsets = [0, 64], sizes = [5, 32], strides = [1, 1]} : vector<5x384xf32> to vector<5x32xf32>
    %cst_25 = arith.constant 0.176776692 : f32
    %75 = vector.broadcast %cst_25 : f32 to vector<5x32xf32>
    %76 = arith.mulf %74, %75 : vector<5x32xf32>
    %77 = arith.truncf %76 : vector<5x32xf32> to vector<5x32xbf16>
    %78 = vector.extract_strided_slice %31 {offsets = [0, 192], sizes = [5, 32], strides = [1, 1]} : vector<5x384xf32> to vector<5x32xf32>
    %79 = arith.truncf %78 : vector<5x32xf32> to vector<5x32xbf16>
    %80 = vector.extract_strided_slice %31 {offsets = [0, 320], sizes = [5, 32], strides = [1, 1]} : vector<5x384xf32> to vector<5x32xf32>
    %81 = arith.truncf %80 : vector<5x32xf32> to vector<5x32xbf16>
    %cst_26 = arith.constant dense<0.000000e+00> : vector<5x5xf32>
    %82 = tpu.matmul %77, %79, %cst_26 {dimension_numbers = #tpu.dot_dimension_numbers<[1], [1], [0], [0], [0, 0, 1, 0], [], []>} : vector<5x32xbf16>, vector<5x32xbf16>, vector<5x5xf32> -> vector<5x5xf32>
    %cst_27 = arith.constant dense<0xFF800000> : vector<5xf32>
    %83 = vector.multi_reduction <maximumf>, %82, %cst_27 [1] : vector<5x5xf32> to vector<5xf32>
    %84 = vector.shape_cast %83 : vector<5xf32> to vector<5x1xf32>
    %85 = vector.broadcast %84 : vector<5x1xf32> to vector<5x5xf32>
    %86 = arith.subf %82, %85 : vector<5x5xf32>
    %87 = math.exp %86 : vector<5x5xf32>
    %cst_28 = arith.constant dense<0.000000e+00> : vector<5xf32>
    %88 = vector.multi_reduction <add>, %87, %cst_28 [1] : vector<5x5xf32> to vector<5xf32>
    %89 = vector.shape_cast %88 : vector<5xf32> to vector<5x1xf32>
    %90 = tpu.reciprocal %89 {approx = true} : vector<5x1xf32> -> vector<5x1xf32>
    %91 = vector.broadcast %90 : vector<5x1xf32> to vector<5x5xf32>
    %92 = arith.mulf %87, %91 : vector<5x5xf32>
    %93 = arith.truncf %92 : vector<5x5xf32> to vector<5x5xbf16>
    %cst_29 = arith.constant dense<0.000000e+00> : vector<5x32xf32>
    %94 = tpu.matmul %93, %81, %cst_29 {dimension_numbers = #tpu.dot_dimension_numbers<[1], [0], [0], [1], [0, 0, 1, 1], [], []>} : vector<5x5xbf16>, vector<5x32xbf16>, vector<5x32xf32> -> vector<5x32xf32>
    %95 = vector.extract_strided_slice %31 {offsets = [0, 96], sizes = [5, 32], strides = [1, 1]} : vector<5x384xf32> to vector<5x32xf32>
    %cst_30 = arith.constant 0.176776692 : f32
    %96 = vector.broadcast %cst_30 : f32 to vector<5x32xf32>
    %97 = arith.mulf %95, %96 : vector<5x32xf32>
    %98 = arith.truncf %97 : vector<5x32xf32> to vector<5x32xbf16>
    %99 = vector.extract_strided_slice %31 {offsets = [0, 224], sizes = [5, 32], strides = [1, 1]} : vector<5x384xf32> to vector<5x32xf32>
    %100 = arith.truncf %99 : vector<5x32xf32> to vector<5x32xbf16>
    %101 = vector.extract_strided_slice %31 {offsets = [0, 352], sizes = [5, 32], strides = [1, 1]} : vector<5x384xf32> to vector<5x32xf32>
    %102 = arith.truncf %101 : vector<5x32xf32> to vector<5x32xbf16>
    %cst_31 = arith.constant dense<0.000000e+00> : vector<5x5xf32>
    %103 = tpu.matmul %98, %100, %cst_31 {dimension_numbers = #tpu.dot_dimension_numbers<[1], [1], [0], [0], [0, 0, 1, 0], [], []>} : vector<5x32xbf16>, vector<5x32xbf16>, vector<5x5xf32> -> vector<5x5xf32>
    %cst_32 = arith.constant dense<0xFF800000> : vector<5xf32>
    %104 = vector.multi_reduction <maximumf>, %103, %cst_32 [1] : vector<5x5xf32> to vector<5xf32>
    %105 = vector.shape_cast %104 : vector<5xf32> to vector<5x1xf32>
    %106 = vector.broadcast %105 : vector<5x1xf32> to vector<5x5xf32>
    %107 = arith.subf %103, %106 : vector<5x5xf32>
    %108 = math.exp %107 : vector<5x5xf32>
    %cst_33 = arith.constant dense<0.000000e+00> : vector<5xf32>
    %109 = vector.multi_reduction <add>, %108, %cst_33 [1] : vector<5x5xf32> to vector<5xf32>
    %110 = vector.shape_cast %109 : vector<5xf32> to vector<5x1xf32>
    %111 = tpu.reciprocal %110 {approx = true} : vector<5x1xf32> -> vector<5x1xf32>
    %112 = vector.broadcast %111 : vector<5x1xf32> to vector<5x5xf32>
    %113 = arith.mulf %108, %112 : vector<5x5xf32>
    %114 = arith.truncf %113 : vector<5x5xf32> to vector<5x5xbf16>
    %cst_34 = arith.constant dense<0.000000e+00> : vector<5x32xf32>
    %115 = tpu.matmul %114, %102, %cst_34 {dimension_numbers = #tpu.dot_dimension_numbers<[1], [0], [0], [1], [0, 0, 1, 1], [], []>} : vector<5x5xbf16>, vector<5x32xbf16>, vector<5x32xf32> -> vector<5x32xf32>
    %116 = tpu.concatenate %52, %73, %94, %115 in 1 : vector<5x32xf32>, vector<5x32xf32>, vector<5x32xf32>, vector<5x32xf32> -> vector<5x128xf32>
    %117 = arith.truncf %116 : vector<5x128xf32> to vector<5x128xbf16>
    %c0_35 = arith.constant 0 : index
    %c0_36 = arith.constant 0 : index
    %118 = vector.load %arg6[%c0_35, %c0_36] : memref<128x128xbf16, #tpu.memory_space<vmem>>, vector<128x128xbf16>
    %cst_37 = arith.constant dense<0.000000e+00> : vector<5x128xf32>
    %119 = tpu.matmul %117, %118, %cst_37 {dimension_numbers = #tpu.dot_dimension_numbers<[1], [0], [0], [1], [0, 0, 1, 1], [], []>} : vector<5x128xbf16>, vector<128x128xbf16>, vector<5x128xf32> -> vector<5x128xf32>
    %120 = arith.addf %1, %119 : vector<5x128xf32>
    %c0_38 = arith.constant 0 : index
    %c0_39 = arith.constant 0 : index
    %121 = vector.load %arg7[%c0_38, %c0_39] : memref<1x128xf32, #tpu.memory_space<vmem>>, vector<1x128xf32>
    %122 = vector.broadcast %121 : vector<1x128xf32> to vector<5x128xf32>
    %123 = arith.addf %120, %122 : vector<5x128xf32>
    %c0_40 = arith.constant 0 : index
    %c0_41 = arith.constant 0 : index
    %124 = vector.load %arg8[%c0_40, %c0_41] : memref<1x128xf32, #tpu.memory_space<vmem>>, vector<1x128xf32>
    %c0_42 = arith.constant 0 : index
    %c0_43 = arith.constant 0 : index
    %125 = vector.load %arg9[%c0_42, %c0_43] : memref<1x128xf32, #tpu.memory_space<vmem>>, vector<1x128xf32>
    %cst_44 = arith.constant dense<0.000000e+00> : vector<5xf32>
    %126 = vector.multi_reduction <add>, %123, %cst_44 [1] : vector<5x128xf32> to vector<5xf32>
    %127 = vector.shape_cast %126 : vector<5xf32> to vector<5x1xf32>
    %cst_45 = arith.constant 1.280000e+02 : f32
    %128 = vector.broadcast %cst_45 : f32 to vector<5x1xf32>
    %129 = arith.divf %127, %128 : vector<5x1xf32>
    %130 = arith.mulf %123, %123 : vector<5x128xf32>
    %cst_46 = arith.constant dense<0.000000e+00> : vector<5xf32>
    %131 = vector.multi_reduction <add>, %130, %cst_46 [1] : vector<5x128xf32> to vector<5xf32>
    %132 = vector.shape_cast %131 : vector<5xf32> to vector<5x1xf32>
    %cst_47 = arith.constant 1.280000e+02 : f32
    %133 = vector.broadcast %cst_47 : f32 to vector<5x1xf32>
    %134 = arith.divf %132, %133 : vector<5x1xf32>
    %135 = arith.mulf %129, %129 : vector<5x1xf32>
    %136 = arith.subf %134, %135 : vector<5x1xf32>
    %cst_48 = arith.constant 9.99999997E-7 : f32
    %137 = vector.broadcast %cst_48 : f32 to vector<5x1xf32>
    %138 = arith.addf %136, %137 : vector<5x1xf32>
    %139 = math.rsqrt %138 : vector<5x1xf32>
    %140 = vector.broadcast %129 : vector<5x1xf32> to vector<5x128xf32>
    %141 = arith.subf %123, %140 : vector<5x128xf32>
    %142 = vector.broadcast %139 : vector<5x1xf32> to vector<5x128xf32>
    %143 = vector.broadcast %124 : vector<1x128xf32> to vector<5x128xf32>
    %144 = arith.mulf %142, %143 : vector<5x128xf32>
    %145 = arith.mulf %141, %144 : vector<5x128xf32>
    %146 = vector.broadcast %125 : vector<1x128xf32> to vector<5x128xf32>
    %147 = arith.addf %145, %146 : vector<5x128xf32>
    %148 = arith.truncf %147 : vector<5x128xf32> to vector<5x128xbf16>
    %c0_49 = arith.constant 0 : index
    %c0_50 = arith.constant 0 : index
    %149 = vector.load %arg10[%c0_49, %c0_50] : memref<128x256xbf16, #tpu.memory_space<vmem>>, vector<128x256xbf16>
    %cst_51 = arith.constant dense<0.000000e+00> : vector<5x256xf32>
    %150 = tpu.matmul %148, %149, %cst_51 {dimension_numbers = #tpu.dot_dimension_numbers<[1], [0], [0], [1], [0, 0, 1, 1], [], []>} : vector<5x128xbf16>, vector<128x256xbf16>, vector<5x256xf32> -> vector<5x256xf32>
    %c0_52 = arith.constant 0 : index
    %c0_53 = arith.constant 0 : index
    %151 = vector.load %arg11[%c0_52, %c0_53] : memref<1x256xf32, #tpu.memory_space<vmem>>, vector<1x256xf32>
    %152 = vector.broadcast %151 : vector<1x256xf32> to vector<5x256xf32>
    %153 = arith.addf %150, %152 : vector<5x256xf32>
    %cst_54 = arith.constant 5.000000e-01 : f32
    %154 = vector.broadcast %cst_54 : f32 to vector<5x256xf32>
    %155 = arith.mulf %154, %153 : vector<5x256xf32>
    %cst_55 = arith.constant 0.707106769 : f32
    %156 = vector.broadcast %cst_55 : f32 to vector<5x256xf32>
    %157 = arith.mulf %153, %156 : vector<5x256xf32>
    %158 = math.erf %157 : vector<5x256xf32>
    %cst_56 = arith.constant 1.000000e+00 : f32
    %159 = vector.broadcast %cst_56 : f32 to vector<5x256xf32>
    %160 = arith.addf %159, %158 : vector<5x256xf32>
    %161 = arith.mulf %155, %160 : vector<5x256xf32>
    %162 = arith.truncf %161 : vector<5x256xf32> to vector<5x256xbf16>
    %c0_57 = arith.constant 0 : index
    %c0_58 = arith.constant 0 : index
    %163 = vector.load %arg12[%c0_57, %c0_58] : memref<256x128xbf16, #tpu.memory_space<vmem>>, vector<256x128xbf16>
    %cst_59 = arith.constant dense<0.000000e+00> : vector<5x128xf32>
    %164 = tpu.matmul %162, %163, %cst_59 {dimension_numbers = #tpu.dot_dimension_numbers<[1], [0], [0], [1], [0, 0, 1, 1], [], []>} : vector<5x256xbf16>, vector<256x128xbf16>, vector<5x128xf32> -> vector<5x128xf32>
    %c0_60 = arith.constant 0 : index
    %c0_61 = arith.constant 0 : index
    %165 = vector.load %arg13[%c0_60, %c0_61] : memref<1x128xf32, #tpu.memory_space<vmem>>, vector<1x128xf32>
    %166 = vector.broadcast %165 : vector<1x128xf32> to vector<5x128xf32>
    %167 = arith.addf %164, %166 : vector<5x128xf32>
    %168 = arith.addf %123, %167 : vector<5x128xf32>
    %c0_62 = arith.constant 0 : index
    %c0_63 = arith.constant 0 : index
    %c0_64 = arith.constant 0 : index
    %169 = vector.load %arg14[%c0_62, %c0_63, %c0_64] : memref<1x5x128xf32, #tpu.memory_space<vmem>>, vector<1x5x128xf32>
    %170 = vector.shape_cast %169 : vector<1x5x128xf32> to vector<5x128xf32>
    %171 = vector.shape_cast %168 : vector<5x128xf32> to vector<1x5x128xf32>
    tpu.vector_store %arg14[%c0_62, %c0_63, %c0_64], %171 {strides = array<i32>} : memref<1x5x128xf32, #tpu.memory_space<vmem>>, vector<1x5x128xf32>,
    return
  }
  func.func @transform_0(%arg0: i32) -> (i32, i32, i32) {
    %c0_i32 = arith.constant 0 : i32
    %c0_i32_0 = arith.constant 0 : i32
    %c0_i32_1 = arith.constant 0 : i32
    return %arg0, %c0_i32, %c0_i32_0 : i32, i32, i32
  }
  func.func @transform_1(%arg0: i32) -> (i32, i32) {
    %c0_i32 = arith.constant 0 : i32
    %c0_i32_0 = arith.constant 0 : i32
    %c0_i32_1 = arith.constant 0 : i32
    return %c0_i32, %c0_i32_0 : i32, i32
  }
  func.func @transform_2(%arg0: i32) -> (i32, i32) {
    %c0_i32 = arith.constant 0 : i32
    %c0_i32_0 = arith.constant 0 : i32
    %c0_i32_1 = arith.constant 0 : i32
    return %c0_i32, %c0_i32_0 : i32, i32
  }
  func.func @transform_3(%arg0: i32) -> (i32, i32) {
    %c0_i32 = arith.constant 0 : i32
    %c0_i32_0 = arith.constant 0 : i32
    %c0_i32_1 = arith.constant 0 : i32
    return %c0_i32, %c0_i32_0 : i32, i32
  }
  func.func @transform_4(%arg0: i32) -> (i32, i32) {
    %c0_i32 = arith.constant 0 : i32
    %c0_i32_0 = arith.constant 0 : i32
    %c0_i32_1 = arith.constant 0 : i32
    return %c0_i32, %c0_i32_0 : i32, i32
  }
  func.func @transform_5(%arg0: i32) -> (i32, i32) {
    %c0_i32 = arith.constant 0 : i32
    %c0_i32_0 = arith.constant 0 : i32
    %c0_i32_1 = arith.constant 0 : i32
    return %c0_i32, %c0_i32_0 : i32, i32
  }
  func.func @transform_6(%arg0: i32) -> (i32, i32) {
    %c0_i32 = arith.constant 0 : i32
    %c0_i32_0 = arith.constant 0 : i32
    %c0_i32_1 = arith.constant 0 : i32
    return %c0_i32, %c0_i32_0 : i32, i32
  }
  func.func @transform_7(%arg0: i32) -> (i32, i32) {
    %c0_i32 = arith.constant 0 : i32
    %c0_i32_0 = arith.constant 0 : i32
    %c0_i32_1 = arith.constant 0 : i32
    return %c0_i32, %c0_i32_0 : i32, i32
  }
  func.func @transform_8(%arg0: i32) -> (i32, i32) {
    %c0_i32 = arith.constant 0 : i32
    %c0_i32_0 = arith.constant 0 : i32
    %c0_i32_1 = arith.constant 0 : i32
    return %c0_i32, %c0_i32_0 : i32, i32
  }
  func.func @transform_9(%arg0: i32) -> (i32, i32) {
    %c0_i32 = arith.constant 0 : i32
    %c0_i32_0 = arith.constant 0 : i32
    %c0_i32_1 = arith.constant 0 : i32
    return %c0_i32, %c0_i32_0 : i32, i32
  }
  func.func @transform_10(%arg0: i32) -> (i32, i32) {
    %c0_i32 = arith.constant 0 : i32
    %c0_i32_0 = arith.constant 0 : i32
    %c0_i32_1 = arith.constant 0 : i32
    return %c0_i32, %c0_i32_0 : i32, i32
  }
  func.func @transform_11(%arg0: i32) -> (i32, i32) {
    %c0_i32 = arith.constant 0 : i32
    %c0_i32_0 = arith.constant 0 : i32
    %c0_i32_1 = arith.constant 0 : i32
    return %c0_i32, %c0_i32_0 : i32, i32
  }
  func.func @transform_12(%arg0: i32) -> (i32, i32) {
    %c0_i32 = arith.constant 0 : i32
    %c0_i32_0 = arith.constant 0 : i32
    %c0_i32_1 = arith.constant 0 : i32
    return %c0_i32, %c0_i32_0 : i32, i32
  }
  func.func @transform_13(%arg0: i32) -> (i32, i32, i32) {
    %c0_i32 = arith.constant 0 : i32
    %c0_i32_0 = arith.constant 0 : i32
    %c0_i32_1 = arith.constant 0 : i32
    return %arg0, %c0_i32, %c0_i32_0 : i32, i32, i32
  }
}

module attributes {stable_mosaic.version = 11 : i64} {
  func.func @_head_kernel(%arg0: i32, %arg1: memref<2x128xf32, #tpu.memory_space<vmem>>, %arg2: memref<1x128xf32, #tpu.memory_space<vmem>>, %arg3: memref<1x128xf32, #tpu.memory_space<vmem>>, %arg4: memref<128x10xbf16, #tpu.memory_space<vmem>>, %arg5: memref<1x10xf32, #tpu.memory_space<vmem>>, %arg6: memref<2x10xf32, #tpu.memory_space<vmem>>) attributes {dimension_semantics = [#tpu.dimension_semantics<arbitrary>], iteration_bounds = array<i64: 1>, scalar_prefetch = 0 : i64, scratch_operands = 0 : i64, tpu.core_type = #tpu.core_type<tc>, window_params = [{pipeline_mode = #tpu.pipeline_mode<synchronous>, transform_indices = @transform_0, window_bounds = array<i64: 2, 128>}, {pipeline_mode = #tpu.pipeline_mode<synchronous>, transform_indices = @transform_1, window_bounds = array<i64: 1, 128>}, {pipeline_mode = #tpu.pipeline_mode<synchronous>, transform_indices = @transform_2, window_bounds = array<i64: 1, 128>}, {pipeline_mode = #tpu.pipeline_mode<synchronous>, transform_indices = @transform_3, window_bounds = array<i64: 128, 10>}, {pipeline_mode = #tpu.pipeline_mode<synchronous>, transform_indices = @transform_4, window_bounds = array<i64: 1, 10>}, {pipeline_mode = #tpu.pipeline_mode<synchronous>, transform_indices = @transform_5, window_bounds = array<i64: 2, 10>}]} {
    %c0 = arith.constant 0 : index
    %c0_0 = arith.constant 0 : index
    %0 = vector.load %arg1[%c0, %c0_0] : memref<2x128xf32, #tpu.memory_space<vmem>>, vector<2x128xf32>
    %cst = arith.constant dense<0.000000e+00> : vector<2xf32>
    %1 = vector.multi_reduction <add>, %0, %cst [1] : vector<2x128xf32> to vector<2xf32>
    %2 = vector.shape_cast %1 : vector<2xf32> to vector<2x1xf32>
    %cst_1 = arith.constant 1.280000e+02 : f32
    %3 = vector.broadcast %cst_1 : f32 to vector<2x1xf32>
    %4 = arith.divf %2, %3 : vector<2x1xf32>
    %5 = arith.mulf %0, %0 : vector<2x128xf32>
    %cst_2 = arith.constant dense<0.000000e+00> : vector<2xf32>
    %6 = vector.multi_reduction <add>, %5, %cst_2 [1] : vector<2x128xf32> to vector<2xf32>
    %7 = vector.shape_cast %6 : vector<2xf32> to vector<2x1xf32>
    %cst_3 = arith.constant 1.280000e+02 : f32
    %8 = vector.broadcast %cst_3 : f32 to vector<2x1xf32>
    %9 = arith.divf %7, %8 : vector<2x1xf32>
    %10 = arith.mulf %4, %4 : vector<2x1xf32>
    %11 = arith.subf %9, %10 : vector<2x1xf32>
    %cst_4 = arith.constant 9.99999997E-7 : f32
    %12 = vector.broadcast %cst_4 : f32 to vector<2x1xf32>
    %13 = arith.addf %11, %12 : vector<2x1xf32>
    %14 = math.rsqrt %13 : vector<2x1xf32>
    %15 = vector.broadcast %4 : vector<2x1xf32> to vector<2x128xf32>
    %16 = arith.subf %0, %15 : vector<2x128xf32>
    %c0_5 = arith.constant 0 : index
    %c0_6 = arith.constant 0 : index
    %17 = vector.load %arg2[%c0_5, %c0_6] : memref<1x128xf32, #tpu.memory_space<vmem>>, vector<1x128xf32>
    %18 = vector.broadcast %14 : vector<2x1xf32> to vector<2x128xf32>
    %19 = vector.broadcast %17 : vector<1x128xf32> to vector<2x128xf32>
    %20 = arith.mulf %18, %19 : vector<2x128xf32>
    %21 = arith.mulf %16, %20 : vector<2x128xf32>
    %c0_7 = arith.constant 0 : index
    %c0_8 = arith.constant 0 : index
    %22 = vector.load %arg3[%c0_7, %c0_8] : memref<1x128xf32, #tpu.memory_space<vmem>>, vector<1x128xf32>
    %23 = vector.broadcast %22 : vector<1x128xf32> to vector<2x128xf32>
    %24 = arith.addf %21, %23 : vector<2x128xf32>
    %25 = arith.truncf %24 : vector<2x128xf32> to vector<2x128xbf16>
    %c0_9 = arith.constant 0 : index
    %c0_10 = arith.constant 0 : index
    %26 = vector.load %arg4[%c0_9, %c0_10] : memref<128x10xbf16, #tpu.memory_space<vmem>>, vector<128x10xbf16>
    %cst_11 = arith.constant dense<0.000000e+00> : vector<2x10xf32>
    %27 = tpu.matmul %25, %26, %cst_11 {dimension_numbers = #tpu.dot_dimension_numbers<[1], [0], [0], [1], [0, 0, 1, 1], [], []>} : vector<2x128xbf16>, vector<128x10xbf16>, vector<2x10xf32> -> vector<2x10xf32>
    %c0_12 = arith.constant 0 : index
    %c0_13 = arith.constant 0 : index
    %28 = vector.load %arg5[%c0_12, %c0_13] : memref<1x10xf32, #tpu.memory_space<vmem>>, vector<1x10xf32>
    %29 = vector.broadcast %28 : vector<1x10xf32> to vector<2x10xf32>
    %30 = arith.addf %27, %29 : vector<2x10xf32>
    %c0_14 = arith.constant 0 : index
    %c0_15 = arith.constant 0 : index
    %31 = vector.load %arg6[%c0_14, %c0_15] : memref<2x10xf32, #tpu.memory_space<vmem>>, vector<2x10xf32>
    tpu.vector_store %arg6[%c0_14, %c0_15], %30 {strides = array<i32>} : memref<2x10xf32, #tpu.memory_space<vmem>>, vector<2x10xf32>,
    return
  }
  func.func @transform_0(%arg0: i32) -> (i32, i32) {
    %c0_i32 = arith.constant 0 : i32
    %c0_i32_0 = arith.constant 0 : i32
    %c0_i32_1 = arith.constant 0 : i32
    return %c0_i32, %c0_i32_0 : i32, i32
  }
  func.func @transform_1(%arg0: i32) -> (i32, i32) {
    %c0_i32 = arith.constant 0 : i32
    %c0_i32_0 = arith.constant 0 : i32
    %c0_i32_1 = arith.constant 0 : i32
    return %c0_i32, %c0_i32_0 : i32, i32
  }
  func.func @transform_2(%arg0: i32) -> (i32, i32) {
    %c0_i32 = arith.constant 0 : i32
    %c0_i32_0 = arith.constant 0 : i32
    %c0_i32_1 = arith.constant 0 : i32
    return %c0_i32, %c0_i32_0 : i32, i32
  }
  func.func @transform_3(%arg0: i32) -> (i32, i32) {
    %c0_i32 = arith.constant 0 : i32
    %c0_i32_0 = arith.constant 0 : i32
    %c0_i32_1 = arith.constant 0 : i32
    return %c0_i32, %c0_i32_0 : i32, i32
  }
  func.func @transform_4(%arg0: i32) -> (i32, i32) {
    %c0_i32 = arith.constant 0 : i32
    %c0_i32_0 = arith.constant 0 : i32
    %c0_i32_1 = arith.constant 0 : i32
    return %c0_i32, %c0_i32_0 : i32, i32
  }
  func.func @transform_5(%arg0: i32) -> (i32, i32) {
    %c0_i32 = arith.constant 0 : i32
    %c0_i32_0 = arith.constant 0 : i32
    %c0_i32_1 = arith.constant 0 : i32
    return %c0_i32, %c0_i32_0 : i32, i32
  }
}

</mosaic_0001>

<llo_original>
// kernel: vit_forward.4
$region0: #{vit_forward.4}
  #allocation0 [shape = 'u32[]', space=smem, size = 0x4, offset = 0x4, fixed_abs, tag = 'smem constant byte address 0x4 - core index']
  #allocation1 [shape = 'u32[144,128]{1,0:T(1,128)}', space=vmem, size = 0x12000, scoped, tag = 'internal scratch']
  %s0 = inlined_call_operand.vmem [shape: bf16[2,4,768], index: 0, kind: input, shape index: {}]
  %s1 = inlined_call_operand.vmem [shape: bf16[768,128], index: 1, kind: input, shape index: {}]
  %s2 = inlined_call_operand.vmem [shape: f32[1,128], index: 2, kind: input, shape index: {}]
  %s3 = inlined_call_operand.vmem [shape: f32[1,128], index: 3, kind: input, shape index: {}]
  %s4 = inlined_call_operand.vmem [shape: f32[5,128], index: 4, kind: input, shape index: {}]
  %s5 = inlined_call_operand.vmem [shape: f32[2,5,128], index: 5, kind: output, shape index: {}]
  %s6 = sld [smem:[#allocation0]]
  $region53: #{vit_forward.4} parent=0
    _
  %s8 = ssub.s32 1, %s6
  %s9 = scalar_select 0, %s8, %s6
  loop: start=0, step=1, limit=4
  $region2: #{vit_forward.4} parent=0 // loop_pre_header
    _
  $region3: #{vit_forward.4} parent=0 // loop_header
    %s11 = sphi 0, %s15
    %p12 = scmp.ge.s32.totalorder %s11, 4
    %s21 = sphi 0, %s23
    %s24 = sphi 0, %s21
    %s25 = sphi 0, %s24
    %s41 = sphi 0, %s25
    %s45 = sphi 0, %s45
    %s47 = sphi 0, %s45
    %s48 = sphi 0, %s47
    %s62 = sphi 0, %s48
    %s66 = sphi 0, %s66
    %s68 = sphi 0, %s66
    %s69 = sphi 0, %s68
    %s83 = sphi 0, %s69
    %s87 = sphi 0, %s87
    %s89 = sphi 0, %s87
    %s90 = sphi 0, %s89
    %s104 = sphi 0, %s90
    %s108 = sphi 0, %s108
    %s110 = sphi 0, %s108
    %s111 = sphi 0, %s110
    %s125 = sphi 0, %s111
    %s131 = sphi 0, %s133
    %s134 = sphi 0, %s131
    %s135 = sphi 0, %s134
    %s151 = sphi 0, %s135
  $region4: #{vit_forward.4} parent=0 // loop_header_branch
    %14 = sbr.rel (%p12) target = $region8
  $region5: #{vit_forward.4} parent=0 // loop_body
    %s16 = ssub.s32 %s11, 1
    %s17 = ssub.s32 %s11, 2
    %s18 = sadd.s32 %s11, 1
    %s19 = ssub.s32 %s11, %s18
    %p20 = scmp.eq.s32.totalorder %s19, 0
    %s22 = sadd.s32 %s21, 1
    %s23 = scalar_select %p20, %s21, %s22
    %p26 = pneg %p20
    %p27 = scmp.eq.s32.totalorder %s11, 1
    %p28 = por %p26, %p27
    %p29 = scmp.ne.s32.totalorder %s21, %s24
    %p30 = scmp.eq.s32.totalorder %s11, 0
    %p31 = por %p29, %p30
    %p32 = scmp.ne.s32.totalorder %s21, %s24
    %p33 = scmp.eq.s32.totalorder %s16, 1
    %p34 = por %p32, %p33
    %p35 = scmp.ne.s32.totalorder %s24, %s25
    %p36 = scmp.eq.s32.totalorder %s16, 0
    %p37 = por %p35, %p36
    %p38 = scmp.ne.s32.totalorder %s24, %s25
    %p39 = scmp.eq.s32.totalorder %s17, 1
    %p40 = por %p38, %p39
    %p42 = scmp.ne.s32.totalorder %s25, %s41
    %p43 = scmp.eq.s32.totalorder %s17, 0
    %p44 = por %p42, %p43
    %s46 = sadd.s32 %s45, 1
    %p49 = scmp.eq.s32.totalorder %s11, 1
    %p50 = scmp.ne.s32.totalorder %s45, %s47
    %p51 = scmp.eq.s32.totalorder %s11, 0
    %p52 = por %p50, %p51
    %p53 = scmp.ne.s32.totalorder %s45, %s47
    %p54 = scmp.eq.s32.totalorder %s16, 1
    %p55 = por %p53, %p54
    %p56 = scmp.ne.s32.totalorder %s47, %s48
    %p57 = scmp.eq.s32.totalorder %s16, 0
    %p58 = por %p56, %p57
    %p59 = scmp.ne.s32.totalorder %s47, %s48
    %p60 = scmp.eq.s32.totalorder %s17, 1
    %p61 = por %p59, %p60
    %p63 = scmp.ne.s32.totalorder %s48, %s62
    %p64 = scmp.eq.s32.totalorder %s17, 0
    %p65 = por %p63, %p64
    %s67 = sadd.s32 %s66, 1
    %p70 = scmp.eq.s32.totalorder %s11, 1
    %p71 = scmp.ne.s32.totalorder %s66, %s68
    %p72 = scmp.eq.s32.totalorder %s11, 0
    %p73 = por %p71, %p72
    %p74 = scmp.ne.s32.totalorder %s66, %s68
    %p75 = scmp.eq.s32.totalorder %s16, 1
    %p76 = por %p74, %p75
    %p77 = scmp.ne.s32.totalorder %s68, %s69
    %p78 = scmp.eq.s32.totalorder %s16, 0
    %p79 = por %p77, %p78
    %p80 = scmp.ne.s32.totalorder %s68, %s69
    %p81 = scmp.eq.s32.totalorder %s17, 1
    %p82 = por %p80, %p81
    %p84 = scmp.ne.s32.totalorder %s69, %s83
    %p85 = scmp.eq.s32.totalorder %s17, 0
    %p86 = por %p84, %p85
    %s88 = sadd.s32 %s87, 1
    %p91 = scmp.eq.s32.totalorder %s11, 1
    %p92 = scmp.ne.s32.totalorder %s87, %s89
    %p93 = scmp.eq.s32.totalorder %s11, 0
    %p94 = por %p92, %p93
    %p95 = scmp.ne.s32.totalorder %s87, %s89
    %p96 = scmp.eq.s32.totalorder %s16, 1
    %p97 = por %p95, %p96
    %p98 = scmp.ne.s32.totalorder %s89, %s90
    %p99 = scmp.eq.s32.totalorder %s16, 0
    %p100 = por %p98, %p99
    %p101 = scmp.ne.s32.totalorder %s89, %s90
    %p102 = scmp.eq.s32.totalorder %s17, 1
    %p103 = por %p101, %p102
    %p105 = scmp.ne.s32.totalorder %s90, %s104
    %p106 = scmp.eq.s32.totalorder %s17, 0
    %p107 = por %p105, %p106
    %s109 = sadd.s32 %s108, 1
    %p112 = scmp.eq.s32.totalorder %s11, 1
    %p113 = scmp.ne.s32.totalorder %s108, %s110
    %p114 = scmp.eq.s32.totalorder %s11, 0
    %p115 = por %p113, %p114
    %p116 = scmp.ne.s32.totalorder %s108, %s110
    %p117 = scmp.eq.s32.totalorder %s16, 1
    %p118 = por %p116, %p117
    %p119 = scmp.ne.s32.totalorder %s110, %s111
    %p120 = scmp.eq.s32.totalorder %s16, 0
    %p121 = por %p119, %p120
    %p122 = scmp.ne.s32.totalorder %s110, %s111
    %p123 = scmp.eq.s32.totalorder %s17, 1
    %p124 = por %p122, %p123
    %p126 = scmp.ne.s32.totalorder %s111, %s125
    %p127 = scmp.eq.s32.totalorder %s17, 0
    %p128 = por %p126, %p127
    %s129 = ssub.s32 %s11, %s18
    %p130 = scmp.eq.s32.totalorder %s129, 0
    %s132 = sadd.s32 %s131, 1
    %s133 = scalar_select %p130, %s131, %s132
    %p136 = pneg %p130
    %p137 = scmp.eq.s32.totalorder %s11, 1
    %p138 = por %p136, %p137
    %p139 = scmp.ne.s32.totalorder %s131, %s134
    %p140 = scmp.eq.s32.totalorder %s11, 0
    %p141 = por %p139, %p140
    %p142 = scmp.ne.s32.totalorder %s131, %s134
    %p143 = scmp.eq.s32.totalorder %s16, 1
    %p144 = por %p142, %p143
    %p145 = scmp.ne.s32.totalorder %s134, %s135
    %p146 = scmp.eq.s32.totalorder %s16, 0
    %p147 = por %p145, %p146
    %p148 = scmp.ne.s32.totalorder %s134, %s135
    %p149 = scmp.eq.s32.totalorder %s17, 1
    %p150 = por %p148, %p149
    %p152 = scmp.ne.s32.totalorder %s135, %s151
    %p153 = scmp.eq.s32.totalorder %s17, 0
    %p154 = por %p152, %p153
    %p155 = scmp.le.s32.totalorder 1, %s11
    %p156 = scmp.lt.s32.totalorder %s11, 3
    %p157 = pnand %p155, %p156
    %p158 = pneg %p157
    // Predicated region
    $region9: #{vit_forward.4} parent=5 // pred_check
      _
    $region10: #{vit_forward.4} parent=5 // pred_check_branch
      %160 = sbr.rel (%p157) target = $region12
    $region11: #{vit_forward.4} parent=5 // pred_region
      %s161 = ssub.s32 %s11, 1
      // Predicated region
      $region13: #{vit_forward.4} parent=11 // pred_check
        %p162 = pneg %p58
      $region14: #{vit_forward.4} parent=11 // pred_check_branch
        %164 = sbr.rel (%p162) target = $region16
      $region15: #{vit_forward.4} parent=11 // pred_region
        _
      $region16: #{vit_forward.4} parent=11 // pred_fallthru
        _
      // Predicated region
      $region17: #{vit_forward.4} parent=11 // pred_check
        %p165 = pneg %p79
      $region18: #{vit_forward.4} parent=11 // pred_check_branch
        %167 = sbr.rel (%p165) target = $region20
      $region19: #{vit_forward.4} parent=11 // pred_region
        _
      $region20: #{vit_forward.4} parent=11 // pred_fallthru
        _
      // Predicated region
      $region21: #{vit_forward.4} parent=11 // pred_check
        %p168 = pneg %p100
      $region22: #{vit_forward.4} parent=11 // pred_check_branch
        %170 = sbr.rel (%p168) target = $region24
      $region23: #{vit_forward.4} parent=11 // pred_region
        _
      $region24: #{vit_forward.4} parent=11 // pred_fallthru
        _
      // Predicated region
      $region25: #{vit_forward.4} parent=11 // pred_check
        %p171 = pneg %p121
      $region26: #{vit_forward.4} parent=11 // pred_check_branch
        %173 = sbr.rel (%p171) target = $region28
      $region27: #{vit_forward.4} parent=11 // pred_region
        _
      $region28: #{vit_forward.4} parent=11 // pred_fallthru
        _
    $region12: #{vit_forward.4} parent=5 // pred_fallthru
      _
    %p174 = scmp.lt.s32.totalorder %s11, 2
    // Predicated region
    $region29: #{vit_forward.4} parent=5 // pred_check
      %p175 = pneg %p174
    $region30: #{vit_forward.4} parent=5 // pred_check_branch
      %177 = sbr.rel (%p175) target = $region32
    $region31: #{vit_forward.4} parent=5 // pred_region
      // Predicated region
      $region33: #{vit_forward.4} parent=31 // pred_check
        %p178 = pneg %p31
      $region34: #{vit_forward.4} parent=31 // pred_check_branch
        %180 = sbr.rel (%p178) target = $region36
      $region35: #{vit_forward.4} parent=31 // pred_region
        %p181 = scmp.lt.s32.totalorder %s11, 1
        %s182 = scalar_select %p181, %s11, 1
        %s183 = smul.addr %s182, 6
        %s184 = smul.addr %s183, 2
        %s185 = scalar_lea.vmem %s0, %s184
      $region36: #{vit_forward.4} parent=31 // pred_fallthru
        _
    $region32: #{vit_forward.4} parent=5 // pred_fallthru
      _
    %p186 = scmp.le.s32.totalorder 1, %s11
    %p187 = scmp.lt.s32.totalorder %s11, 3
    %p188 = pnand %p186, %p187
    %p189 = pneg %p188
    // Predicated region
    $region37: #{vit_forward.4} parent=5 // pred_check
      _
    $region38: #{vit_forward.4} parent=5 // pred_check_branch
      %191 = sbr.rel (%p188) target = $region40
    $region39: #{vit_forward.4} parent=5 // pred_region
      %s192 = ssub.s32 %s11, 1
      %p193 = scmp.lt.s32.totalorder %s16, 1
      %s194 = scalar_select %p193, %s16, 1
      %s195 = smul.addr %s194, 6
      %s196 = smul.addr %s195, 2
      %s197 = scalar_lea.vmem %s0, %s196
      %p198 = pneg %p37
      %p199 = pneg %p34
      %p200 = pneg %p58
      %p201 = pneg %p55
      %p202 = pneg %p79
      %p203 = pneg %p76
      %p204 = pneg %p100
      %p205 = pneg %p97
      %p206 = pneg %p121
      %p207 = pneg %p118
      %p208 = pneg %p147
      %p209 = pneg %p144
      %p210 = scmp.lt.s32.totalorder %s16, 1
      %s211 = scalar_select %p210, %s16, 1
      %s212 = smul.addr %s211, 8
      %s213 = scalar_lea.vmem %s5, %s212
      %p214 = scmp.lt.s32.totalorder %s16, 1
      %s215 = scalar_select %p214, %s16, 1
      %s216 = smul.addr %s215, 6
      %s217 = smul.addr %s216, 2
      %s218 = scalar_lea.vmem %s0, %s217
      %p219 = scmp.lt.s32.totalorder %s16, 1
      %s220 = scalar_select %p219, %s16, 1
      %s221 = smul.addr %s220, 8
      %s222 = scalar_lea.vmem %s5, %s221
      %v224 = vld [vmem:[%s218] sm:$0xff]
      %v225 = vld [vmem:[%s218 + $0x8] sm:$0xf]
      %v226 = vld [vmem:[%s1] sm:$0xf]
      %v227 = vld [vmem:[%s1 + $0x4] sm:$0xf]
      %v228 = vld [vmem:[%s1 + $0x8] sm:$0xf]
      %v229 = vld [vmem:[%s1 + $0xc] sm:$0xf]
      %v230 = vld [vmem:[%s1 + $0x10] sm:$0xf]
      %v231 = vld [vmem:[%s1 + $0x14] sm:$0xf]
      %v232 = vld [vmem:[%s1 + $0x18] sm:$0xf]
      %v233 = vld [vmem:[%s1 + $0x1c] sm:$0xf]
      %v234 = vld [vmem:[%s1 + $0x20] sm:$0xf]
      %v235 = vld [vmem:[%s1 + $0x24] sm:$0xf]
      %v236 = vld [vmem:[%s1 + $0x28] sm:$0xf]
      %v237 = vld [vmem:[%s1 + $0x2c] sm:$0xf]
      %v238 = vld [vmem:[%s1 + $0x30] sm:$0xf]
      %v239 = vld [vmem:[%s1 + $0x34] sm:$0xf]
      %v240 = vld [vmem:[%s1 + $0x38] sm:$0xf]
      %v241 = vld [vmem:[%s1 + $0x3c] sm:$0xf]
      %v242 = vld [vmem:[%s1 + $0x40] sm:$0xf]
      %v243 = vld [vmem:[%s1 + $0x44] sm:$0xf]
      %v244 = vld [vmem:[%s1 + $0x48] sm:$0xf]
      %v245 = vld [vmem:[%s1 + $0x4c] sm:$0xf]
      %v246 = vld [vmem:[%s1 + $0x50] sm:$0xf]
      %v247 = vld [vmem:[%s1 + $0x54] sm:$0xf]
      %v248 = vld [vmem:[%s1 + $0x58] sm:$0xf]
      %v249 = vld [vmem:[%s1 + $0x5c] sm:$0xf]
      %v250 = vld [vmem:[%s1 + $0x60] sm:$0xf]
      %v251 = vld [vmem:[%s1 + $0x64] sm:$0xf]
      %v252 = vld [vmem:[%s1 + $0x68] sm:$0xf]
      %v253 = vld [vmem:[%s1 + $0x6c] sm:$0xf]
      %v254 = vld [vmem:[%s1 + $0x70] sm:$0xf]
      %v255 = vld [vmem:[%s1 + $0x74] sm:$0xf]
      %v256 = vld [vmem:[%s1 + $0x78] sm:$0xf]
      %v257 = vld [vmem:[%s1 + $0x7c] sm:$0xf]
      %v258 = vld [vmem:[%s1 + $0x80] sm:$0xf]
      %v259 = vld [vmem:[%s1 + $0x84] sm:$0xf]
      %v260 = vld [vmem:[%s1 + $0x88] sm:$0xf]
      %v261 = vld [vmem:[%s1 + $0x8c] sm:$0xf]
      %v262 = vld [vmem:[%s1 + $0x90] sm:$0xf]
      %v263 = vld [vmem:[%s1 + $0x94] sm:$0xf]
      %v264 = vld [vmem:[%s1 + $0x98] sm:$0xf]
      %v265 = vld [vmem:[%s1 + $0x9c] sm:$0xf]
      %v266 = vld [vmem:[%s1 + $0xa0] sm:$0xf]
      %v267 = vld [vmem:[%s1 + $0xa4] sm:$0xf]
      %v268 = vld [vmem:[%s1 + $0xa8] sm:$0xf]
      %v269 = vld [vmem:[%s1 + $0xac] sm:$0xf]
      %v270 = vld [vmem:[%s1 + $0xb0] sm:$0xf]
      %v271 = vld [vmem:[%s1 + $0xb4] sm:$0xf]
      %v272 = vld [vmem:[%s1 + $0xb8] sm:$0xf]
      %v273 = vld [vmem:[%s1 + $0xbc] sm:$0xf]
      %v274 = vld [vmem:[%s1 + $0xc0] sm:$0xf]
      %v275 = vld [vmem:[%s1 + $0xc4] sm:$0xf]
      %v276 = vld [vmem:[%s1 + $0xc8] sm:$0xf]
      %v277 = vld [vmem:[%s1 + $0xcc] sm:$0xf]
      %v278 = vld [vmem:[%s1 + $0xd0] sm:$0xf]
      %v279 = vld [vmem:[%s1 + $0xd4] sm:$0xf]
      %v280 = vld [vmem:[%s1 + $0xd8] sm:$0xf]
      %v281 = vld [vmem:[%s1 + $0xdc] sm:$0xf]
      %v282 = vld [vmem:[%s1 + $0xe0] sm:$0xf]
      %v283 = vld [vmem:[%s1 + $0xe4] sm:$0xf]
      %v284 = vld [vmem:[%s1 + $0xe8] sm:$0xf]
      %v285 = vld [vmem:[%s1 + $0xec] sm:$0xf]
      %v286 = vld [vmem:[%s1 + $0xf0] sm:$0xf]
      %v287 = vld [vmem:[%s1 + $0xf4] sm:$0xf]
      %v288 = vld [vmem:[%s1 + $0xf8] sm:$0xf]
      %v289 = vld [vmem:[%s1 + $0xfc] sm:$0xf]
      %v290 = vld [vmem:[%s1 + $0x100] sm:$0xf]
      %v291 = vld [vmem:[%s1 + $0x104] sm:$0xf]
      %v292 = vld [vmem:[%s1 + $0x108] sm:$0xf]
      %v293 = vld [vmem:[%s1 + $0x10c] sm:$0xf]
      %v294 = vld [vmem:[%s1 + $0x110] sm:$0xf]
      %v295 = vld [vmem:[%s1 + $0x114] sm:$0xf]
      %v296 = vld [vmem:[%s1 + $0x118] sm:$0xf]
      %v297 = vld [vmem:[%s1 + $0x11c] sm:$0xf]
      %v298 = vld [vmem:[%s1 + $0x120] sm:$0xf]
      %v299 = vld [vmem:[%s1 + $0x124] sm:$0xf]
      %v300 = vld [vmem:[%s1 + $0x128] sm:$0xf]
      %v301 = vld [vmem:[%s1 + $0x12c] sm:$0xf]
      %v302 = vld [vmem:[%s1 + $0x130] sm:$0xf]
      %v303 = vld [vmem:[%s1 + $0x134] sm:$0xf]
      %v304 = vld [vmem:[%s1 + $0x138] sm:$0xf]
      %v305 = vld [vmem:[%s1 + $0x13c] sm:$0xf]
      %v306 = vld [vmem:[%s1 + $0x140] sm:$0xf]
      %v307 = vld [vmem:[%s1 + $0x144] sm:$0xf]
      %v308 = vld [vmem:[%s1 + $0x148] sm:$0xf]
      %v309 = vld [vmem:[%s1 + $0x14c] sm:$0xf]
      %v310 = vld [vmem:[%s1 + $0x150] sm:$0xf]
      %v311 = vld [vmem:[%s1 + $0x154] sm:$0xf]
      %v312 = vld [vmem:[%s1 + $0x158] sm:$0xf]
      %v313 = vld [vmem:[%s1 + $0x15c] sm:$0xf]
      %v314 = vld [vmem:[%s1 + $0x160] sm:$0xf]
      %v315 = vld [vmem:[%s1 + $0x164] sm:$0xf]
      %v316 = vld [vmem:[%s1 + $0x168] sm:$0xf]
      %v317 = vld [vmem:[%s1 + $0x16c] sm:$0xf]
      %v318 = vld [vmem:[%s1 + $0x170] sm:$0xf]
      %v319 = vld [vmem:[%s1 + $0x174] sm:$0xf]
      %v320 = vld [vmem:[%s1 + $0x178] sm:$0xf]
      %v321 = vld [vmem:[%s1 + $0x17c] sm:$0xf]
      %v322 = vld [vmem:[%s4] sm:$0x1f]
      %v323 = vld [vmem:[%s3] sm:$0x1]
      %v324 = vadd.f32 %v323, %v322
      %v325 = vld [vmem:[%s2] sm:$0x1]
      %v327 = vlaneseq
      %v328 = vshrl.u32 %v327, 7
      %v329 = vsub.s32 0, %v328
      %v330 = vrot.slane %v325, %v329
      %v334 = vcombine.high %v224, %v224
      %v336 = vunpack.c.l.s4 1983009808
      %v337 = vunpack.c.0.s8 %v336
      %v338 = vlaneseq
      %v339 = vshrl.u32 %v338, 7
      %v340 = vsub.s32 %v337, %v339
      %v341 = vrot.slane %v224, %v340
      %v343 = vunpack.c.l.s4 1983009808
      %v344 = vunpack.c.0.s8 %v343
      %v345 = vlaneseq
      %v346 = vshrl.u32 %v345, 7
      %v347 = vsub.s32 %v344, %v346
      %v348 = vrot.slane %v334, %v347
      %v349 = vcombine.high %v341, %v341
      %v350 = vcombine.high %v348, %v348
      %v352 = vunpack.c.l.s4 1983009808
      %v353 = vunpack.c.0.s8 %v352
      %v354 = vlaneseq
      %v355 = vshrl.u32 %v354, 7
      %v356 = vsub.s32 %v353, %v355
      %v357 = vrot.slane %v225, %v356
      %v358 = vcombine.high %v357, %v357
      %v461 = vunpack.c.l.b16 %v226
      %v462 = vunpack.c.l.b16 %v227
      %v463 = vunpack.c.l.b16 %v228
      %v464 = vunpack.c.l.b16 %v229
      %v465 = vunpack.c.l.b16 %v230
      %v466 = vunpack.c.l.b16 %v231
      %v467 = vunpack.c.l.b16 %v232
      %v468 = vunpack.c.l.b16 %v233
      %v469 = vunpack.c.l.b16 %v234
      %v470 = vunpack.c.l.b16 %v235
      %v471 = vunpack.c.l.b16 %v236
      %v472 = vunpack.c.l.b16 %v237
      %v473 = vunpack.c.l.b16 %v238
      %v474 = vunpack.c.l.b16 %v239
      %v475 = vunpack.c.l.b16 %v240
      %v476 = vunpack.c.l.b16 %v241
      %v477 = vunpack.c.l.b16 %v242
      %v478 = vunpack.c.l.b16 %v243
      %v479 = vunpack.c.l.b16 %v244
      %v480 = vunpack.c.l.b16 %v245
      %v481 = vunpack.c.l.b16 %v246
      %v482 = vunpack.c.l.b16 %v247
      %v483 = vunpack.c.l.b16 %v248
      %v484 = vunpack.c.l.b16 %v249
      %v485 = vunpack.c.l.b16 %v250
      %v486 = vunpack.c.l.b16 %v251
      %v487 = vunpack.c.l.b16 %v252
      %v488 = vunpack.c.l.b16 %v253
      %v489 = vunpack.c.l.b16 %v254
      %v490 = vunpack.c.l.b16 %v255
      %v491 = vunpack.c.l.b16 %v256
      %v492 = vunpack.c.l.b16 %v257
      %v493 = vunpack.c.l.b16 %v258
      %v494 = vunpack.c.l.b16 %v259
      %v495 = vunpack.c.l.b16 %v260
      %v496 = vunpack.c.l.b16 %v261
      %v497 = vunpack.c.l.b16 %v262
      %v498 = vunpack.c.l.b16 %v263
      %v499 = vunpack.c.l.b16 %v264
      %v500 = vunpack.c.l.b16 %v265
      %v501 = vunpack.c.l.b16 %v266
      %v502 = vunpack.c.l.b16 %v267
      %v503 = vunpack.c.l.b16 %v268
      %v504 = vunpack.c.l.b16 %v269
      %v505 = vunpack.c.l.b16 %v270
      %v506 = vunpack.c.l.b16 %v271
      %v507 = vunpack.c.l.b16 %v272
      %v508 = vunpack.c.l.b16 %v273
      %v509 = vunpack.c.l.b16 %v274
      %v510 = vunpack.c.l.b16 %v275
      %v511 = vunpack.c.l.b16 %v276
      %v512 = vunpack.c.l.b16 %v277
      %v513 = vunpack.c.l.b16 %v278
      %v514 = vunpack.c.l.b16 %v279
      %v515 = vunpack.c.l.b16 %v280
      %v516 = vunpack.c.l.b16 %v281
      %v517 = vunpack.c.l.b16 %v282
      %v518 = vunpack.c.l.b16 %v283
      %v519 = vunpack.c.l.b16 %v284
      %v520 = vunpack.c.l.b16 %v285
      %v521 = vunpack.c.l.b16 %v286
      %v522 = vunpack.c.l.b16 %v287
      %v523 = vunpack.c.l.b16 %v288
      %v524 = vunpack.c.l.b16 %v289
      %v525 = vunpack.c.l.b16 %v290
      %v526 = vunpack.c.l.b16 %v291
      %v527 = vunpack.c.l.b16 %v292
      %v528 = vunpack.c.l.b16 %v293
      %v529 = vunpack.c.l.b16 %v294
      %v530 = vunpack.c.l.b16 %v295
      %v531 = vunpack.c.l.b16 %v296
      %v532 = vunpack.c.l.b16 %v297
      %v533 = vunpack.c.l.b16 %v298
      %v534 = vunpack.c.l.b16 %v299
      %v535 = vunpack.c.l.b16 %v300
      %v536 = vunpack.c.l.b16 %v301
      %v537 = vunpack.c.l.b16 %v302
      %v538 = vunpack.c.l.b16 %v303
      %v539 = vunpack.c.l.b16 %v304
      %v540 = vunpack.c.l.b16 %v305
      %v541 = vunpack.c.l.b16 %v306
      %v542 = vunpack.c.l.b16 %v307
      %v543 = vunpack.c.l.b16 %v308
      %v544 = vunpack.c.l.b16 %v309
      %v545 = vunpack.c.l.b16 %v310
      %v546 = vunpack.c.l.b16 %v311
      %v547 = vunpack.c.l.b16 %v312
      %v548 = vunpack.c.l.b16 %v313
      %v549 = vunpack.c.l.b16 %v314
      %v550 = vunpack.c.l.b16 %v315
      %v551 = vunpack.c.l.b16 %v316
      %v552 = vunpack.c.l.b16 %v317
      %v553 = vunpack.c.l.b16 %v318
      %v554 = vunpack.c.l.b16 %v319
      %v555 = vunpack.c.l.b16 %v320
      %v556 = vunpack.c.l.b16 %v321
      %v557 = vpack.c.b16 %v462, %v461
      %v558 = vpack.c.b16 %v464, %v463
      %v559 = vpack.c.b16 %v466, %v465
      %v560 = vpack.c.b16 %v468, %v467
      %v561 = vpack.c.b16 %v470, %v469
      %v562 = vpack.c.b16 %v472, %v471
      %v563 = vpack.c.b16 %v474, %v473
      %v564 = vpack.c.b16 %v476, %v475
      %v565 = vpack.c.b16 %v478, %v477
      %v566 = vpack.c.b16 %v480, %v479
      %v567 = vpack.c.b16 %v482, %v481
      %v568 = vpack.c.b16 %v484, %v483
      %v569 = vpack.c.b16 %v486, %v485
      %v570 = vpack.c.b16 %v488, %v487
      %v571 = vpack.c.b16 %v490, %v489
      %v572 = vpack.c.b16 %v492, %v491
      %v573 = vpack.c.b16 %v494, %v493
      %v574 = vpack.c.b16 %v496, %v495
      %v575 = vpack.c.b16 %v498, %v497
      %v576 = vpack.c.b16 %v500, %v499
      %v577 = vpack.c.b16 %v502, %v501
      %v578 = vpack.c.b16 %v504, %v503
      %v579 = vpack.c.b16 %v506, %v505
      %v580 = vpack.c.b16 %v508, %v507
      %v581 = vpack.c.b16 %v510, %v509
      %v582 = vpack.c.b16 %v512, %v511
      %v583 = vpack.c.b16 %v514, %v513
      %v584 = vpack.c.b16 %v516, %v515
      %v585 = vpack.c.b16 %v518, %v517
      %v586 = vpack.c.b16 %v520, %v519
      %v587 = vpack.c.b16 %v522, %v521
      %v588 = vpack.c.b16 %v524, %v523
      %v589 = vpack.c.b16 %v526, %v525
      %v590 = vpack.c.b16 %v528, %v527
      %v591 = vpack.c.b16 %v530, %v529
      %v592 = vpack.c.b16 %v532, %v531
      %v593 = vpack.c.b16 %v534, %v533
      %v594 = vpack.c.b16 %v536, %v535
      %v595 = vpack.c.b16 %v538, %v537
      %v596 = vpack.c.b16 %v540, %v539
      %v597 = vpack.c.b16 %v542, %v541
      %v598 = vpack.c.b16 %v544, %v543
      %v599 = vpack.c.b16 %v546, %v545
      %v600 = vpack.c.b16 %v548, %v547
      %v601 = vpack.c.b16 %v550, %v549
      %v602 = vpack.c.b16 %v552, %v551
      %v603 = vpack.c.b16 %v554, %v553
      %v604 = vpack.c.b16 %v556, %v555
      %653 = vmatprep.subr.bf16.mxu0 0
      %654 = vmatpush1.bf16.msra.mxu0 %v557
      %655 = vmatprep.subr.bf16.mxu0 0
      %656 = vmatpush1.bf16.msra.mxu0 %v558
      %657 = vmatprep.subr.bf16.mxu0 0
      %658 = vmatpush1.bf16.msra.mxu0 %v559
      %659 = vmatprep.subr.bf16.mxu0 0
      %660 = vmatpush1.bf16.msra.mxu0 %v560
      %661 = vmatprep.subr.bf16.mxu0 0
      %662 = vmatpush1.bf16.msra.mxu0 %v561
      %663 = vmatprep.subr.bf16.mxu0 0
      %664 = vmatpush1.bf16.msra.mxu0 %v562
      %665 = vmatprep.subr.bf16.mxu0 0
      %666 = vmatpush1.bf16.msra.mxu0 %v563
      %667 = vmatprep.subr.bf16.mxu0 0
      %668 = vmatpush1.bf16.msra.mxu0 %v564
      %669 = vmatprep.subr.bf16.mxu0 0
      %670 = vmatpush1.bf16.msra.mxu0 %v565
      %671 = vmatprep.subr.bf16.mxu0 0
      %672 = vmatpush1.bf16.msra.mxu0 %v566
      %673 = vmatprep.subr.bf16.mxu0 0
      %674 = vmatpush1.bf16.msra.mxu0 %v567
      %675 = vmatprep.subr.bf16.mxu0 0
      %676 = vmatpush1.bf16.msra.mxu0 %v568
      %677 = vmatprep.subr.bf16.mxu0 0
      %678 = vmatpush1.bf16.msra.mxu0 %v569
      %679 = vmatprep.subr.bf16.mxu0 0
      %680 = vmatpush1.bf16.msra.mxu0 %v570
      %681 = vmatprep.subr.bf16.mxu0 0
      %682 = vmatpush1.bf16.msra.mxu0 %v571
      %683 = vmatprep.subr.bf16.mxu0 0
      %684 = vmatpush1.bf16.msra.mxu0 %v572
      %685 = vmatprep.mubr.bf16.mxu0 %v349
      %686 = vmatmul.mubr.bf16.gmra.mrb[0].mxu0 %v341
      %v687 = vpop.f32.mrb[0].mxu0
      %v688 = vadd.f32 %v330, %v687
      %v689 = vpop.f32.mrb[0].mxu0
      %v690 = vpop.f32.mrb[0].mxu0
      %v691 = vpop.f32.mrb[0].mxu0
      %692 = vdwg.mxu0
      %693 = vmatprep.subr.bf16.mxu0 0
      %694 = vmatpush1.bf16.msra.mxu0 %v573
      %695 = vmatprep.subr.bf16.mxu0 0
      %696 = vmatpush1.bf16.msra.mxu0 %v574
      %697 = vmatprep.subr.bf16.mxu0 0
      %698 = vmatpush1.bf16.msra.mxu0 %v575
      %699 = vmatprep.subr.bf16.mxu0 0
      %700 = vmatpush1.bf16.msra.mxu0 %v576
      %701 = vmatprep.subr.bf16.mxu0 0
      %702 = vmatpush1.bf16.msra.mxu0 %v577
      %703 = vmatprep.subr.bf16.mxu0 0
      %704 = vmatpush1.bf16.msra.mxu0 %v578
      %705 = vmatprep.subr.bf16.mxu0 0
      %706 = vmatpush1.bf16.msra.mxu0 %v579
      %707 = vmatprep.subr.bf16.mxu0 0
      %708 = vmatpush1.bf16.msra.mxu0 %v580
      %709 = vmatprep.subr.bf16.mxu0 0
      %710 = vmatpush1.bf16.msra.mxu0 %v581
      %711 = vmatprep.subr.bf16.mxu0 0
      %712 = vmatpush1.bf16.msra.mxu0 %v582
      %713 = vmatprep.subr.bf16.mxu0 0
      %714 = vmatpush1.bf16.msra.mxu0 %v583
      %715 = vmatprep.subr.bf16.mxu0 0
      %716 = vmatpush1.bf16.msra.mxu0 %v584
      %717 = vmatprep.subr.bf16.mxu0 0
      %718 = vmatpush1.bf16.msra.mxu0 %v585
      %719 = vmatprep.subr.bf16.mxu0 0
      %720 = vmatpush1.bf16.msra.mxu0 %v586
      %721 = vmatprep.subr.bf16.mxu0 0
      %722 = vmatpush1.bf16.msra.mxu0 %v587
      %723 = vmatprep.subr.bf16.mxu0 0
      %724 = vmatpush1.bf16.msra.mxu0 %v588
      %725 = vmatprep.mubr.bf16.mxu0 %v350
      %726 = vmatmul.mubr.bf16.gmra.mrb[0].mxu0 %v348
      %v727 = vpop.f32.mrb[0].mxu0
      %v728 = vadd.f32 %v688, %v727
      %v729 = vpop.f32.mrb[0].mxu0
      %v730 = vpop.f32.mrb[0].mxu0
      %v731 = vpop.f32.mrb[0].mxu0
      %732 = vdwg.mxu0
      %733 = vmatprep.subr.bf16.mxu0 0
      %734 = vmatpush1.bf16.msra.mxu0 %v589
      %735 = vmatprep.subr.bf16.mxu0 0
      %736 = vmatpush1.bf16.msra.mxu0 %v590
      %737 = vmatprep.subr.bf16.mxu0 0
      %738 = vmatpush1.bf16.msra.mxu0 %v591
      %739 = vmatprep.subr.bf16.mxu0 0
      %740 = vmatpush1.bf16.msra.mxu0 %v592
      %741 = vmatprep.subr.bf16.mxu0 0
      %742 = vmatpush1.bf16.msra.mxu0 %v593
      %743 = vmatprep.subr.bf16.mxu0 0
      %744 = vmatpush1.bf16.msra.mxu0 %v594
      %745 = vmatprep.subr.bf16.mxu0 0
      %746 = vmatpush1.bf16.msra.mxu0 %v595
      %747 = vmatprep.subr.bf16.mxu0 0
      %748 = vmatpush1.bf16.msra.mxu0 %v596
      %749 = vmatprep.subr.bf16.mxu0 0
      %750 = vmatpush1.bf16.msra.mxu0 %v597
      %751 = vmatprep.subr.bf16.mxu0 0
      %752 = vmatpush1.bf16.msra.mxu0 %v598
      %753 = vmatprep.subr.bf16.mxu0 0
      %754 = vmatpush1.bf16.msra.mxu0 %v599
      %755 = vmatprep.subr.bf16.mxu0 0
      %756 = vmatpush1.bf16.msra.mxu0 %v600
      %757 = vmatprep.subr.bf16.mxu0 0
      %758 = vmatpush1.bf16.msra.mxu0 %v601
      %759 = vmatprep.subr.bf16.mxu0 0
      %760 = vmatpush1.bf16.msra.mxu0 %v602
      %761 = vmatprep.subr.bf16.mxu0 0
      %762 = vmatpush1.bf16.msra.mxu0 %v603
      %763 = vmatprep.subr.bf16.mxu0 0
      %764 = vmatpush1.bf16.msra.mxu0 %v604
      %765 = vmatprep.mubr.bf16.mxu0 %v358
      %766 = vmatmul.mubr.bf16.gmra.mrb[0].mxu0 %v357
      %v767 = vpop.f32.mrb[0].mxu0
      %v768 = vadd.f32 %v728, %v767
      %v769 = vpop.f32.mrb[0].mxu0
      %v770 = vpop.f32.mrb[0].mxu0
      %v771 = vpop.f32.mrb[0].mxu0
      %772 = vdwg.mxu0
      %v774 = vrot.slane %v322, 1
      %v776 = vadd.f32 %v768, %v774
      %v778 = vrot.slane %v776, 7
      %vm780 = vcmask 1040384
      %v781 = vsel %vm780, %v324, %v778
      %782 = vst [vmem:[%s222] sm:$0x1f] %v781
      %p783 = scmp.lt.s32.totalorder %s16, 1
      %s784 = scalar_select %p783, %s16, 1
      %s785 = smul.addr %s784, 8
      %s786 = scalar_lea.vmem %s5, %s785
      // Predicated region
      $region41: #{vit_forward.4} parent=39 // pred_check
        %p787 = pneg %p144
      $region42: #{vit_forward.4} parent=39 // pred_check_branch
        %789 = sbr.rel (%p787) target = $region44
      $region43: #{vit_forward.4} parent=39 // pred_region
        _
      $region44: #{vit_forward.4} parent=39 // pred_fallthru
        _
    $region40: #{vit_forward.4} parent=5 // pred_fallthru
      _
    %p790 = scmp.le.s32.totalorder 2, %s11
    // Predicated region
    $region45: #{vit_forward.4} parent=5 // pred_check
      %p791 = pneg %p790
    $region46: #{vit_forward.4} parent=5 // pred_check_branch
      %793 = sbr.rel (%p791) target = $region48
    $region47: #{vit_forward.4} parent=5 // pred_region
      %s794 = ssub.s32 %s11, 2
      // Predicated region
      $region49: #{vit_forward.4} parent=47 // pred_check
        %p795 = pneg %p150
      $region50: #{vit_forward.4} parent=47 // pred_check_branch
        %797 = sbr.rel (%p795) target = $region52
      $region51: #{vit_forward.4} parent=47 // pred_region
        %p798 = scmp.lt.s32.totalorder %s17, 1
        %s799 = scalar_select %p798, %s17, 1
        %s800 = smul.addr %s799, 8
        %s801 = scalar_lea.vmem %s5, %s800
      $region52: #{vit_forward.4} parent=47 // pred_fallthru
        _
    $region48: #{vit_forward.4} parent=5 // pred_fallthru
      _
  $region6: #{vit_forward.4} parent=0 // loop_footer
    %s15 = sadd.s32 1, %s11
  $region7: #{vit_forward.4} parent=0 // loop_footer_branch
    %10 = sbr.rel target = $region3
  $region8: #{vit_forward.4} parent=0 // loop_exit
    _

// kernel: vit_forward.7
$region0: #{vit_forward.7}
  #allocation0 [shape = 'u32[]', space=smem, size = 0x4, offset = 0x4, fixed_abs, tag = 'smem constant byte address 0x4 - core index']
  #allocation1 [shape = 'u32[144,128]{1,0:T(1,128)}', space=vmem, size = 0x12000, scoped, tag = 'internal scratch']
  %s0 = inlined_call_operand.vmem [shape: f32[2,128], index: 0, kind: input, shape index: {}]
  %s1 = inlined_call_operand.vmem [shape: f32[1,128], index: 1, kind: input, shape index: {}]
  %s2 = inlined_call_operand.vmem [shape: f32[1,128], index: 2, kind: input, shape index: {}]
  %s3 = inlined_call_operand.vmem [shape: bf16[128,10], index: 3, kind: input, shape index: {}]
  %s4 = inlined_call_operand.vmem [shape: f32[1,10], index: 4, kind: input, shape index: {}]
  %s5 = inlined_call_operand.hbm [shape: f32[2,10], index: 5, kind: output, shape index: {}]
  %s6 = sld [smem:[#allocation0]]
  $region30: #{vit_forward.7} parent=0
    _
  %s8 = ssub.s32 1, %s6
  %s9 = scalar_select 0, %s8, %s6
  $region1: #{vit_forward.7} parent=0
    #allocation2 [shape = 'u8[1024]{0}', space=vmem, size = 0x400, scoped, tag = 'output window, operand 0, single buffered']
    #allocation3 [shape = 's32[1]{0}', space=sflag, size = 0x4, scoped, tag = 'scoped memory for vit_forward.7']
    %10 = vsyncpa [#allocation3], 0
    // Predicated region
    $region2: #{vit_forward.7} parent=1 // pred_check
      _
    $region3: #{vit_forward.7} parent=1 // pred_check_branch
      %12 = sbr.rel (0) target = $region5
    $region4: #{vit_forward.7} parent=1 // pred_region
      _
    $region5: #{vit_forward.7} parent=1 // pred_fallthru
      _
    // Predicated region
    $region6: #{vit_forward.7} parent=1 // pred_check
      _
    $region7: #{vit_forward.7} parent=1 // pred_check_branch
      %14 = sbr.rel (0) target = $region9
    $region8: #{vit_forward.7} parent=1 // pred_region
      _
    $region9: #{vit_forward.7} parent=1 // pred_fallthru
      _
    // Predicated region
    $region10: #{vit_forward.7} parent=1 // pred_check
      _
    $region11: #{vit_forward.7} parent=1 // pred_check_branch
      %16 = sbr.rel (0) target = $region13
    $region12: #{vit_forward.7} parent=1 // pred_region
      _
    $region13: #{vit_forward.7} parent=1 // pred_fallthru
      _
    // Predicated region
    $region14: #{vit_forward.7} parent=1 // pred_check
      _
    $region15: #{vit_forward.7} parent=1 // pred_check_branch
      %18 = sbr.rel (0) target = $region17
    $region16: #{vit_forward.7} parent=1 // pred_region
      _
    $region17: #{vit_forward.7} parent=1 // pred_fallthru
      _
    // Predicated region
    $region18: #{vit_forward.7} parent=1 // pred_check
      _
    $region19: #{vit_forward.7} parent=1 // pred_check_branch
      %20 = sbr.rel (0) target = $region21
    $region20: #{vit_forward.7} parent=1 // pred_region
      _
    $region21: #{vit_forward.7} parent=1 // pred_fallthru
      _
    %v22 = vld [vmem:[%s0] sm:$0x3]
    %vm23 = vcmask 1041408
    %v24 = vsel %vm23, %v22, 0.0
    %25 = vadd.xlane.f32.xlu0 %v24
    %v26 = vpop.xlane.xlu0 %25
    %v27 = vrcp.pop 128.0
    %v28 = vmul.f32 %v26, %v27
    %v29 = vmul.f32 %v22, %v22
    %v30 = vsel %vm23, %v29, 0.0
    %31 = vadd.xlane.f32.xlu0 %v30
    %v32 = vpop.xlane.xlu0 %31
    %v33 = vmul.f32 %v32, %v27
    %v34 = vmul.f32 %v28, %v28
    %v35 = vsub.f32 %v33, %v34
    %v36 = vadd.f32 %v35, 1e-06
    %v37 = vrsqrt.pop %v36
    %v38 = vsub.f32 %v22, %v28
    %v39 = vld [vmem:[%s1] sm:$0x1]
    %v41 = vlaneseq
    %v42 = vshrl.u32 %v41, 7
    %v43 = vsub.s32 0, %v42
    %v44 = vrot.slane %v39, %v43
    %v46 = vmul.f32 %v37, %v44
    %v47 = vmul.f32 %v38, %v46
    %v48 = vld [vmem:[%s2] sm:$0x1]
    %v50 = vlaneseq
    %v51 = vshrl.u32 %v50, 7
    %v52 = vsub.s32 0, %v51
    %v53 = vrot.slane %v48, %v52
    %v55 = vadd.f32 %v47, %v53
    %v56 = vpack.c.bf16 %v55, %v55
    %v57 = vld [vmem:[%s3] sm:$0xf]
    %v58 = vld [vmem:[%s3 + $0x4] sm:$0xf]
    %v59 = vld [vmem:[%s3 + $0x8] sm:$0xf]
    %v60 = vld [vmem:[%s3 + $0xc] sm:$0xf]
    %v61 = vld [vmem:[%s3 + $0x10] sm:$0xf]
    %v62 = vld [vmem:[%s3 + $0x14] sm:$0xf]
    %v63 = vld [vmem:[%s3 + $0x18] sm:$0xf]
    %v64 = vld [vmem:[%s3 + $0x1c] sm:$0xf]
    %v65 = vld [vmem:[%s3 + $0x20] sm:$0xf]
    %v66 = vld [vmem:[%s3 + $0x24] sm:$0xf]
    %v67 = vld [vmem:[%s3 + $0x28] sm:$0xf]
    %v68 = vld [vmem:[%s3 + $0x2c] sm:$0xf]
    %v69 = vld [vmem:[%s3 + $0x30] sm:$0xf]
    %v70 = vld [vmem:[%s3 + $0x34] sm:$0xf]
    %v71 = vld [vmem:[%s3 + $0x38] sm:$0xf]
    %v72 = vld [vmem:[%s3 + $0x3c] sm:$0xf]
    %v73 = vld [vmem:[%s4] sm:$0x1]
    %v75 = vlaneseq
    %v76 = vshrl.u32 %v75, 7
    %v77 = vsub.s32 0, %v76
    %v78 = vrot.slane %v73, %v77
    %v96 = vunpack.c.l.b16 %v57
    %v97 = vunpack.c.l.b16 %v58
    %v98 = vunpack.c.l.b16 %v59
    %v99 = vunpack.c.l.b16 %v60
    %v100 = vunpack.c.l.b16 %v61
    %v101 = vunpack.c.l.b16 %v62
    %v102 = vunpack.c.l.b16 %v63
    %v103 = vunpack.c.l.b16 %v64
    %v104 = vunpack.c.l.b16 %v65
    %v105 = vunpack.c.l.b16 %v66
    %v106 = vunpack.c.l.b16 %v67
    %v107 = vunpack.c.l.b16 %v68
    %v108 = vunpack.c.l.b16 %v69
    %v109 = vunpack.c.l.b16 %v70
    %v110 = vunpack.c.l.b16 %v71
    %v111 = vunpack.c.l.b16 %v72
    %v112 = vpack.c.b16 %v97, %v96
    %v113 = vpack.c.b16 %v99, %v98
    %v114 = vpack.c.b16 %v101, %v100
    %v115 = vpack.c.b16 %v103, %v102
    %v116 = vpack.c.b16 %v105, %v104
    %v117 = vpack.c.b16 %v107, %v106
    %v118 = vpack.c.b16 %v109, %v108
    %v119 = vpack.c.b16 %v111, %v110
    %128 = vmatprep.subr.bf16.mxu0 0
    %129 = vmatpush1.bf16.msra.mxu0 %v112
    %130 = vmatprep.subr.bf16.mxu0 0
    %131 = vmatpush1.bf16.msra.mxu0 %v113
    %132 = vmatprep.subr.bf16.mxu0 0
    %133 = vmatpush1.bf16.msra.mxu0 %v114
    %134 = vmatprep.subr.bf16.mxu0 0
    %135 = vmatpush1.bf16.msra.mxu0 %v115
    %136 = vmatprep.subr.bf16.mxu0 0
    %137 = vmatpush1.bf16.msra.mxu0 %v116
    %138 = vmatprep.subr.bf16.mxu0 0
    %139 = vmatpush1.bf16.msra.mxu0 %v117
    %140 = vmatprep.subr.bf16.mxu0 0
    %141 = vmatpush1.bf16.msra.mxu0 %v118
    %142 = vmatprep.subr.bf16.mxu0 0
    %143 = vmatpush1.bf16.msra.mxu0 %v119
    %144 = vmatprep.subr.bf16.mxu0 0
    %145 = vmatpush1.bf16.msra.mxu0 0
    %146 = vmatprep.subr.bf16.mxu0 0
    %147 = vmatpush1.bf16.msra.mxu0 0
    %148 = vmatprep.subr.bf16.mxu0 0
    %149 = vmatpush1.bf16.msra.mxu0 0
    %150 = vmatprep.subr.bf16.mxu0 0
    %151 = vmatpush1.bf16.msra.mxu0 0
    %152 = vmatprep.subr.bf16.mxu0 0
    %153 = vmatpush1.bf16.msra.mxu0 0
    %154 = vmatprep.subr.bf16.mxu0 0
    %155 = vmatpush1.bf16.msra.mxu0 0
    %156 = vmatprep.subr.bf16.mxu0 0
    %157 = vmatpush1.bf16.msra.mxu0 0
    %158 = vmatprep.subr.bf16.mxu0 0
    %159 = vmatpush1.bf16.msra.mxu0 0
    %160 = vmatprep.mubr.bf16.mxu0 0
    %161 = vmatmul.mubr.bf16.gmra.mrb[0].mxu0 %v56
    %v162 = vpop.f32.mrb[0].mxu0
    %v163 = vadd.f32 %v78, %v162
    %v164 = vpop.f32.mrb[0].mxu0
    %v165 = vpop.f32.mrb[0].mxu0
    %v166 = vpop.f32.mrb[0].mxu0
    %167 = vdwg.mxu0
    %vm168 = vcmask 74752
    %169 = vst.msk [vmem:[#allocation2] sm:$0x3] %vm168, %v163
    // Predicated region
    $region22: #{vit_forward.7} parent=1 // pred_check
      _
    $region23: #{vit_forward.7} parent=1 // pred_check_branch
      %171 = sbr.rel (0) target = $region25
    $region24: #{vit_forward.7} parent=1 // pred_region
      %s173 = ssub.s32 32, 32
      %174 = vsyncadd [#allocation3], %s173
      %s176 = sshll.u32 [#allocation2], 4
      %s177 = int_to_ptr.vmem [resolvable:$true] %s176
      %179 = dma.vmem_to_hbm [thread:$0]  %s177, 32, %s5, [#allocation3]
    $region25: #{vit_forward.7} parent=1 // pred_fallthru
      _
    // Predicated region
    $region26: #{vit_forward.7} parent=1 // pred_check
      _
    $region27: #{vit_forward.7} parent=1 // pred_check_branch
      %181 = sbr.rel (0) target = $region29
    $region28: #{vit_forward.7} parent=1 // pred_region
      %182 = dma.done [#allocation3], 32
    $region29: #{vit_forward.7} parent=1 // pred_fallthru
      _
    %183 = vsyncpa [#allocation3], 1

// kernel: vit_forward.5
$region0: #{vit_forward.5}
  #allocation0 [shape = 'u32[]', space=smem, size = 0x4, offset = 0x4, fixed_abs, tag = 'smem constant byte address 0x4 - core index']
  #allocation1 [shape = 'u32[144,128]{1,0:T(1,128)}', space=vmem, size = 0x12000, scoped, tag = 'internal scratch']
  %s0 = inlined_call_operand.vmem [shape: f32[2,5,128], index: 0, kind: input, shape index: {}]
  %s1 = inlined_call_operand.vmem [shape: f32[1,128], index: 1, kind: input, shape index: {}]
  %s2 = inlined_call_operand.vmem [shape: f32[1,128], index: 2, kind: input, shape index: {}]
  %s3 = inlined_call_operand.vmem [shape: bf16[128,384], index: 3, kind: input, shape index: {}]
  %s4 = inlined_call_operand.vmem [shape: f32[1,384], index: 4, kind: input, shape index: {}]
  %s5 = inlined_call_operand.vmem [shape: bf16[128,128], index: 5, kind: input, shape index: {}]
  %s6 = inlined_call_operand.vmem [shape: f32[1,128], index: 6, kind: input, shape index: {}]
  %s7 = inlined_call_operand.vmem [shape: f32[1,128], index: 7, kind: input, shape index: {}]
  %s8 = inlined_call_operand.vmem [shape: f32[1,128], index: 8, kind: input, shape index: {}]
  %s9 = inlined_call_operand.vmem [shape: bf16[128,256], index: 9, kind: input, shape index: {}]
  %s10 = inlined_call_operand.vmem [shape: f32[1,256], index: 10, kind: input, shape index: {}]
  %s11 = inlined_call_operand.vmem [shape: bf16[256,128], index: 11, kind: input, shape index: {}]
  %s12 = inlined_call_operand.vmem [shape: f32[1,128], index: 12, kind: input, shape index: {}]
  %s13 = inlined_call_operand.vmem [shape: f32[2,5,128], index: 13, kind: output, shape index: {}]
  %s14 = sld [smem:[#allocation0]]
  $region85: #{vit_forward.5} parent=0
    _
  %s16 = ssub.s32 1, %s14
  %s17 = scalar_select 0, %s16, %s14
  loop: start=0, step=1, limit=4
  $region2: #{vit_forward.5} parent=0 // loop_pre_header
    _
  $region3: #{vit_forward.5} parent=0 // loop_header
    %s19 = sphi 0, %s23
    %p20 = scmp.ge.s32.totalorder %s19, 4
    %s29 = sphi 0, %s31
    %s32 = sphi 0, %s29
    %s33 = sphi 0, %s32
    %s49 = sphi 0, %s33
    %s53 = sphi 0, %s53
    %s55 = sphi 0, %s53
    %s56 = sphi 0, %s55
    %s70 = sphi 0, %s56
    %s74 = sphi 0, %s74
    %s76 = sphi 0, %s74
    %s77 = sphi 0, %s76
    %s91 = sphi 0, %s77
    %s95 = sphi 0, %s95
    %s97 = sphi 0, %s95
    %s98 = sphi 0, %s97
    %s112 = sphi 0, %s98
    %s116 = sphi 0, %s116
    %s118 = sphi 0, %s116
    %s119 = sphi 0, %s118
    %s133 = sphi 0, %s119
    %s137 = sphi 0, %s137
    %s139 = sphi 0, %s137
    %s140 = sphi 0, %s139
    %s154 = sphi 0, %s140
    %s158 = sphi 0, %s158
    %s160 = sphi 0, %s158
    %s161 = sphi 0, %s160
    %s175 = sphi 0, %s161
    %s179 = sphi 0, %s179
    %s181 = sphi 0, %s179
    %s182 = sphi 0, %s181
    %s196 = sphi 0, %s182
    %s200 = sphi 0, %s200
    %s202 = sphi 0, %s200
    %s203 = sphi 0, %s202
    %s217 = sphi 0, %s203
    %s221 = sphi 0, %s221
    %s223 = sphi 0, %s221
    %s224 = sphi 0, %s223
    %s238 = sphi 0, %s224
    %s242 = sphi 0, %s242
    %s244 = sphi 0, %s242
    %s245 = sphi 0, %s244
    %s259 = sphi 0, %s245
    %s263 = sphi 0, %s263
    %s265 = sphi 0, %s263
    %s266 = sphi 0, %s265
    %s280 = sphi 0, %s266
    %s284 = sphi 0, %s284
    %s286 = sphi 0, %s284
    %s287 = sphi 0, %s286
    %s301 = sphi 0, %s287
    %s307 = sphi 0, %s309
    %s310 = sphi 0, %s307
    %s311 = sphi 0, %s310
    %s327 = sphi 0, %s311
  $region4: #{vit_forward.5} parent=0 // loop_header_branch
    %22 = sbr.rel (%p20) target = $region8
  $region5: #{vit_forward.5} parent=0 // loop_body
    %s24 = ssub.s32 %s19, 1
    %s25 = ssub.s32 %s19, 2
    %s26 = sadd.s32 %s19, 1
    %s27 = ssub.s32 %s19, %s26
    %p28 = scmp.eq.s32.totalorder %s27, 0
    %s30 = sadd.s32 %s29, 1
    %s31 = scalar_select %p28, %s29, %s30
    %p34 = pneg %p28
    %p35 = scmp.eq.s32.totalorder %s19, 1
    %p36 = por %p34, %p35
    %p37 = scmp.ne.s32.totalorder %s29, %s32
    %p38 = scmp.eq.s32.totalorder %s19, 0
    %p39 = por %p37, %p38
    %p40 = scmp.ne.s32.totalorder %s29, %s32
    %p41 = scmp.eq.s32.totalorder %s24, 1
    %p42 = por %p40, %p41
    %p43 = scmp.ne.s32.totalorder %s32, %s33
    %p44 = scmp.eq.s32.totalorder %s24, 0
    %p45 = por %p43, %p44
    %p46 = scmp.ne.s32.totalorder %s32, %s33
    %p47 = scmp.eq.s32.totalorder %s25, 1
    %p48 = por %p46, %p47
    %p50 = scmp.ne.s32.totalorder %s33, %s49
    %p51 = scmp.eq.s32.totalorder %s25, 0
    %p52 = por %p50, %p51
    %s54 = sadd.s32 %s53, 1
    %p57 = scmp.eq.s32.totalorder %s19, 1
    %p58 = scmp.ne.s32.totalorder %s53, %s55
    %p59 = scmp.eq.s32.totalorder %s19, 0
    %p60 = por %p58, %p59
    %p61 = scmp.ne.s32.totalorder %s53, %s55
    %p62 = scmp.eq.s32.totalorder %s24, 1
    %p63 = por %p61, %p62
    %p64 = scmp.ne.s32.totalorder %s55, %s56
    %p65 = scmp.eq.s32.totalorder %s24, 0
    %p66 = por %p64, %p65
    %p67 = scmp.ne.s32.totalorder %s55, %s56
    %p68 = scmp.eq.s32.totalorder %s25, 1
    %p69 = por %p67, %p68
    %p71 = scmp.ne.s32.totalorder %s56, %s70
    %p72 = scmp.eq.s32.totalorder %s25, 0
    %p73 = por %p71, %p72
    %s75 = sadd.s32 %s74, 1
    %p78 = scmp.eq.s32.totalorder %s19, 1
    %p79 = scmp.ne.s32.totalorder %s74, %s76
    %p80 = scmp.eq.s32.totalorder %s19, 0
    %p81 = por %p79, %p80
    %p82 = scmp.ne.s32.totalorder %s74, %s76
    %p83 = scmp.eq.s32.totalorder %s24, 1
    %p84 = por %p82, %p83
    %p85 = scmp.ne.s32.totalorder %s76, %s77
    %p86 = scmp.eq.s32.totalorder %s24, 0
    %p87 = por %p85, %p86
    %p88 = scmp.ne.s32.totalorder %s76, %s77
    %p89 = scmp.eq.s32.totalorder %s25, 1
    %p90 = por %p88, %p89
    %p92 = scmp.ne.s32.totalorder %s77, %s91
    %p93 = scmp.eq.s32.totalorder %s25, 0
    %p94 = por %p92, %p93
    %s96 = sadd.s32 %s95, 1
    %p99 = scmp.eq.s32.totalorder %s19, 1
    %p100 = scmp.ne.s32.totalorder %s95, %s97
    %p101 = scmp.eq.s32.totalorder %s19, 0
    %p102 = por %p100, %p101
    %p103 = scmp.ne.s32.totalorder %s95, %s97
    %p104 = scmp.eq.s32.totalorder %s24, 1
    %p105 = por %p103, %p104
    %p106 = scmp.ne.s32.totalorder %s97, %s98
    %p107 = scmp.eq.s32.totalorder %s24, 0
    %p108 = por %p106, %p107
    %p109 = scmp.ne.s32.totalorder %s97, %s98
    %p110 = scmp.eq.s32.totalorder %s25, 1
    %p111 = por %p109, %p110
    %p113 = scmp.ne.s32.totalorder %s98, %s112
    %p114 = scmp.eq.s32.totalorder %s25, 0
    %p115 = por %p113, %p114
    %s117 = sadd.s32 %s116, 1
    %p120 = scmp.eq.s32.totalorder %s19, 1
    %p121 = scmp.ne.s32.totalorder %s116, %s118
    %p122 = scmp.eq.s32.totalorder %s19, 0
    %p123 = por %p121, %p122
    %p124 = scmp.ne.s32.totalorder %s116, %s118
    %p125 = scmp.eq.s32.totalorder %s24, 1
    %p126 = por %p124, %p125
    %p127 = scmp.ne.s32.totalorder %s118, %s119
    %p128 = scmp.eq.s32.totalorder %s24, 0
    %p129 = por %p127, %p128
    %p130 = scmp.ne.s32.totalorder %s118, %s119
    %p131 = scmp.eq.s32.totalorder %s25, 1
    %p132 = por %p130, %p131
    %p134 = scmp.ne.s32.totalorder %s119, %s133
    %p135 = scmp.eq.s32.totalorder %s25, 0
    %p136 = por %p134, %p135
    %s138 = sadd.s32 %s137, 1
    %p141 = scmp.eq.s32.totalorder %s19, 1
    %p142 = scmp.ne.s32.totalorder %s137, %s139
    %p143 = scmp.eq.s32.totalorder %s19, 0
    %p144 = por %p142, %p143
    %p145 = scmp.ne.s32.totalorder %s137, %s139
    %p146 = scmp.eq.s32.totalorder %s24, 1
    %p147 = por %p145, %p146
    %p148 = scmp.ne.s32.totalorder %s139, %s140
    %p149 = scmp.eq.s32.totalorder %s24, 0
    %p150 = por %p148, %p149
    %p151 = scmp.ne.s32.totalorder %s139, %s140
    %p152 = scmp.eq.s32.totalorder %s25, 1
    %p153 = por %p151, %p152
    %p155 = scmp.ne.s32.totalorder %s140, %s154
    %p156 = scmp.eq.s32.totalorder %s25, 0
    %p157 = por %p155, %p156
    %s159 = sadd.s32 %s158, 1
    %p162 = scmp.eq.s32.totalorder %s19, 1
    %p163 = scmp.ne.s32.totalorder %s158, %s160
    %p164 = scmp.eq.s32.totalorder %s19, 0
    %p165 = por %p163, %p164
    %p166 = scmp.ne.s32.totalorder %s158, %s160
    %p167 = scmp.eq.s32.totalorder %s24, 1
    %p168 = por %p166, %p167
    %p169 = scmp.ne.s32.totalorder %s160, %s161
    %p170 = scmp.eq.s32.totalorder %s24, 0
    %p171 = por %p169, %p170
    %p172 = scmp.ne.s32.totalorder %s160, %s161
    %p173 = scmp.eq.s32.totalorder %s25, 1
    %p174 = por %p172, %p173
    %p176 = scmp.ne.s32.totalorder %s161, %s175
    %p177 = scmp.eq.s32.totalorder %s25, 0
    %p178 = por %p176, %p177
    %s180 = sadd.s32 %s179, 1
    %p183 = scmp.eq.s32.totalorder %s19, 1
    %p184 = scmp.ne.s32.totalorder %s179, %s181
    %p185 = scmp.eq.s32.totalorder %s19, 0
    %p186 = por %p184, %p185
    %p187 = scmp.ne.s32.totalorder %s179, %s181
    %p188 = scmp.eq.s32.totalorder %s24, 1
    %p189 = por %p187, %p188
    %p190 = scmp.ne.s32.totalorder %s181, %s182
    %p191 = scmp.eq.s32.totalorder %s24, 0
    %p192 = por %p190, %p191
    %p193 = scmp.ne.s32.totalorder %s181, %s182
    %p194 = scmp.eq.s32.totalorder %s25, 1
    %p195 = por %p193, %p194
    %p197 = scmp.ne.s32.totalorder %s182, %s196
    %p198 = scmp.eq.s32.totalorder %s25, 0
    %p199 = por %p197, %p198
    %s201 = sadd.s32 %s200, 1
    %p204 = scmp.eq.s32.totalorder %s19, 1
    %p205 = scmp.ne.s32.totalorder %s200, %s202
    %p206 = scmp.eq.s32.totalorder %s19, 0
    %p207 = por %p205, %p206
    %p208 = scmp.ne.s32.totalorder %s200, %s202
    %p209 = scmp.eq.s32.totalorder %s24, 1
    %p210 = por %p208, %p209
    %p211 = scmp.ne.s32.totalorder %s202, %s203
    %p212 = scmp.eq.s32.totalorder %s24, 0
    %p213 = por %p211, %p212
    %p214 = scmp.ne.s32.totalorder %s202, %s203
    %p215 = scmp.eq.s32.totalorder %s25, 1
    %p216 = por %p214, %p215
    %p218 = scmp.ne.s32.totalorder %s203, %s217
    %p219 = scmp.eq.s32.totalorder %s25, 0
    %p220 = por %p218, %p219
    %s222 = sadd.s32 %s221, 1
    %p225 = scmp.eq.s32.totalorder %s19, 1
    %p226 = scmp.ne.s32.totalorder %s221, %s223
    %p227 = scmp.eq.s32.totalorder %s19, 0
    %p228 = por %p226, %p227
    %p229 = scmp.ne.s32.totalorder %s221, %s223
    %p230 = scmp.eq.s32.totalorder %s24, 1
    %p231 = por %p229, %p230
    %p232 = scmp.ne.s32.totalorder %s223, %s224
    %p233 = scmp.eq.s32.totalorder %s24, 0
    %p234 = por %p232, %p233
    %p235 = scmp.ne.s32.totalorder %s223, %s224
    %p236 = scmp.eq.s32.totalorder %s25, 1
    %p237 = por %p235, %p236
    %p239 = scmp.ne.s32.totalorder %s224, %s238
    %p240 = scmp.eq.s32.totalorder %s25, 0
    %p241 = por %p239, %p240
    %s243 = sadd.s32 %s242, 1
    %p246 = scmp.eq.s32.totalorder %s19, 1
    %p247 = scmp.ne.s32.totalorder %s242, %s244
    %p248 = scmp.eq.s32.totalorder %s19, 0
    %p249 = por %p247, %p248
    %p250 = scmp.ne.s32.totalorder %s242, %s244
    %p251 = scmp.eq.s32.totalorder %s24, 1
    %p252 = por %p250, %p251
    %p253 = scmp.ne.s32.totalorder %s244, %s245
    %p254 = scmp.eq.s32.totalorder %s24, 0
    %p255 = por %p253, %p254
    %p256 = scmp.ne.s32.totalorder %s244, %s245
    %p257 = scmp.eq.s32.totalorder %s25, 1
    %p258 = por %p256, %p257
    %p260 = scmp.ne.s32.totalorder %s245, %s259
    %p261 = scmp.eq.s32.totalorder %s25, 0
    %p262 = por %p260, %p261
    %s264 = sadd.s32 %s263, 1
    %p267 = scmp.eq.s32.totalorder %s19, 1
    %p268 = scmp.ne.s32.totalorder %s263, %s265
    %p269 = scmp.eq.s32.totalorder %s19, 0
    %p270 = por %p268, %p269
    %p271 = scmp.ne.s32.totalorder %s263, %s265
    %p272 = scmp.eq.s32.totalorder %s24, 1
    %p273 = por %p271, %p272
    %p274 = scmp.ne.s32.totalorder %s265, %s266
    %p275 = scmp.eq.s32.totalorder %s24, 0
    %p276 = por %p274, %p275
    %p277 = scmp.ne.s32.totalorder %s265, %s266
    %p278 = scmp.eq.s32.totalorder %s25, 1
    %p279 = por %p277, %p278
    %p281 = scmp.ne.s32.totalorder %s266, %s280
    %p282 = scmp.eq.s32.totalorder %s25, 0
    %p283 = por %p281, %p282
    %s285 = sadd.s32 %s284, 1
    %p288 = scmp.eq.s32.totalorder %s19, 1
    %p289 = scmp.ne.s32.totalorder %s284, %s286
    %p290 = scmp.eq.s32.totalorder %s19, 0
    %p291 = por %p289, %p290
    %p292 = scmp.ne.s32.totalorder %s284, %s286
    %p293 = scmp.eq.s32.totalorder %s24, 1
    %p294 = por %p292, %p293
    %p295 = scmp.ne.s32.totalorder %s286, %s287
    %p296 = scmp.eq.s32.totalorder %s24, 0
    %p297 = por %p295, %p296
    %p298 = scmp.ne.s32.totalorder %s286, %s287
    %p299 = scmp.eq.s32.totalorder %s25, 1
    %p300 = por %p298, %p299
    %p302 = scmp.ne.s32.totalorder %s287, %s301
    %p303 = scmp.eq.s32.totalorder %s25, 0
    %p304 = por %p302, %p303
    %s305 = ssub.s32 %s19, %s26
    %p306 = scmp.eq.s32.totalorder %s305, 0
    %s308 = sadd.s32 %s307, 1
    %s309 = scalar_select %p306, %s307, %s308
    %p312 = pneg %p306
    %p313 = scmp.eq.s32.totalorder %s19, 1
    %p314 = por %p312, %p313
    %p315 = scmp.ne.s32.totalorder %s307, %s310
    %p316 = scmp.eq.s32.totalorder %s19, 0
    %p317 = por %p315, %p316
    %p318 = scmp.ne.s32.totalorder %s307, %s310
    %p319 = scmp.eq.s32.totalorder %s24, 1
    %p320 = por %p318, %p319
    %p321 = scmp.ne.s32.totalorder %s310, %s311
    %p322 = scmp.eq.s32.totalorder %s24, 0
    %p323 = por %p321, %p322
    %p324 = scmp.ne.s32.totalorder %s310, %s311
    %p325 = scmp.eq.s32.totalorder %s25, 1
    %p326 = por %p324, %p325
    %p328 = scmp.ne.s32.totalorder %s311, %s327
    %p329 = scmp.eq.s32.totalorder %s25, 0
    %p330 = por %p328, %p329
    %p331 = scmp.le.s32.totalorder 1, %s19
    %p332 = scmp.lt.s32.totalorder %s19, 3
    %p333 = pnand %p331, %p332
    %p334 = pneg %p333
    // Predicated region
    $region9: #{vit_forward.5} parent=5 // pred_check
      _
    $region10: #{vit_forward.5} parent=5 // pred_check_branch
      %336 = sbr.rel (%p333) target = $region12
    $region11: #{vit_forward.5} parent=5 // pred_region
      %s337 = ssub.s32 %s19, 1
      // Predicated region
      $region13: #{vit_forward.5} parent=11 // pred_check
        %p338 = pneg %p66
      $region14: #{vit_forward.5} parent=11 // pred_check_branch
        %340 = sbr.rel (%p338) target = $region16
      $region15: #{vit_forward.5} parent=11 // pred_region
        _
      $region16: #{vit_forward.5} parent=11 // pred_fallthru
        _
      // Predicated region
      $region17: #{vit_forward.5} parent=11 // pred_check
        %p341 = pneg %p87
      $region18: #{vit_forward.5} parent=11 // pred_check_branch
        %343 = sbr.rel (%p341) target = $region20
      $region19: #{vit_forward.5} parent=11 // pred_region
        _
      $region20: #{vit_forward.5} parent=11 // pred_fallthru
        _
      // Predicated region
      $region21: #{vit_forward.5} parent=11 // pred_check
        %p344 = pneg %p108
      $region22: #{vit_forward.5} parent=11 // pred_check_branch
        %346 = sbr.rel (%p344) target = $region24
      $region23: #{vit_forward.5} parent=11 // pred_region
        _
      $region24: #{vit_forward.5} parent=11 // pred_fallthru
        _
      // Predicated region
      $region25: #{vit_forward.5} parent=11 // pred_check
        %p347 = pneg %p129
      $region26: #{vit_forward.5} parent=11 // pred_check_branch
        %349 = sbr.rel (%p347) target = $region28
      $region27: #{vit_forward.5} parent=11 // pred_region
        _
      $region28: #{vit_forward.5} parent=11 // pred_fallthru
        _
      // Predicated region
      $region29: #{vit_forward.5} parent=11 // pred_check
        %p350 = pneg %p150
      $region30: #{vit_forward.5} parent=11 // pred_check_branch
        %352 = sbr.rel (%p350) target = $region32
      $region31: #{vit_forward.5} parent=11 // pred_region
        _
      $region32: #{vit_forward.5} parent=11 // pred_fallthru
        _
      // Predicated region
      $region33: #{vit_forward.5} parent=11 // pred_check
        %p353 = pneg %p171
      $region34: #{vit_forward.5} parent=11 // pred_check_branch
        %355 = sbr.rel (%p353) target = $region36
      $region35: #{vit_forward.5} parent=11 // pred_region
        _
      $region36: #{vit_forward.5} parent=11 // pred_fallthru
        _
      // Predicated region
      $region37: #{vit_forward.5} parent=11 // pred_check
        %p356 = pneg %p192
      $region38: #{vit_forward.5} parent=11 // pred_check_branch
        %358 = sbr.rel (%p356) target = $region40
      $region39: #{vit_forward.5} parent=11 // pred_region
        _
      $region40: #{vit_forward.5} parent=11 // pred_fallthru
        _
      // Predicated region
      $region41: #{vit_forward.5} parent=11 // pred_check
        %p359 = pneg %p213
      $region42: #{vit_forward.5} parent=11 // pred_check_branch
        %361 = sbr.rel (%p359) target = $region44
      $region43: #{vit_forward.5} parent=11 // pred_region
        _
      $region44: #{vit_forward.5} parent=11 // pred_fallthru
        _
      // Predicated region
      $region45: #{vit_forward.5} parent=11 // pred_check
        %p362 = pneg %p234
      $region46: #{vit_forward.5} parent=11 // pred_check_branch
        %364 = sbr.rel (%p362) target = $region48
      $region47: #{vit_forward.5} parent=11 // pred_region
        _
      $region48: #{vit_forward.5} parent=11 // pred_fallthru
        _
      // Predicated region
      $region49: #{vit_forward.5} parent=11 // pred_check
        %p365 = pneg %p255
      $region50: #{vit_forward.5} parent=11 // pred_check_branch
        %367 = sbr.rel (%p365) target = $region52
      $region51: #{vit_forward.5} parent=11 // pred_region
        _
      $region52: #{vit_forward.5} parent=11 // pred_fallthru
        _
      // Predicated region
      $region53: #{vit_forward.5} parent=11 // pred_check
        %p368 = pneg %p276
      $region54: #{vit_forward.5} parent=11 // pred_check_branch
        %370 = sbr.rel (%p368) target = $region56
      $region55: #{vit_forward.5} parent=11 // pred_region
        _
      $region56: #{vit_forward.5} parent=11 // pred_fallthru
        _
      // Predicated region
      $region57: #{vit_forward.5} parent=11 // pred_check
        %p371 = pneg %p297
      $region58: #{vit_forward.5} parent=11 // pred_check_branch
        %373 = sbr.rel (%p371) target = $region60
      $region59: #{vit_forward.5} parent=11 // pred_region
        _
      $region60: #{vit_forward.5} parent=11 // pred_fallthru
        _
    $region12: #{vit_forward.5} parent=5 // pred_fallthru
      _
    %p374 = scmp.lt.s32.totalorder %s19, 2
    // Predicated region
    $region61: #{vit_forward.5} parent=5 // pred_check
      %p375 = pneg %p374
    $region62: #{vit_forward.5} parent=5 // pred_check_branch
      %377 = sbr.rel (%p375) target = $region64
    $region63: #{vit_forward.5} parent=5 // pred_region
      // Predicated region
      $region65: #{vit_forward.5} parent=63 // pred_check
        %p378 = pneg %p39
      $region66: #{vit_forward.5} parent=63 // pred_check_branch
        %380 = sbr.rel (%p378) target = $region68
      $region67: #{vit_forward.5} parent=63 // pred_region
        %p381 = scmp.lt.s32.totalorder %s19, 1
        %s382 = scalar_select %p381, %s19, 1
        %s383 = smul.addr %s382, 8
        %s384 = scalar_lea.vmem %s0, %s383
      $region68: #{vit_forward.5} parent=63 // pred_fallthru
        _
    $region64: #{vit_forward.5} parent=5 // pred_fallthru
      _
    %p385 = scmp.le.s32.totalorder 1, %s19
    %p386 = scmp.lt.s32.totalorder %s19, 3
    %p387 = pnand %p385, %p386
    %p388 = pneg %p387
    // Predicated region
    $region69: #{vit_forward.5} parent=5 // pred_check
      _
    $region70: #{vit_forward.5} parent=5 // pred_check_branch
      %390 = sbr.rel (%p387) target = $region72
    $region71: #{vit_forward.5} parent=5 // pred_region
      %s391 = ssub.s32 %s19, 1
      %p392 = scmp.lt.s32.totalorder %s24, 1
      %s393 = scalar_select %p392, %s24, 1
      %s394 = smul.addr %s393, 8
      %s395 = scalar_lea.vmem %s0, %s394
      %p396 = pneg %p45
      %p397 = pneg %p42
      %p398 = pneg %p66
      %p399 = pneg %p63
      %p400 = pneg %p87
      %p401 = pneg %p84
      %p402 = pneg %p108
      %p403 = pneg %p105
      %p404 = pneg %p129
      %p405 = pneg %p126
      %p406 = pneg %p150
      %p407 = pneg %p147
      %p408 = pneg %p171
      %p409 = pneg %p168
      %p410 = pneg %p192
      %p411 = pneg %p189
      %p412 = pneg %p213
      %p413 = pneg %p210
      %p414 = pneg %p234
      %p415 = pneg %p231
      %p416 = pneg %p255
      %p417 = pneg %p252
      %p418 = pneg %p276
      %p419 = pneg %p273
      %p420 = pneg %p297
      %p421 = pneg %p294
      %p422 = pneg %p323
      %p423 = pneg %p320
      %p424 = scmp.lt.s32.totalorder %s24, 1
      %s425 = scalar_select %p424, %s24, 1
      %s426 = smul.addr %s425, 8
      %s427 = scalar_lea.vmem %s13, %s426
      %p428 = scmp.lt.s32.totalorder %s24, 1
      %s429 = scalar_select %p428, %s24, 1
      %s430 = smul.addr %s429, 8
      %s431 = scalar_lea.vmem %s0, %s430
      %p432 = scmp.lt.s32.totalorder %s24, 1
      %s433 = scalar_select %p432, %s24, 1
      %s434 = smul.addr %s433, 8
      %s435 = scalar_lea.vmem %s13, %s434
      %v437 = vld [vmem:[%s431] sm:$0x1f]
      %v438 = vld [vmem:[%s1] sm:$0x1]
      %v439 = vld [vmem:[%s2] sm:$0x1]
      %vm440 = vcmask 1044480
      %v441 = vsel %vm440, %v437, 0.0
      %442 = vadd.xlane.f32.xlu0 %v441
      %v443 = vpop.xlane.xlu0 %442
      %v444 = vrcp.pop 128.0
      %v445 = vmul.f32 %v443, %v444
      %v446 = vmul.f32 %v437, %v437
      %v447 = vsel %vm440, %v446, 0.0
      %448 = vadd.xlane.f32.xlu0 %v447
      %v449 = vpop.xlane.xlu0 %448
      %v450 = vmul.f32 %v449, %v444
      %v451 = vmul.f32 %v445, %v445
      %v452 = vsub.f32 %v450, %v451
      %v453 = vadd.f32 %v452, 1e-06
      %v454 = vrsqrt.pop %v453
      %v455 = vsub.f32 %v437, %v445
      %v457 = vlaneseq
      %v458 = vshrl.u32 %v457, 7
      %v459 = vsub.s32 0, %v458
      %v460 = vrot.slane %v438, %v459
      %v462 = vmul.f32 %v454, %v460
      %v463 = vmul.f32 %v455, %v462
      %v465 = vlaneseq
      %v466 = vshrl.u32 %v465, 7
      %v467 = vsub.s32 0, %v466
      %v468 = vrot.slane %v439, %v467
      %v470 = vadd.f32 %v463, %v468
      %v471 = vpack.c.bf16 %v470, %v470
      %v472 = vld [vmem:[%s3] sm:$0xff]
      %v473 = vld [vmem:[%s3 + $0x8] sm:$0xf]
      %v474 = vld [vmem:[%s3 + $0xc] sm:$0xff]
      %v475 = vld [vmem:[%s3 + $0x14] sm:$0xf]
      %v476 = vld [vmem:[%s3 + $0x18] sm:$0xff]
      %v477 = vld [vmem:[%s3 + $0x20] sm:$0xf]
      %v478 = vld [vmem:[%s3 + $0x24] sm:$0xff]
      %v479 = vld [vmem:[%s3 + $0x2c] sm:$0xf]
      %v480 = vld [vmem:[%s3 + $0x30] sm:$0xff]
      %v481 = vld [vmem:[%s3 + $0x38] sm:$0xf]
      %v482 = vld [vmem:[%s3 + $0x3c] sm:$0xff]
      %v483 = vld [vmem:[%s3 + $0x44] sm:$0xf]
      %v484 = vld [vmem:[%s3 + $0x48] sm:$0xff]
      %v485 = vld [vmem:[%s3 + $0x50] sm:$0xf]
      %v486 = vld [vmem:[%s3 + $0x54] sm:$0xff]
      %v487 = vld [vmem:[%s3 + $0x5c] sm:$0xf]
      %v488 = vld [vmem:[%s3 + $0x60] sm:$0xff]
      %v489 = vld [vmem:[%s3 + $0x68] sm:$0xf]
      %v490 = vld [vmem:[%s3 + $0x6c] sm:$0xff]
      %v491 = vld [vmem:[%s3 + $0x74] sm:$0xf]
      %v492 = vld [vmem:[%s3 + $0x78] sm:$0xff]
      %v493 = vld [vmem:[%s3 + $0x80] sm:$0xf]
      %v494 = vld [vmem:[%s3 + $0x84] sm:$0xff]
      %v495 = vld [vmem:[%s3 + $0x8c] sm:$0xf]
      %v496 = vld [vmem:[%s3 + $0x90] sm:$0xff]
      %v497 = vld [vmem:[%s3 + $0x98] sm:$0xf]
      %v498 = vld [vmem:[%s3 + $0x9c] sm:$0xff]
      %v499 = vld [vmem:[%s3 + $0xa4] sm:$0xf]
      %v500 = vld [vmem:[%s3 + $0xa8] sm:$0xff]
      %v501 = vld [vmem:[%s3 + $0xb0] sm:$0xf]
      %v502 = vld [vmem:[%s3 + $0xb4] sm:$0xff]
      %v503 = vld [vmem:[%s3 + $0xbc] sm:$0xf]
      %v504 = vld [vmem:[%s4] sm:$0x7]
      %v506 = vlaneseq
      %v507 = vshrl.u32 %v506, 7
      %v508 = vsub.s32 0, %v507
      %v509 = vrot.slane %v504, %v508
      %v510 = vlaneseq
      %v511 = vshrl.u32 %v510, 7
      %v512 = vsub.s32 1, %v511
      %v513 = vrot.slane %v504, %v512
      %v514 = vlaneseq
      %v515 = vshrl.u32 %v514, 7
      %v516 = vsub.s32 2, %v515
      %v517 = vrot.slane %v504, %v516
      %v553 = vunpack.c.l.b16 %v472
      %v554 = vunpack.c.h.b16 %v472
      %v555 = vunpack.c.l.b16 %v473
      %v556 = vunpack.c.l.b16 %v474
      %v557 = vunpack.c.h.b16 %v474
      %v558 = vunpack.c.l.b16 %v475
      %v559 = vunpack.c.l.b16 %v476
      %v560 = vunpack.c.h.b16 %v476
      %v561 = vunpack.c.l.b16 %v477
      %v562 = vunpack.c.l.b16 %v478
      %v563 = vunpack.c.h.b16 %v478
      %v564 = vunpack.c.l.b16 %v479
      %v565 = vunpack.c.l.b16 %v480
      %v566 = vunpack.c.h.b16 %v480
      %v567 = vunpack.c.l.b16 %v481
      %v568 = vunpack.c.l.b16 %v482
      %v569 = vunpack.c.h.b16 %v482
      %v570 = vunpack.c.l.b16 %v483
      %v571 = vunpack.c.l.b16 %v484
      %v572 = vunpack.c.h.b16 %v484
      %v573 = vunpack.c.l.b16 %v485
      %v574 = vunpack.c.l.b16 %v486
      %v575 = vunpack.c.h.b16 %v486
      %v576 = vunpack.c.l.b16 %v487
      %v577 = vunpack.c.l.b16 %v488
      %v578 = vunpack.c.h.b16 %v488
      %v579 = vunpack.c.l.b16 %v489
      %v580 = vunpack.c.l.b16 %v490
      %v581 = vunpack.c.h.b16 %v490
      %v582 = vunpack.c.l.b16 %v491
      %v583 = vunpack.c.l.b16 %v492
      %v584 = vunpack.c.h.b16 %v492
      %v585 = vunpack.c.l.b16 %v493
      %v586 = vunpack.c.l.b16 %v494
      %v587 = vunpack.c.h.b16 %v494
      %v588 = vunpack.c.l.b16 %v495
      %v589 = vunpack.c.l.b16 %v496
      %v590 = vunpack.c.h.b16 %v496
      %v591 = vunpack.c.l.b16 %v497
      %v592 = vunpack.c.l.b16 %v498
      %v593 = vunpack.c.h.b16 %v498
      %v594 = vunpack.c.l.b16 %v499
      %v595 = vunpack.c.l.b16 %v500
      %v596 = vunpack.c.h.b16 %v500
      %v597 = vunpack.c.l.b16 %v501
      %v598 = vunpack.c.l.b16 %v502
      %v599 = vunpack.c.h.b16 %v502
      %v600 = vunpack.c.l.b16 %v503
      %v601 = vpack.c.b16 %v556, %v553
      %v602 = vpack.c.b16 %v557, %v554
      %v603 = vpack.c.b16 %v558, %v555
      %v604 = vpack.c.b16 %v562, %v559
      %v605 = vpack.c.b16 %v563, %v560
      %v606 = vpack.c.b16 %v564, %v561
      %v607 = vpack.c.b16 %v568, %v565
      %v608 = vpack.c.b16 %v569, %v566
      %v609 = vpack.c.b16 %v570, %v567
      %v610 = vpack.c.b16 %v574, %v571
      %v611 = vpack.c.b16 %v575, %v572
      %v612 = vpack.c.b16 %v576, %v573
      %v613 = vpack.c.b16 %v580, %v577
      %v614 = vpack.c.b16 %v581, %v578
      %v615 = vpack.c.b16 %v582, %v579
      %v616 = vpack.c.b16 %v586, %v583
      %v617 = vpack.c.b16 %v587, %v584
      %v618 = vpack.c.b16 %v588, %v585
      %v619 = vpack.c.b16 %v592, %v589
      %v620 = vpack.c.b16 %v593, %v590
      %v621 = vpack.c.b16 %v594, %v591
      %v622 = vpack.c.b16 %v598, %v595
      %v623 = vpack.c.b16 %v599, %v596
      %v624 = vpack.c.b16 %v600, %v597
      %649 = vmatprep.subr.bf16.mxu0 %v602
      %650 = vmatpush1.bf16.msra.mxu0 %v601
      %651 = vmatprep.subr.bf16.mxu0 %v605
      %652 = vmatpush1.bf16.msra.mxu0 %v604
      %653 = vmatprep.subr.bf16.mxu0 %v608
      %654 = vmatpush1.bf16.msra.mxu0 %v607
      %655 = vmatprep.subr.bf16.mxu0 %v611
      %656 = vmatpush1.bf16.msra.mxu0 %v610
      %657 = vmatprep.subr.bf16.mxu0 %v614
      %658 = vmatpush1.bf16.msra.mxu0 %v613
      %659 = vmatprep.subr.bf16.mxu0 %v617
      %660 = vmatpush1.bf16.msra.mxu0 %v616
      %661 = vmatprep.subr.bf16.mxu0 %v620
      %662 = vmatpush1.bf16.msra.mxu0 %v619
      %663 = vmatprep.subr.bf16.mxu0 %v623
      %664 = vmatpush1.bf16.msra.mxu0 %v622
      %665 = vmatprep.subr.bf16.mxu0 0
      %666 = vmatpush1.bf16.msra.mxu0 0
      %667 = vmatprep.subr.bf16.mxu0 0
      %668 = vmatpush1.bf16.msra.mxu0 0
      %669 = vmatprep.subr.bf16.mxu0 0
      %670 = vmatpush1.bf16.msra.mxu0 0
      %671 = vmatprep.subr.bf16.mxu0 0
      %672 = vmatpush1.bf16.msra.mxu0 0
      %673 = vmatprep.subr.bf16.mxu0 0
      %674 = vmatpush1.bf16.msra.mxu0 0
      %675 = vmatprep.subr.bf16.mxu0 0
      %676 = vmatpush1.bf16.msra.mxu0 0
      %677 = vmatprep.subr.bf16.mxu0 0
      %678 = vmatpush1.bf16.msra.mxu0 0
      %679 = vmatprep.subr.bf16.mxu0 0
      %680 = vmatpush1.bf16.msra.mxu0 0
      %681 = vmatprep.mubr.bf16.mxu0 0
      %682 = vmatmul.mubr.bf16.gmra.mrb[0].mxu0 %v471
      %v683 = vpop.f32.mrb[0].mxu0
      %v684 = vadd.f32 %v509, %v683
      %v685 = vpop.f32.mrb[0].mxu0
      %v686 = vadd.f32 %v513, %v685
      %v687 = vpop.f32.mrb[0].mxu0
      %v688 = vpop.f32.mrb[0].mxu0
      %689 = vdwg.mxu0
      %690 = vmatprep.subr.bf16.mxu0 0
      %691 = vmatpush1.bf16.msra.mxu0 %v603
      %692 = vmatprep.subr.bf16.mxu0 0
      %693 = vmatpush1.bf16.msra.mxu0 %v606
      %694 = vmatprep.subr.bf16.mxu0 0
      %695 = vmatpush1.bf16.msra.mxu0 %v609
      %696 = vmatprep.subr.bf16.mxu0 0
      %697 = vmatpush1.bf16.msra.mxu0 %v612
      %698 = vmatprep.subr.bf16.mxu0 0
      %699 = vmatpush1.bf16.msra.mxu0 %v615
      %700 = vmatprep.subr.bf16.mxu0 0
      %701 = vmatpush1.bf16.msra.mxu0 %v618
      %702 = vmatprep.subr.bf16.mxu0 0
      %703 = vmatpush1.bf16.msra.mxu0 %v621
      %704 = vmatprep.subr.bf16.mxu0 0
      %705 = vmatpush1.bf16.msra.mxu0 %v624
      %706 = vmatprep.subr.bf16.mxu0 0
      %707 = vmatpush1.bf16.msra.mxu0 0
      %708 = vmatprep.subr.bf16.mxu0 0
      %709 = vmatpush1.bf16.msra.mxu0 0
      %710 = vmatprep.subr.bf16.mxu0 0
      %711 = vmatpush1.bf16.msra.mxu0 0
      %712 = vmatprep.subr.bf16.mxu0 0
      %713 = vmatpush1.bf16.msra.mxu0 0
      %714 = vmatprep.subr.bf16.mxu0 0
      %715 = vmatpush1.bf16.msra.mxu0 0
      %716 = vmatprep.subr.bf16.mxu0 0
      %717 = vmatpush1.bf16.msra.mxu0 0
      %718 = vmatprep.subr.bf16.mxu0 0
      %719 = vmatpush1.bf16.msra.mxu0 0
      %720 = vmatprep.subr.bf16.mxu0 0
      %721 = vmatpush1.bf16.msra.mxu0 0
      %722 = vmatprep.mubr.bf16.mxu0 0
      %723 = vmatmul.mubr.bf16.gmra.mrb[0].mxu0 %v471
      %v724 = vpop.f32.mrb[0].mxu0
      %v725 = vadd.f32 %v517, %v724
      %v726 = vpop.f32.mrb[0].mxu0
      %v727 = vpop.f32.mrb[0].mxu0
      %v728 = vpop.f32.mrb[0].mxu0
      %729 = vdwg.mxu0
      %v730 = vmul.f32 %v684, 0.17677669
      %v731 = vpack.c.bf16 %v730, %v730
      %v732 = vpack.c.bf16 %v686, %v686
      %v733 = vpack.c.bf16 %v725, %v725
      %vm734 = vcmask 261120
      %v736 = vsel %vm734, %v731, 0
      %v739 = vsel %vm734, %v732, 0
      %741 = vmatprep.subr.bf16.mxu0 0
      %742 = vmatpush1.bf16.xpose.msra.mxu0 %v739
      %743 = vmatprep.subr.bf16.mxu0 0
      %744 = vmatpush1.bf16.xpose.msra.mxu0 0
      %745 = vmatprep.subr.bf16.mxu0 0
      %746 = vmatpush1.bf16.xpose.msra.mxu0 0
      %747 = vmatprep.subr.bf16.mxu0 0
      %748 = vmatpush1.bf16.xpose.msra.mxu0 0
      %749 = vmatprep.subr.bf16.mxu0 0
      %750 = vmatpush1.bf16.xpose.msra.mxu0 0
      %751 = vmatprep.subr.bf16.mxu0 0
      %752 = vmatpush1.bf16.xpose.msra.mxu0 0
      %753 = vmatprep.subr.bf16.mxu0 0
      %754 = vmatpush1.bf16.xpose.msra.mxu0 0
      %755 = vmatprep.subr.bf16.mxu0 0
      %756 = vmatpush1.bf16.xpose.msra.mxu0 0
      %757 = vmatprep.subr.bf16.mxu0 0
      %758 = vmatpush1.bf16.xpose.msra.mxu0 0
      %759 = vmatprep.subr.bf16.mxu0 0
      %760 = vmatpush1.bf16.xpose.msra.mxu0 0
      %761 = vmatprep.subr.bf16.mxu0 0
      %762 = vmatpush1.bf16.xpose.msra.mxu0 0
      %763 = vmatprep.subr.bf16.mxu0 0
      %764 = vmatpush1.bf16.xpose.msra.mxu0 0
      %765 = vmatprep.subr.bf16.mxu0 0
      %766 = vmatpush1.bf16.xpose.msra.mxu0 0
      %767 = vmatprep.subr.bf16.mxu0 0
      %768 = vmatpush1.bf16.xpose.msra.mxu0 0
      %769 = vmatprep.subr.bf16.mxu0 0
      %770 = vmatpush1.bf16.xpose.msra.mxu0 0
      %771 = vmatprep.subr.bf16.mxu0 0
      %772 = vmatpush1.bf16.xpose.msra.mxu0 0
      %773 = vmatprep.mubr.bf16.mxu0 0
      %774 = vmatmul.mubr.bf16.gmra.mrb[0].mxu0 %v736
      %v775 = vpop.f32.mrb[0].mxu0
      %v776 = vadd.f32 0.0, %v775
      %v777 = vpop.f32.mrb[0].mxu0
      %v778 = vpop.f32.mrb[0].mxu0
      %v779 = vpop.f32.mrb[0].mxu0
      %780 = vdwg.mxu0
      %vm781 = vcmask 36864
      %v782 = vsel %vm781, %v776, -inf
      %783 = vmax.xlane.f32.xlu0 %v782
      %v784 = vpop.xlane.xlu0 %783
      %v785 = vsub.f32 %v776, %v784
      %v786 = vmul.f32 %v785, 1.442695
      %v787 = vpow.pop %v786
      %v788 = vsel %vm781, %v787, 0.0
      %789 = vadd.xlane.f32.xlu0 %v788
      %v790 = vpop.xlane.xlu0 %789
      %v791 = vrcp.pop %v790
      %v792 = vmul.f32 %v787, %v791
      %v793 = vpack.c.bf16 %v792, %v792
      %vm794 = vcmask 39936
      %v796 = vsel %vm794, %v793, 0
      %vm798 = vcmask 1041408
      %vm799 = vcmask 1042432
      %v800 = vsel %vm798, 4294967295, 65535
      %v801 = vsel %vm799, %v800, 0
      %v803 = vand.u32 %v733, %v801
      %805 = vmatprep.subr.bf16.mxu0 0
      %806 = vmatpush1.bf16.msra.mxu0 %v803
      %807 = vmatprep.subr.bf16.mxu0 0
      %808 = vmatpush1.bf16.msra.mxu0 0
      %809 = vmatprep.subr.bf16.mxu0 0
      %810 = vmatpush1.bf16.msra.mxu0 0
      %811 = vmatprep.subr.bf16.mxu0 0
      %812 = vmatpush1.bf16.msra.mxu0 0
      %813 = vmatprep.subr.bf16.mxu0 0
      %814 = vmatpush1.bf16.msra.mxu0 0
      %815 = vmatprep.subr.bf16.mxu0 0
      %816 = vmatpush1.bf16.msra.mxu0 0
      %817 = vmatprep.subr.bf16.mxu0 0
      %818 = vmatpush1.bf16.msra.mxu0 0
      %819 = vmatprep.subr.bf16.mxu0 0
      %820 = vmatpush1.bf16.msra.mxu0 0
      %821 = vmatprep.subr.bf16.mxu0 0
      %822 = vmatpush1.bf16.msra.mxu0 0
      %823 = vmatprep.subr.bf16.mxu0 0
      %824 = vmatpush1.bf16.msra.mxu0 0
      %825 = vmatprep.subr.bf16.mxu0 0
      %826 = vmatpush1.bf16.msra.mxu0 0
      %827 = vmatprep.subr.bf16.mxu0 0
      %828 = vmatpush1.bf16.msra.mxu0 0
      %829 = vmatprep.subr.bf16.mxu0 0
      %830 = vmatpush1.bf16.msra.mxu0 0
      %831 = vmatprep.subr.bf16.mxu0 0
      %832 = vmatpush1.bf16.msra.mxu0 0
      %833 = vmatprep.subr.bf16.mxu0 0
      %834 = vmatpush1.bf16.msra.mxu0 0
      %835 = vmatprep.subr.bf16.mxu0 0
      %836 = vmatpush1.bf16.msra.mxu0 0
      %837 = vmatprep.mubr.bf16.mxu0 0
      %838 = vmatmul.mubr.bf16.gmra.mrb[0].mxu0 %v796
      %v839 = vpop.f32.mrb[0].mxu0
      %v840 = vadd.f32 0.0, %v839
      %v841 = vpop.f32.mrb[0].mxu0
      %v842 = vpop.f32.mrb[0].mxu0
      %v843 = vpop.f32.mrb[0].mxu0
      %844 = vdwg.mxu0
      %846 = vrot.lane.b32.xlu0 %v731, 96
      %v847 = vpop.permute.xlu0 %846
      %849 = vrot.lane.b32.xlu0 %v732, 96
      %v850 = vpop.permute.xlu0 %849
      %v852 = vsel %vm734, %v847, 0
      %v855 = vsel %vm734, %v850, 0
      %857 = vmatprep.subr.bf16.mxu0 0
      %858 = vmatpush1.bf16.xpose.msra.mxu0 %v855
      %859 = vmatprep.subr.bf16.mxu0 0
      %860 = vmatpush1.bf16.xpose.msra.mxu0 0
      %861 = vmatprep.subr.bf16.mxu0 0
      %862 = vmatpush1.bf16.xpose.msra.mxu0 0
      %863 = vmatprep.subr.bf16.mxu0 0
      %864 = vmatpush1.bf16.xpose.msra.mxu0 0
      %865 = vmatprep.subr.bf16.mxu0 0
      %866 = vmatpush1.bf16.xpose.msra.mxu0 0
      %867 = vmatprep.subr.bf16.mxu0 0
      %868 = vmatpush1.bf16.xpose.msra.mxu0 0
      %869 = vmatprep.subr.bf16.mxu0 0
      %870 = vmatpush1.bf16.xpose.msra.mxu0 0
      %871 = vmatprep.subr.bf16.mxu0 0
      %872 = vmatpush1.bf16.xpose.msra.mxu0 0
      %873 = vmatprep.subr.bf16.mxu0 0
      %874 = vmatpush1.bf16.xpose.msra.mxu0 0
      %875 = vmatprep.subr.bf16.mxu0 0
      %876 = vmatpush1.bf16.xpose.msra.mxu0 0
      %877 = vmatprep.subr.bf16.mxu0 0
      %878 = vmatpush1.bf16.xpose.msra.mxu0 0
      %879 = vmatprep.subr.bf16.mxu0 0
      %880 = vmatpush1.bf16.xpose.msra.mxu0 0
      %881 = vmatprep.subr.bf16.mxu0 0
      %882 = vmatpush1.bf16.xpose.msra.mxu0 0
      %883 = vmatprep.subr.bf16.mxu0 0
      %884 = vmatpush1.bf16.xpose.msra.mxu0 0
      %885 = vmatprep.subr.bf16.mxu0 0
      %886 = vmatpush1.bf16.xpose.msra.mxu0 0
      %887 = vmatprep.subr.bf16.mxu0 0
      %888 = vmatpush1.bf16.xpose.msra.mxu0 0
      %889 = vmatprep.mubr.bf16.mxu0 0
      %890 = vmatmul.mubr.bf16.gmra.mrb[0].mxu0 %v852
      %v891 = vpop.f32.mrb[0].mxu0
      %v892 = vadd.f32 0.0, %v891
      %v893 = vpop.f32.mrb[0].mxu0
      %v894 = vpop.f32.mrb[0].mxu0
      %v895 = vpop.f32.mrb[0].mxu0
      %896 = vdwg.mxu0
      %v897 = vsel %vm781, %v892, -inf
      %898 = vmax.xlane.f32.xlu0 %v897
      %v899 = vpop.xlane.xlu0 %898
      %v900 = vsub.f32 %v892, %v899
      %v901 = vmul.f32 %v900, 1.442695
      %v902 = vpow.pop %v901
      %v903 = vsel %vm781, %v902, 0.0
      %904 = vadd.xlane.f32.xlu0 %v903
      %v905 = vpop.xlane.xlu0 %904
      %v906 = vrcp.pop %v905
      %v907 = vmul.f32 %v902, %v906
      %v908 = vpack.c.bf16 %v907, %v907
      %910 = vrot.lane.b32.xlu0 %v733, 96
      %v911 = vpop.permute.xlu0 %910
      %v913 = vsel %vm794, %v908, 0
      %v916 = vand.u32 %v911, %v801
      %918 = vmatprep.subr.bf16.mxu0 0
      %919 = vmatpush1.bf16.msra.mxu0 %v916
      %920 = vmatprep.subr.bf16.mxu0 0
      %921 = vmatpush1.bf16.msra.mxu0 0
      %922 = vmatprep.subr.bf16.mxu0 0
      %923 = vmatpush1.bf16.msra.mxu0 0
      %924 = vmatprep.subr.bf16.mxu0 0
      %925 = vmatpush1.bf16.msra.mxu0 0
      %926 = vmatprep.subr.bf16.mxu0 0
      %927 = vmatpush1.bf16.msra.mxu0 0
      %928 = vmatprep.subr.bf16.mxu0 0
      %929 = vmatpush1.bf16.msra.mxu0 0
      %930 = vmatprep.subr.bf16.mxu0 0
      %931 = vmatpush1.bf16.msra.mxu0 0
      %932 = vmatprep.subr.bf16.mxu0 0
      %933 = vmatpush1.bf16.msra.mxu0 0
      %934 = vmatprep.subr.bf16.mxu0 0
      %935 = vmatpush1.bf16.msra.mxu0 0
      %936 = vmatprep.subr.bf16.mxu0 0
      %937 = vmatpush1.bf16.msra.mxu0 0
      %938 = vmatprep.subr.bf16.mxu0 0
      %939 = vmatpush1.bf16.msra.mxu0 0
      %940 = vmatprep.subr.bf16.mxu0 0
      %941 = vmatpush1.bf16.msra.mxu0 0
      %942 = vmatprep.subr.bf16.mxu0 0
      %943 = vmatpush1.bf16.msra.mxu0 0
      %944 = vmatprep.subr.bf16.mxu0 0
      %945 = vmatpush1.bf16.msra.mxu0 0
      %946 = vmatprep.subr.bf16.mxu0 0
      %947 = vmatpush1.bf16.msra.mxu0 0
      %948 = vmatprep.subr.bf16.mxu0 0
      %949 = vmatpush1.bf16.msra.mxu0 0
      %950 = vmatprep.mubr.bf16.mxu0 0
      %951 = vmatmul.mubr.bf16.gmra.mrb[0].mxu0 %v913
      %v952 = vpop.f32.mrb[0].mxu0
      %v953 = vadd.f32 0.0, %v952
      %v954 = vpop.f32.mrb[0].mxu0
      %v955 = vpop.f32.mrb[0].mxu0
      %v956 = vpop.f32.mrb[0].mxu0
      %957 = vdwg.mxu0
      %958 = vrot.lane.b32.xlu0 %v731, 64
      %v959 = vpop.permute.xlu0 %958
      %960 = vrot.lane.b32.xlu0 %v732, 64
      %v961 = vpop.permute.xlu0 %960
      %v963 = vsel %vm734, %v959, 0
      %v966 = vsel %vm734, %v961, 0
      %968 = vmatprep.subr.bf16.mxu0 0
      %969 = vmatpush1.bf16.xpose.msra.mxu0 %v966
      %970 = vmatprep.subr.bf16.mxu0 0
      %971 = vmatpush1.bf16.xpose.msra.mxu0 0
      %972 = vmatprep.subr.bf16.mxu0 0
      %973 = vmatpush1.bf16.xpose.msra.mxu0 0
      %974 = vmatprep.subr.bf16.mxu0 0
      %975 = vmatpush1.bf16.xpose.msra.mxu0 0
      %976 = vmatprep.subr.bf16.mxu0 0
      %977 = vmatpush1.bf16.xpose.msra.mxu0 0
      %978 = vmatprep.subr.bf16.mxu0 0
      %979 = vmatpush1.bf16.xpose.msra.mxu0 0
      %980 = vmatprep.subr.bf16.mxu0 0
      %981 = vmatpush1.bf16.xpose.msra.mxu0 0
      %982 = vmatprep.subr.bf16.mxu0 0
      %983 = vmatpush1.bf16.xpose.msra.mxu0 0
      %984 = vmatprep.subr.bf16.mxu0 0
      %985 = vmatpush1.bf16.xpose.msra.mxu0 0
      %986 = vmatprep.subr.bf16.mxu0 0
      %987 = vmatpush1.bf16.xpose.msra.mxu0 0
      %988 = vmatprep.subr.bf16.mxu0 0
      %989 = vmatpush1.bf16.xpose.msra.mxu0 0
      %990 = vmatprep.subr.bf16.mxu0 0
      %991 = vmatpush1.bf16.xpose.msra.mxu0 0
      %992 = vmatprep.subr.bf16.mxu0 0
      %993 = vmatpush1.bf16.xpose.msra.mxu0 0
      %994 = vmatprep.subr.bf16.mxu0 0
      %995 = vmatpush1.bf16.xpose.msra.mxu0 0
      %996 = vmatprep.subr.bf16.mxu0 0
      %997 = vmatpush1.bf16.xpose.msra.mxu0 0
      %998 = vmatprep.subr.bf16.mxu0 0
      %999 = vmatpush1.bf16.xpose.msra.mxu0 0
      %1000 = vmatprep.mubr.bf16.mxu0 0
      %1001 = vmatmul.mubr.bf16.gmra.mrb[0].mxu0 %v963
      %v1002 = vpop.f32.mrb[0].mxu0
      %v1003 = vadd.f32 0.0, %v1002
      %v1004 = vpop.f32.mrb[0].mxu0
      %v1005 = vpop.f32.mrb[0].mxu0
      %v1006 = vpop.f32.mrb[0].mxu0
      %1007 = vdwg.mxu0
      %v1008 = vsel %vm781, %v1003, -inf
      %1009 = vmax.xlane.f32.xlu0 %v1008
      %v1010 = vpop.xlane.xlu0 %1009
      %v1011 = vsub.f32 %v1003, %v1010
      %v1012 = vmul.f32 %v1011, 1.442695
      %v1013 = vpow.pop %v1012
      %v1014 = vsel %vm781, %v1013, 0.0
      %1015 = vadd.xlane.f32.xlu0 %v1014
      %v1016 = vpop.xlane.xlu0 %1015
      %v1017 = vrcp.pop %v1016
      %v1018 = vmul.f32 %v1013, %v1017
      %v1019 = vpack.c.bf16 %v1018, %v1018
      %1020 = vrot.lane.b32.xlu0 %v733, 64
      %v1021 = vpop.permute.xlu0 %1020
      %v1023 = vsel %vm794, %v1019, 0
      %v1026 = vand.u32 %v1021, %v801
      %1028 = vmatprep.subr.bf16.mxu0 0
      %1029 = vmatpush1.bf16.msra.mxu0 %v1026
      %1030 = vmatprep.subr.bf16.mxu0 0
      %1031 = vmatpush1.bf16.msra.mxu0 0
      %1032 = vmatprep.subr.bf16.mxu0 0
      %1033 = vmatpush1.bf16.msra.mxu0 0
      %1034 = vmatprep.subr.bf16.mxu0 0
      %1035 = vmatpush1.bf16.msra.mxu0 0
      %1036 = vmatprep.subr.bf16.mxu0 0
      %1037 = vmatpush1.bf16.msra.mxu0 0
      %1038 = vmatprep.subr.bf16.mxu0 0
      %1039 = vmatpush1.bf16.msra.mxu0 0
      %1040 = vmatprep.subr.bf16.mxu0 0
      %1041 = vmatpush1.bf16.msra.mxu0 0
      %1042 = vmatprep.subr.bf16.mxu0 0
      %1043 = vmatpush1.bf16.msra.mxu0 0
      %1044 = vmatprep.subr.bf16.mxu0 0
      %1045 = vmatpush1.bf16.msra.mxu0 0
      %1046 = vmatprep.subr.bf16.mxu0 0
      %1047 = vmatpush1.bf16.msra.mxu0 0
      %1048 = vmatprep.subr.bf16.mxu0 0
      %1049 = vmatpush1.bf16.msra.mxu0 0
      %1050 = vmatprep.subr.bf16.mxu0 0
      %1051 = vmatpush1.bf16.msra.mxu0 0
      %1052 = vmatprep.subr.bf16.mxu0 0
      %1053 = vmatpush1.bf16.msra.mxu0 0
      %1054 = vmatprep.subr.bf16.mxu0 0
      %1055 = vmatpush1.bf16.msra.mxu0 0
      %1056 = vmatprep.subr.bf16.mxu0 0
      %1057 = vmatpush1.bf16.msra.mxu0 0
      %1058 = vmatprep.subr.bf16.mxu0 0
      %1059 = vmatpush1.bf16.msra.mxu0 0
      %1060 = vmatprep.mubr.bf16.mxu0 0
      %1061 = vmatmul.mubr.bf16.gmra.mrb[0].mxu0 %v1023
      %v1062 = vpop.f32.mrb[0].mxu0
      %v1063 = vadd.f32 0.0, %v1062
      %v1064 = vpop.f32.mrb[0].mxu0
      %v1065 = vpop.f32.mrb[0].mxu0
      %v1066 = vpop.f32.mrb[0].mxu0
      %1067 = vdwg.mxu0
      %1068 = vrot.lane.b32.xlu0 %v731, 32
      %v1069 = vpop.permute.xlu0 %1068
      %1070 = vrot.lane.b32.xlu0 %v732, 32
      %v1071 = vpop.permute.xlu0 %1070
      %v1073 = vsel %vm734, %v1069, 0
      %v1076 = vsel %vm734, %v1071, 0
      %1078 = vmatprep.subr.bf16.mxu0 0
      %1079 = vmatpush1.bf16.xpose.msra.mxu0 %v1076
      %1080 = vmatprep.subr.bf16.mxu0 0
      %1081 = vmatpush1.bf16.xpose.msra.mxu0 0
      %1082 = vmatprep.subr.bf16.mxu0 0
      %1083 = vmatpush1.bf16.xpose.msra.mxu0 0
      %1084 = vmatprep.subr.bf16.mxu0 0
      %1085 = vmatpush1.bf16.xpose.msra.mxu0 0
      %1086 = vmatprep.subr.bf16.mxu0 0
      %1087 = vmatpush1.bf16.xpose.msra.mxu0 0
      %1088 = vmatprep.subr.bf16.mxu0 0
      %1089 = vmatpush1.bf16.xpose.msra.mxu0 0
      %1090 = vmatprep.subr.bf16.mxu0 0
      %1091 = vmatpush1.bf16.xpose.msra.mxu0 0
      %1092 = vmatprep.subr.bf16.mxu0 0
      %1093 = vmatpush1.bf16.xpose.msra.mxu0 0
      %1094 = vmatprep.subr.bf16.mxu0 0
      %1095 = vmatpush1.bf16.xpose.msra.mxu0 0
      %1096 = vmatprep.subr.bf16.mxu0 0
      %1097 = vmatpush1.bf16.xpose.msra.mxu0 0
      %1098 = vmatprep.subr.bf16.mxu0 0
      %1099 = vmatpush1.bf16.xpose.msra.mxu0 0
      %1100 = vmatprep.subr.bf16.mxu0 0
      %1101 = vmatpush1.bf16.xpose.msra.mxu0 0
      %1102 = vmatprep.subr.bf16.mxu0 0
      %1103 = vmatpush1.bf16.xpose.msra.mxu0 0
      %1104 = vmatprep.subr.bf16.mxu0 0
      %1105 = vmatpush1.bf16.xpose.msra.mxu0 0
      %1106 = vmatprep.subr.bf16.mxu0 0
      %1107 = vmatpush1.bf16.xpose.msra.mxu0 0
      %1108 = vmatprep.subr.bf16.mxu0 0
      %1109 = vmatpush1.bf16.xpose.msra.mxu0 0
      %1110 = vmatprep.mubr.bf16.mxu0 0
      %1111 = vmatmul.mubr.bf16.gmra.mrb[0].mxu0 %v1073
      %v1112 = vpop.f32.mrb[0].mxu0
      %v1113 = vadd.f32 0.0, %v1112
      %v1114 = vpop.f32.mrb[0].mxu0
      %v1115 = vpop.f32.mrb[0].mxu0
      %v1116 = vpop.f32.mrb[0].mxu0
      %1117 = vdwg.mxu0
      %v1118 = vsel %vm781, %v1113, -inf
      %1119 = vmax.xlane.f32.xlu0 %v1118
      %v1120 = vpop.xlane.xlu0 %1119
      %v1121 = vsub.f32 %v1113, %v1120
      %v1122 = vmul.f32 %v1121, 1.442695
      %v1123 = vpow.pop %v1122
      %v1124 = vsel %vm781, %v1123, 0.0
      %1125 = vadd.xlane.f32.xlu0 %v1124
      %v1126 = vpop.xlane.xlu0 %1125
      %v1127 = vrcp.pop %v1126
      %v1128 = vmul.f32 %v1123, %v1127
      %v1129 = vpack.c.bf16 %v1128, %v1128
      %1130 = vrot.lane.b32.xlu0 %v733, 32
      %v1131 = vpop.permute.xlu0 %1130
      %v1133 = vsel %vm794, %v1129, 0
      %v1136 = vand.u32 %v1131, %v801
      %1138 = vmatprep.subr.bf16.mxu0 0
      %1139 = vmatpush1.bf16.msra.mxu0 %v1136
      %1140 = vmatprep.subr.bf16.mxu0 0
      %1141 = vmatpush1.bf16.msra.mxu0 0
      %1142 = vmatprep.subr.bf16.mxu0 0
      %1143 = vmatpush1.bf16.msra.mxu0 0
      %1144 = vmatprep.subr.bf16.mxu0 0
      %1145 = vmatpush1.bf16.msra.mxu0 0
      %1146 = vmatprep.subr.bf16.mxu0 0
      %1147 = vmatpush1.bf16.msra.mxu0 0
      %1148 = vmatprep.subr.bf16.mxu0 0
      %1149 = vmatpush1.bf16.msra.mxu0 0
      %1150 = vmatprep.subr.bf16.mxu0 0
      %1151 = vmatpush1.bf16.msra.mxu0 0
      %1152 = vmatprep.subr.bf16.mxu0 0
      %1153 = vmatpush1.bf16.msra.mxu0 0
      %1154 = vmatprep.subr.bf16.mxu0 0
      %1155 = vmatpush1.bf16.msra.mxu0 0
      %1156 = vmatprep.subr.bf16.mxu0 0
      %1157 = vmatpush1.bf16.msra.mxu0 0
      %1158 = vmatprep.subr.bf16.mxu0 0
      %1159 = vmatpush1.bf16.msra.mxu0 0
      %1160 = vmatprep.subr.bf16.mxu0 0
      %1161 = vmatpush1.bf16.msra.mxu0 0
      %1162 = vmatprep.subr.bf16.mxu0 0
      %1163 = vmatpush1.bf16.msra.mxu0 0
      %1164 = vmatprep.subr.bf16.mxu0 0
      %1165 = vmatpush1.bf16.msra.mxu0 0
      %1166 = vmatprep.subr.bf16.mxu0 0
      %1167 = vmatpush1.bf16.msra.mxu0 0
      %1168 = vmatprep.subr.bf16.mxu0 0
      %1169 = vmatpush1.bf16.msra.mxu0 0
      %1170 = vmatprep.mubr.bf16.mxu0 0
      %1171 = vmatmul.mubr.bf16.gmra.mrb[0].mxu0 %v1133
      %v1172 = vpop.f32.mrb[0].mxu0
      %v1173 = vadd.f32 0.0, %v1172
      %v1174 = vpop.f32.mrb[0].mxu0
      %v1175 = vpop.f32.mrb[0].mxu0
      %v1176 = vpop.f32.mrb[0].mxu0
      %1177 = vdwg.mxu0
      %1179 = vrot.lane.b32.xlu0 %v953, 32
      %v1180 = vpop.permute.xlu0 %1179
      %1183 = vrot.lane.b32.xlu0 %v1063, 64
      %v1184 = vpop.permute.xlu0 %1183
      %1187 = vrot.lane.b32.xlu0 %v1173, 96
      %v1188 = vpop.permute.xlu0 %1187
      %v1190 = vsel %vm734, %v840, %v1180
      %vm1191 = vcmask 523264
      %v1192 = vsel %vm1191, %v1190, %v1184
      %vm1193 = vcmask 785408
      %v1194 = vsel %vm1193, %v1192, %v1188
      %v1195 = vpack.c.bf16 %v1194, %v1194
      %v1196 = vld [vmem:[%s5] sm:$0xf]
      %v1197 = vld [vmem:[%s5 + $0x4] sm:$0xf]
      %v1198 = vld [vmem:[%s5 + $0x8] sm:$0xf]
      %v1199 = vld [vmem:[%s5 + $0xc] sm:$0xf]
      %v1200 = vld [vmem:[%s5 + $0x10] sm:$0xf]
      %v1201 = vld [vmem:[%s5 + $0x14] sm:$0xf]
      %v1202 = vld [vmem:[%s5 + $0x18] sm:$0xf]
      %v1203 = vld [vmem:[%s5 + $0x1c] sm:$0xf]
      %v1204 = vld [vmem:[%s5 + $0x20] sm:$0xf]
      %v1205 = vld [vmem:[%s5 + $0x24] sm:$0xf]
      %v1206 = vld [vmem:[%s5 + $0x28] sm:$0xf]
      %v1207 = vld [vmem:[%s5 + $0x2c] sm:$0xf]
      %v1208 = vld [vmem:[%s5 + $0x30] sm:$0xf]
      %v1209 = vld [vmem:[%s5 + $0x34] sm:$0xf]
      %v1210 = vld [vmem:[%s5 + $0x38] sm:$0xf]
      %v1211 = vld [vmem:[%s5 + $0x3c] sm:$0xf]
      %v1228 = vunpack.c.l.b16 %v1196
      %v1229 = vunpack.c.l.b16 %v1197
      %v1230 = vunpack.c.l.b16 %v1198
      %v1231 = vunpack.c.l.b16 %v1199
      %v1232 = vunpack.c.l.b16 %v1200
      %v1233 = vunpack.c.l.b16 %v1201
      %v1234 = vunpack.c.l.b16 %v1202
      %v1235 = vunpack.c.l.b16 %v1203
      %v1236 = vunpack.c.l.b16 %v1204
      %v1237 = vunpack.c.l.b16 %v1205
      %v1238 = vunpack.c.l.b16 %v1206
      %v1239 = vunpack.c.l.b16 %v1207
      %v1240 = vunpack.c.l.b16 %v1208
      %v1241 = vunpack.c.l.b16 %v1209
      %v1242 = vunpack.c.l.b16 %v1210
      %v1243 = vunpack.c.l.b16 %v1211
      %v1244 = vpack.c.b16 %v1229, %v1228
      %v1245 = vpack.c.b16 %v1231, %v1230
      %v1246 = vpack.c.b16 %v1233, %v1232
      %v1247 = vpack.c.b16 %v1235, %v1234
      %v1248 = vpack.c.b16 %v1237, %v1236
      %v1249 = vpack.c.b16 %v1239, %v1238
      %v1250 = vpack.c.b16 %v1241, %v1240
      %v1251 = vpack.c.b16 %v1243, %v1242
      %1260 = vmatprep.subr.bf16.mxu0 0
      %1261 = vmatpush1.bf16.msra.mxu0 %v1244
      %1262 = vmatprep.subr.bf16.mxu0 0
      %1263 = vmatpush1.bf16.msra.mxu0 %v1245
      %1264 = vmatprep.subr.bf16.mxu0 0
      %1265 = vmatpush1.bf16.msra.mxu0 %v1246
      %1266 = vmatprep.subr.bf16.mxu0 0
      %1267 = vmatpush1.bf16.msra.mxu0 %v1247
      %1268 = vmatprep.subr.bf16.mxu0 0
      %1269 = vmatpush1.bf16.msra.mxu0 %v1248
      %1270 = vmatprep.subr.bf16.mxu0 0
      %1271 = vmatpush1.bf16.msra.mxu0 %v1249
      %1272 = vmatprep.subr.bf16.mxu0 0
      %1273 = vmatpush1.bf16.msra.mxu0 %v1250
      %1274 = vmatprep.subr.bf16.mxu0 0
      %1275 = vmatpush1.bf16.msra.mxu0 %v1251
      %1276 = vmatprep.subr.bf16.mxu0 0
      %1277 = vmatpush1.bf16.msra.mxu0 0
      %1278 = vmatprep.subr.bf16.mxu0 0
      %1279 = vmatpush1.bf16.msra.mxu0 0
      %1280 = vmatprep.subr.bf16.mxu0 0
      %1281 = vmatpush1.bf16.msra.mxu0 0
      %1282 = vmatprep.subr.bf16.mxu0 0
      %1283 = vmatpush1.bf16.msra.mxu0 0
      %1284 = vmatprep.subr.bf16.mxu0 0
      %1285 = vmatpush1.bf16.msra.mxu0 0
      %1286 = vmatprep.subr.bf16.mxu0 0
      %1287 = vmatpush1.bf16.msra.mxu0 0
      %1288 = vmatprep.subr.bf16.mxu0 0
      %1289 = vmatpush1.bf16.msra.mxu0 0
      %1290 = vmatprep.subr.bf16.mxu0 0
      %1291 = vmatpush1.bf16.msra.mxu0 0
      %1292 = vmatprep.mubr.bf16.mxu0 0
      %1293 = vmatmul.mubr.bf16.gmra.mrb[0].mxu0 %v1195
      %v1294 = vpop.f32.mrb[0].mxu0
      %v1295 = vadd.f32 0.0, %v1294
      %v1296 = vpop.f32.mrb[0].mxu0
      %v1297 = vpop.f32.mrb[0].mxu0
      %v1298 = vpop.f32.mrb[0].mxu0
      %1299 = vdwg.mxu0
      %v1300 = vadd.f32 %v437, %v1295
      %v1301 = vld [vmem:[%s6] sm:$0x1]
      %v1303 = vlaneseq
      %v1304 = vshrl.u32 %v1303, 7
      %v1305 = vsub.s32 0, %v1304
      %v1306 = vrot.slane %v1301, %v1305
      %v1308 = vadd.f32 %v1300, %v1306
      %v1309 = vld [vmem:[%s7] sm:$0x1]
      %v1310 = vld [vmem:[%s8] sm:$0x1]
      %v1311 = vsel %vm440, %v1308, 0.0
      %1312 = vadd.xlane.f32.xlu0 %v1311
      %v1313 = vpop.xlane.xlu0 %1312
      %v1314 = vmul.f32 %v1313, %v444
      %v1315 = vmul.f32 %v1308, %v1308
      %v1316 = vsel %vm440, %v1315, 0.0
      %1317 = vadd.xlane.f32.xlu0 %v1316
      %v1318 = vpop.xlane.xlu0 %1317
      %v1319 = vmul.f32 %v1318, %v444
      %v1320 = vmul.f32 %v1314, %v1314
      %v1321 = vsub.f32 %v1319, %v1320
      %v1322 = vadd.f32 %v1321, 1e-06
      %v1323 = vrsqrt.pop %v1322
      %v1324 = vsub.f32 %v1308, %v1314
      %v1326 = vlaneseq
      %v1327 = vshrl.u32 %v1326, 7
      %v1328 = vsub.s32 0, %v1327
      %v1329 = vrot.slane %v1309, %v1328
      %v1331 = vmul.f32 %v1323, %v1329
      %v1332 = vmul.f32 %v1324, %v1331
      %v1334 = vlaneseq
      %v1335 = vshrl.u32 %v1334, 7
      %v1336 = vsub.s32 0, %v1335
      %v1337 = vrot.slane %v1310, %v1336
      %v1339 = vadd.f32 %v1332, %v1337
      %v1340 = vpack.c.bf16 %v1339, %v1339
      %v1341 = vld [vmem:[%s9] sm:$0xff]
      %v1342 = vld [vmem:[%s9 + $0x8] sm:$0xff]
      %v1343 = vld [vmem:[%s9 + $0x10] sm:$0xff]
      %v1344 = vld [vmem:[%s9 + $0x18] sm:$0xff]
      %v1345 = vld [vmem:[%s9 + $0x20] sm:$0xff]
      %v1346 = vld [vmem:[%s9 + $0x28] sm:$0xff]
      %v1347 = vld [vmem:[%s9 + $0x30] sm:$0xff]
      %v1348 = vld [vmem:[%s9 + $0x38] sm:$0xff]
      %v1349 = vld [vmem:[%s9 + $0x40] sm:$0xff]
      %v1350 = vld [vmem:[%s9 + $0x48] sm:$0xff]
      %v1351 = vld [vmem:[%s9 + $0x50] sm:$0xff]
      %v1352 = vld [vmem:[%s9 + $0x58] sm:$0xff]
      %v1353 = vld [vmem:[%s9 + $0x60] sm:$0xff]
      %v1354 = vld [vmem:[%s9 + $0x68] sm:$0xff]
      %v1355 = vld [vmem:[%s9 + $0x70] sm:$0xff]
      %v1356 = vld [vmem:[%s9 + $0x78] sm:$0xff]
      %v1357 = vld [vmem:[%s10] sm:$0x3]
      %v1359 = vlaneseq
      %v1360 = vshrl.u32 %v1359, 7
      %v1361 = vsub.s32 0, %v1360
      %v1362 = vrot.slane %v1357, %v1361
      %v1363 = vlaneseq
      %v1364 = vshrl.u32 %v1363, 7
      %v1365 = vsub.s32 1, %v1364
      %v1366 = vrot.slane %v1357, %v1365
      %v1385 = vunpack.c.l.b16 %v1341
      %v1386 = vunpack.c.h.b16 %v1341
      %v1387 = vunpack.c.l.b16 %v1342
      %v1388 = vunpack.c.h.b16 %v1342
      %v1389 = vunpack.c.l.b16 %v1343
      %v1390 = vunpack.c.h.b16 %v1343
      %v1391 = vunpack.c.l.b16 %v1344
      %v1392 = vunpack.c.h.b16 %v1344
      %v1393 = vunpack.c.l.b16 %v1345
      %v1394 = vunpack.c.h.b16 %v1345
      %v1395 = vunpack.c.l.b16 %v1346
      %v1396 = vunpack.c.h.b16 %v1346
      %v1397 = vunpack.c.l.b16 %v1347
      %v1398 = vunpack.c.h.b16 %v1347
      %v1399 = vunpack.c.l.b16 %v1348
      %v1400 = vunpack.c.h.b16 %v1348
      %v1401 = vunpack.c.l.b16 %v1349
      %v1402 = vunpack.c.h.b16 %v1349
      %v1403 = vunpack.c.l.b16 %v1350
      %v1404 = vunpack.c.h.b16 %v1350
      %v1405 = vunpack.c.l.b16 %v1351
      %v1406 = vunpack.c.h.b16 %v1351
      %v1407 = vunpack.c.l.b16 %v1352
      %v1408 = vunpack.c.h.b16 %v1352
      %v1409 = vunpack.c.l.b16 %v1353
      %v1410 = vunpack.c.h.b16 %v1353
      %v1411 = vunpack.c.l.b16 %v1354
      %v1412 = vunpack.c.h.b16 %v1354
      %v1413 = vunpack.c.l.b16 %v1355
      %v1414 = vunpack.c.h.b16 %v1355
      %v1415 = vunpack.c.l.b16 %v1356
      %v1416 = vunpack.c.h.b16 %v1356
      %v1417 = vpack.c.b16 %v1387, %v1385
      %v1418 = vpack.c.b16 %v1388, %v1386
      %v1419 = vpack.c.b16 %v1391, %v1389
      %v1420 = vpack.c.b16 %v1392, %v1390
      %v1421 = vpack.c.b16 %v1395, %v1393
      %v1422 = vpack.c.b16 %v1396, %v1394
      %v1423 = vpack.c.b16 %v1399, %v1397
      %v1424 = vpack.c.b16 %v1400, %v1398
      %v1425 = vpack.c.b16 %v1403, %v1401
      %v1426 = vpack.c.b16 %v1404, %v1402
      %v1427 = vpack.c.b16 %v1407, %v1405
      %v1428 = vpack.c.b16 %v1408, %v1406
      %v1429 = vpack.c.b16 %v1411, %v1409
      %v1430 = vpack.c.b16 %v1412, %v1410
      %v1431 = vpack.c.b16 %v1415, %v1413
      %v1432 = vpack.c.b16 %v1416, %v1414
      %1449 = vmatprep.subr.bf16.mxu0 %v1418
      %1450 = vmatpush1.bf16.msra.mxu0 %v1417
      %1451 = vmatprep.subr.bf16.mxu0 %v1420
      %1452 = vmatpush1.bf16.msra.mxu0 %v1419
      %1453 = vmatprep.subr.bf16.mxu0 %v1422
      %1454 = vmatpush1.bf16.msra.mxu0 %v1421
      %1455 = vmatprep.subr.bf16.mxu0 %v1424
      %1456 = vmatpush1.bf16.msra.mxu0 %v1423
      %1457 = vmatprep.subr.bf16.mxu0 %v1426
      %1458 = vmatpush1.bf16.msra.mxu0 %v1425
      %1459 = vmatprep.subr.bf16.mxu0 %v1428
      %1460 = vmatpush1.bf16.msra.mxu0 %v1427
      %1461 = vmatprep.subr.bf16.mxu0 %v1430
      %1462 = vmatpush1.bf16.msra.mxu0 %v1429
      %1463 = vmatprep.subr.bf16.mxu0 %v1432
      %1464 = vmatpush1.bf16.msra.mxu0 %v1431
      %1465 = vmatprep.subr.bf16.mxu0 0
      %1466 = vmatpush1.bf16.msra.mxu0 0
      %1467 = vmatprep.subr.bf16.mxu0 0
      %1468 = vmatpush1.bf16.msra.mxu0 0
      %1469 = vmatprep.subr.bf16.mxu0 0
      %1470 = vmatpush1.bf16.msra.mxu0 0
      %1471 = vmatprep.subr.bf16.mxu0 0
      %1472 = vmatpush1.bf16.msra.mxu0 0
      %1473 = vmatprep.subr.bf16.mxu0 0
      %1474 = vmatpush1.bf16.msra.mxu0 0
      %1475 = vmatprep.subr.bf16.mxu0 0
      %1476 = vmatpush1.bf16.msra.mxu0 0
      %1477 = vmatprep.subr.bf16.mxu0 0
      %1478 = vmatpush1.bf16.msra.mxu0 0
      %1479 = vmatprep.subr.bf16.mxu0 0
      %1480 = vmatpush1.bf16.msra.mxu0 0
      %1481 = vmatprep.mubr.bf16.mxu0 0
      %1482 = vmatmul.mubr.bf16.gmra.mrb[0].mxu0 %v1340
      %v1483 = vpop.f32.mrb[0].mxu0
      %v1484 = vadd.f32 %v1362, %v1483
      %v1485 = vpop.f32.mrb[0].mxu0
      %v1486 = vadd.f32 %v1366, %v1485
      %v1487 = vpop.f32.mrb[0].mxu0
      %v1488 = vpop.f32.mrb[0].mxu0
      %1489 = vdwg.mxu0
      %v1490 = vmul.f32 %v1484, 0.5
      %v1491 = vmul.f32 %v1486, 0.5
      %v1492 = vmul.f32 %v1484, 0.70710677
      %v1493 = vmul.f32 %v1486, 0.70710677
      %v1494 = verf.f32.pop %v1492
      %v1495 = verf.f32.pop %v1493
      %v1496 = vadd.f32 %v1494, 1.0
      %v1497 = vadd.f32 %v1495, 1.0
      %v1498 = vmul.f32 %v1490, %v1496
      %v1499 = vmul.f32 %v1491, %v1497
      %v1500 = vpack.c.bf16 %v1498, %v1498
      %v1501 = vpack.c.bf16 %v1499, %v1499
      %v1502 = vld [vmem:[%s11] sm:$0xf]
      %v1503 = vld [vmem:[%s11 + $0x4] sm:$0xf]
      %v1504 = vld [vmem:[%s11 + $0x8] sm:$0xf]
      %v1505 = vld [vmem:[%s11 + $0xc] sm:$0xf]
      %v1506 = vld [vmem:[%s11 + $0x10] sm:$0xf]
      %v1507 = vld [vmem:[%s11 + $0x14] sm:$0xf]
      %v1508 = vld [vmem:[%s11 + $0x18] sm:$0xf]
      %v1509 = vld [vmem:[%s11 + $0x1c] sm:$0xf]
      %v1510 = vld [vmem:[%s11 + $0x20] sm:$0xf]
      %v1511 = vld [vmem:[%s11 + $0x24] sm:$0xf]
      %v1512 = vld [vmem:[%s11 + $0x28] sm:$0xf]
      %v1513 = vld [vmem:[%s11 + $0x2c] sm:$0xf]
      %v1514 = vld [vmem:[%s11 + $0x30] sm:$0xf]
      %v1515 = vld [vmem:[%s11 + $0x34] sm:$0xf]
      %v1516 = vld [vmem:[%s11 + $0x38] sm:$0xf]
      %v1517 = vld [vmem:[%s11 + $0x3c] sm:$0xf]
      %v1518 = vld [vmem:[%s11 + $0x40] sm:$0xf]
      %v1519 = vld [vmem:[%s11 + $0x44] sm:$0xf]
      %v1520 = vld [vmem:[%s11 + $0x48] sm:$0xf]
      %v1521 = vld [vmem:[%s11 + $0x4c] sm:$0xf]
      %v1522 = vld [vmem:[%s11 + $0x50] sm:$0xf]
      %v1523 = vld [vmem:[%s11 + $0x54] sm:$0xf]
      %v1524 = vld [vmem:[%s11 + $0x58] sm:$0xf]
      %v1525 = vld [vmem:[%s11 + $0x5c] sm:$0xf]
      %v1526 = vld [vmem:[%s11 + $0x60] sm:$0xf]
      %v1527 = vld [vmem:[%s11 + $0x64] sm:$0xf]
      %v1528 = vld [vmem:[%s11 + $0x68] sm:$0xf]
      %v1529 = vld [vmem:[%s11 + $0x6c] sm:$0xf]
      %v1530 = vld [vmem:[%s11 + $0x70] sm:$0xf]
      %v1531 = vld [vmem:[%s11 + $0x74] sm:$0xf]
      %v1532 = vld [vmem:[%s11 + $0x78] sm:$0xf]
      %v1533 = vld [vmem:[%s11 + $0x7c] sm:$0xf]
      %v1534 = vld [vmem:[%s12] sm:$0x1]
      %v1536 = vlaneseq
      %v1537 = vshrl.u32 %v1536, 7
      %v1538 = vsub.s32 0, %v1537
      %v1539 = vrot.slane %v1534, %v1538
      %v1573 = vunpack.c.l.b16 %v1502
      %v1574 = vunpack.c.l.b16 %v1503
      %v1575 = vunpack.c.l.b16 %v1504
      %v1576 = vunpack.c.l.b16 %v1505
      %v1577 = vunpack.c.l.b16 %v1506
      %v1578 = vunpack.c.l.b16 %v1507
      %v1579 = vunpack.c.l.b16 %v1508
      %v1580 = vunpack.c.l.b16 %v1509
      %v1581 = vunpack.c.l.b16 %v1510
      %v1582 = vunpack.c.l.b16 %v1511
      %v1583 = vunpack.c.l.b16 %v1512
      %v1584 = vunpack.c.l.b16 %v1513
      %v1585 = vunpack.c.l.b16 %v1514
      %v1586 = vunpack.c.l.b16 %v1515
      %v1587 = vunpack.c.l.b16 %v1516
      %v1588 = vunpack.c.l.b16 %v1517
      %v1589 = vunpack.c.l.b16 %v1518
      %v1590 = vunpack.c.l.b16 %v1519
      %v1591 = vunpack.c.l.b16 %v1520
      %v1592 = vunpack.c.l.b16 %v1521
      %v1593 = vunpack.c.l.b16 %v1522
      %v1594 = vunpack.c.l.b16 %v1523
      %v1595 = vunpack.c.l.b16 %v1524
      %v1596 = vunpack.c.l.b16 %v1525
      %v1597 = vunpack.c.l.b16 %v1526
      %v1598 = vunpack.c.l.b16 %v1527
      %v1599 = vunpack.c.l.b16 %v1528
      %v1600 = vunpack.c.l.b16 %v1529
      %v1601 = vunpack.c.l.b16 %v1530
      %v1602 = vunpack.c.l.b16 %v1531
      %v1603 = vunpack.c.l.b16 %v1532
      %v1604 = vunpack.c.l.b16 %v1533
      %v1605 = vpack.c.b16 %v1574, %v1573
      %v1606 = vpack.c.b16 %v1576, %v1575
      %v1607 = vpack.c.b16 %v1578, %v1577
      %v1608 = vpack.c.b16 %v1580, %v1579
      %v1609 = vpack.c.b16 %v1582, %v1581
      %v1610 = vpack.c.b16 %v1584, %v1583
      %v1611 = vpack.c.b16 %v1586, %v1585
      %v1612 = vpack.c.b16 %v1588, %v1587
      %v1613 = vpack.c.b16 %v1590, %v1589
      %v1614 = vpack.c.b16 %v1592, %v1591
      %v1615 = vpack.c.b16 %v1594, %v1593
      %v1616 = vpack.c.b16 %v1596, %v1595
      %v1617 = vpack.c.b16 %v1598, %v1597
      %v1618 = vpack.c.b16 %v1600, %v1599
      %v1619 = vpack.c.b16 %v1602, %v1601
      %v1620 = vpack.c.b16 %v1604, %v1603
      %1637 = vmatprep.subr.bf16.mxu0 0
      %1638 = vmatpush1.bf16.msra.mxu0 %v1605
      %1639 = vmatprep.subr.bf16.mxu0 0
      %1640 = vmatpush1.bf16.msra.mxu0 %v1606
      %1641 = vmatprep.subr.bf16.mxu0 0
      %1642 = vmatpush1.bf16.msra.mxu0 %v1607
      %1643 = vmatprep.subr.bf16.mxu0 0
      %1644 = vmatpush1.bf16.msra.mxu0 %v1608
      %1645 = vmatprep.subr.bf16.mxu0 0
      %1646 = vmatpush1.bf16.msra.mxu0 %v1609
      %1647 = vmatprep.subr.bf16.mxu0 0
      %1648 = vmatpush1.bf16.msra.mxu0 %v1610
      %1649 = vmatprep.subr.bf16.mxu0 0
      %1650 = vmatpush1.bf16.msra.mxu0 %v1611
      %1651 = vmatprep.subr.bf16.mxu0 0
      %1652 = vmatpush1.bf16.msra.mxu0 %v1612
      %1653 = vmatprep.subr.bf16.mxu0 0
      %1654 = vmatpush1.bf16.msra.mxu0 %v1613
      %1655 = vmatprep.subr.bf16.mxu0 0
      %1656 = vmatpush1.bf16.msra.mxu0 %v1614
      %1657 = vmatprep.subr.bf16.mxu0 0
      %1658 = vmatpush1.bf16.msra.mxu0 %v1615
      %1659 = vmatprep.subr.bf16.mxu0 0
      %1660 = vmatpush1.bf16.msra.mxu0 %v1616
      %1661 = vmatprep.subr.bf16.mxu0 0
      %1662 = vmatpush1.bf16.msra.mxu0 %v1617
      %1663 = vmatprep.subr.bf16.mxu0 0
      %1664 = vmatpush1.bf16.msra.mxu0 %v1618
      %1665 = vmatprep.subr.bf16.mxu0 0
      %1666 = vmatpush1.bf16.msra.mxu0 %v1619
      %1667 = vmatprep.subr.bf16.mxu0 0
      %1668 = vmatpush1.bf16.msra.mxu0 %v1620
      %1669 = vmatprep.mubr.bf16.mxu0 %v1501
      %1670 = vmatmul.mubr.bf16.gmra.mrb[0].mxu0 %v1500
      %v1671 = vpop.f32.mrb[0].mxu0
      %v1672 = vadd.f32 %v1539, %v1671
      %v1673 = vpop.f32.mrb[0].mxu0
      %v1674 = vpop.f32.mrb[0].mxu0
      %v1675 = vpop.f32.mrb[0].mxu0
      %1676 = vdwg.mxu0
      %v1677 = vadd.f32 %v1308, %v1672
      %1678 = vst [vmem:[%s435] sm:$0x1f] %v1677
      %p1679 = scmp.lt.s32.totalorder %s24, 1
      %s1680 = scalar_select %p1679, %s24, 1
      %s1681 = smul.addr %s1680, 8
      %s1682 = scalar_lea.vmem %s13, %s1681
      // Predicated region
      $region73: #{vit_forward.5} parent=71 // pred_check
        %p1683 = pneg %p320
      $region74: #{vit_forward.5} parent=71 // pred_check_branch
        %1685 = sbr.rel (%p1683) target = $region76
      $region75: #{vit_forward.5} parent=71 // pred_region
        _
      $region76: #{vit_forward.5} parent=71 // pred_fallthru
        _
    $region72: #{vit_forward.5} parent=5 // pred_fallthru
      _
    %p1686 = scmp.le.s32.totalorder 2, %s19
    // Predicated region
    $region77: #{vit_forward.5} parent=5 // pred_check
      %p1687 = pneg %p1686
    $region78: #{vit_forward.5} parent=5 // pred_check_branch
      %1689 = sbr.rel (%p1687) target = $region80
    $region79: #{vit_forward.5} parent=5 // pred_region
      %s1690 = ssub.s32 %s19, 2
      // Predicated region
      $region81: #{vit_forward.5} parent=79 // pred_check
        %p1691 = pneg %p326
      $region82: #{vit_forward.5} parent=79 // pred_check_branch
        %1693 = sbr.rel (%p1691) target = $region84
      $region83: #{vit_forward.5} parent=79 // pred_region
        %p1694 = scmp.lt.s32.totalorder %s25, 1
        %s1695 = scalar_select %p1694, %s25, 1
        %s1696 = smul.addr %s1695, 8
        %s1697 = scalar_lea.vmem %s13, %s1696
      $region84: #{vit_forward.5} parent=79 // pred_fallthru
        _
    $region80: #{vit_forward.5} parent=5 // pred_fallthru
      _
  $region6: #{vit_forward.5} parent=0 // loop_footer
    %s23 = sadd.s32 1, %s19
  $region7: #{vit_forward.5} parent=0 // loop_footer_branch
    %18 = sbr.rel target = $region3
  $region8: #{vit_forward.5} parent=0 // loop_exit
    _

</llo_original>
